<compile_context>
chip_gen: v7x
topology: tpu7x:2x2x1
jax: 0.10.0
libtpu: 0.0.40
codegen_flags: <defaults>
</compile_context>

<pallas_src>
import numpy as np
import jax
import jax.numpy as jnp
from jax.experimental import pallas as pl
from jax.experimental.pallas import tpu as pltpu


# ----------------------------------------------------------------------------
# Shared LSTM-cell gate math (pure jnp; used by the kernel and the reference)
# ----------------------------------------------------------------------------
def _lstm_update(gates, c_prev, hidden):
    """PyTorch LSTM cell (gate order i, f, g, o), all f32."""
    i = jax.nn.sigmoid(gates[:, 0 * hidden:1 * hidden])
    f = jax.nn.sigmoid(gates[:, 1 * hidden:2 * hidden])
    g = jnp.tanh(gates[:, 2 * hidden:3 * hidden])
    o = jax.nn.sigmoid(gates[:, 3 * hidden:4 * hidden])
    c_new = f * c_prev + i * g
    h_new = o * jnp.tanh(c_new)
    return h_new, c_new


# ----------------------------------------------------------------------------
# Fused Pallas kernel: num_iters x (LC step -> flip -> CL step)
# ----------------------------------------------------------------------------
def neurosat_fused_kernel(
    # inputs (VMEM resident, constant index_map => loaded once)
    adj_ref,            # bf16 [n_clauses, n_lits]
    adjt_ref,           # bf16 [n_lits, n_clauses]
    flip_ref,           # bf16 [n_lits, n_lits]   binary permutation matrix
    xlinit_ref,         # f32  [n_lits, d]
    xc0_ref,            # f32  [1, 2]              C_init(ones(1))
    cu_wih_t_ref,       # bf16 [d, 8]
    cu_whh_t_ref,       # bf16 [2, 8]
    cu_b_ref,           # f32  [1, 8]
    lu_wih_msg_t_ref,   # bf16 [2, 4d]
    lu_wih_flip_t_ref,  # bf16 [d, 4d]
    lu_whh_t_ref,       # bf16 [d, 4d]
    lu_b_ref,           # f32  [1, 4d]
    # output (VMEM resident across the grid; doubles as the x_l state buffer)
    xl_out_ref,         # f32  [n_lits, d]
    # scratch
    xlh_ref,            # f32  [n_lits, d]
    xc_ref,             # f32  [n_clauses, 2]
    xch_ref,            # f32  [n_clauses, 2]
):
    t = pl.program_id(0)
    n_clauses = adj_ref.shape[0]
    n_lits, d = xl_out_ref.shape

    @pl.when(t == 0)
    def _init():
        xl_out_ref[...] = xlinit_ref[...]
        xlh_ref[...] = jnp.zeros_like(xlh_ref)
        xc_ref[...] = jnp.broadcast_to(xc0_ref[...], (n_clauses, 2))
        xch_ref[...] = jnp.zeros_like(xch_ref)

    x_l = xl_out_ref[...]                      # old literal hidden state (f32)
    x_l_bf = x_l.astype(jnp.bfloat16)          # MXU operand (accumulate in f32)

    # -------- LC step (reassociated): gates_c = adj @ (x_l @ Wih^T) + ... ---
    proj = jnp.dot(x_l_bf, cu_wih_t_ref[...],
                   preferred_element_type=jnp.float32)          # [n_lits, 8]
    gates_c = (jnp.dot(adj_ref[...], proj.astype(jnp.bfloat16),
                       preferred_element_type=jnp.float32)
               + jnp.dot(xc_ref[...].astype(jnp.bfloat16), cu_whh_t_ref[...],
                         preferred_element_type=jnp.float32)
               + cu_b_ref[...])
    h_c, c_c = _lstm_update(gates_c, xch_ref[...], 2)
    xc_ref[...] = h_c
    xch_ref[...] = c_c

    # -------- flip: binary permutation matrix on the MXU (exact in bf16) ----
    x_l_flip_bf = jnp.dot(flip_ref[...], x_l_bf,
                          preferred_element_type=jnp.float32).astype(jnp.bfloat16)

    # -------- CL step: literal LSTM update ----------------------------------
    # msg = adj.T @ x_c_new ; cat((msg, flip(x_l)), 1) @ W_ih.T is split into
    # two matmuls so no concat / relayout is needed.
    msg_l = jnp.dot(adjt_ref[...], h_c.astype(jnp.bfloat16),
                    preferred_element_type=jnp.float32)          # [n_lits, 2]
    gates_l = (jnp.dot(msg_l.astype(jnp.bfloat16), lu_wih_msg_t_ref[...],
                       preferred_element_type=jnp.float32)
               + jnp.dot(x_l_flip_bf, lu_wih_flip_t_ref[...],
                         preferred_element_type=jnp.float32)
               + jnp.dot(x_l_bf, lu_whh_t_ref[...],
                         preferred_element_type=jnp.float32)
               + lu_b_ref[...])
    h_l, c_l = _lstm_update(gates_l, xlh_ref[...], d)
    xl_out_ref[...] = h_l
    xlh_ref[...] = c_l


# ----------------------------------------------------------------------------
# pallas_call wrapper
# ----------------------------------------------------------------------------
def _vmem_limit_bytes():
    """Per-generation scoped-VMEM limit (~85% of capacity, pipeline headroom)."""
    try:
        info = pltpu.get_tpu_info()
        cap = getattr(info, "vmem_capacity_bytes", None)
        if cap:
            return int(cap * 0.85)
    except Exception:
        pass
    return 32 * 1024 * 1024        # conservative fallback, works on all gens


def neurosat_message_passing(params, adj, x_l_init, flip_perm, num_iters):
    """Runs the full num_iters LC/flip/CL recurrence in one fused Pallas call.
    Returns the final literal hidden state x_l  [n_lits, d] (f32)."""
    n_clauses, n_lits = adj.shape
    d = x_l_init.shape[1]

    adj_bf16 = adj.astype(jnp.bfloat16)            # binary matrix -> exact
    adjt_bf16 = adj.T.astype(jnp.bfloat16)
    # flip permutation as a one-hot matrix: row r has 1 at column flip_perm[r]
    flip_mat = jax.nn.one_hot(flip_perm, n_lits, dtype=jnp.bfloat16)

    # x_c init row: C_init(ones(1)) = W[:, 0] + b
    xc0 = (params["C_init_w"][:, 0] + params["C_init_b"]).reshape(1, 2)
    cu_wih_t = params["C_u_w_ih"].T.astype(jnp.bfloat16)        # [d, 8]
    cu_whh_t = params["C_u_w_hh"].T.astype(jnp.bfloat16)        # [2, 8]
    cu_b = params["C_u_b"].reshape(1, -1)                       # [1, 8]  f32
    lu_wih_msg_t = params["L_u_w_ih"][:, :2].T.astype(jnp.bfloat16)   # [2, 4d]
    lu_wih_flip_t = params["L_u_w_ih"][:, 2:].T.astype(jnp.bfloat16)  # [d, 4d]
    lu_whh_t = params["L_u_w_hh"].T.astype(jnp.bfloat16)              # [d, 4d]
    lu_b = params["L_u_b"].reshape(1, -1)                             # [1, 4d]

    inputs = (adj_bf16, adjt_bf16, flip_mat, x_l_init, xc0,
              cu_wih_t, cu_whh_t, cu_b,
              lu_wih_msg_t, lu_wih_flip_t, lu_whh_t, lu_b)

    flops = 2 * num_iters * (
        n_lits * d * 8                     # x_l @ C_u W_ih^T  (proj)
        + n_clauses * n_lits * 8           # adj @ proj
        + n_clauses * 2 * 8                # x_c @ C_u W_hh^T
        + n_lits * n_lits * d              # flip permutation matmul
        + n_lits * n_clauses * 2           # adj.T @ h_c
        + n_lits * (2 + 2 * d) * 4 * d)    # literal gate matmuls
    transcendentals = num_iters * (5 * n_lits * d + 5 * n_clauses * 2)
    bytes_accessed = int(
        sum(int(np.prod(a.shape)) * a.dtype.itemsize for a in inputs)
        + n_lits * d * 4)                  # final x_l writeback

    def run(single_buffer):
        # Full-extent block + constant index_map => DMA'd once, resident in
        # VMEM for the whole num_iters grid.  single_buffer=True additionally
        # requests Buffered(1) so constant inputs are not double-buffered.
        def resident_spec(shape):
            if single_buffer:
                return pl.BlockSpec(shape, lambda t: (0, 0),
                                    pipeline_mode=pl.Buffered(1))
            return pl.BlockSpec(shape, lambda t: (0, 0))

        grid_spec = pltpu.PrefetchScalarGridSpec(
            num_scalar_prefetch=0,
            grid=(num_iters,),
            in_specs=[resident_spec(a.shape) for a in inputs],
            out_specs=pl.BlockSpec((n_lits, d), lambda t: (0, 0)),
            scratch_shapes=[
                pltpu.VMEM((n_lits, d), jnp.float32),      # x_l_h
                pltpu.VMEM((n_clauses, 2), jnp.float32),   # x_c   (never hits HBM)
                pltpu.VMEM((n_clauses, 2), jnp.float32),   # x_c_h (never hits HBM)
            ],
        )
        out = pl.pallas_call(
            neurosat_fused_kernel,
            grid_spec=grid_spec,
            out_shape=jax.ShapeDtypeStruct((n_lits, d), jnp.float32),
            compiler_params=pltpu.CompilerParams(
                dimension_semantics=("arbitrary",),        # sequential recurrence
                vmem_limit_bytes=_vmem_limit_bytes()),
            cost_estimate=pl.CostEstimate(
                flops=int(flops),
                transcendentals=int(transcendentals),
                bytes_accessed=bytes_accessed),
        )(*inputs)
        return jax.block_until_ready(out)

    try:
        return run(single_buffer=True)
    except Exception:
        # pipeline_mode=pl.Buffered(1) not supported by this jax build;
        # fall back to default double-buffered resident specs.
        return run(single_buffer=False)


def neurosat_forward(params, adj, x_l_init, flip_perm, x_l_batch, n_problems,
                     num_iters):
    x_l = neurosat_message_passing(params, adj, x_l_init, flip_perm, num_iters)
    # L_vote (N=1) + global_mean_pool: tiny, plain JAX (segment_sum).
    x_l_vote = x_l @ params["L_vote_w"].T + params["L_vote_b"][None, :]
    sums = jax.ops.segment_sum(x_l_vote, x_l_batch, num_segments=n_problems)
    counts = jax.ops.segment_sum(jnp.ones_like(x_l_vote), x_l_batch,
                                 num_segments=n_problems)
    return sums / counts, x_l


# ----------------------------------------------------------------------------
# Pure-JAX f32 reference (mirrors the PyTorch module), params, flip permutation
# ----------------------------------------------------------------------------
def neurosat_reference(params, adj, x_l_init, flip_perm, x_l_batch, n_problems,
                       num_iters):
    n_clauses, n_lits = adj.shape
    d = x_l_init.shape[1]
    x_c = jnp.broadcast_to(
        (params["C_init_w"][:, 0] + params["C_init_b"])[None, :], (n_clauses, 2))
    x_l = x_l_init
    x_l_h = jnp.zeros((n_lits, d), jnp.float32)
    x_c_h = jnp.zeros((n_clauses, 2), jnp.float32)
    for _ in range(num_iters):
        msg_c = adj @ x_l
        gates_c = (msg_c @ params["C_u_w_ih"].T + x_c @ params["C_u_w_hh"].T
                   + params["C_u_b"][None, :])
        x_c_new, x_c_h = _lstm_update(gates_c, x_c_h, 2)
        msg_l = adj.T @ x_c_new
        inp = jnp.concatenate([msg_l, x_l[flip_perm]], axis=1)
        gates_l = (inp @ params["L_u_w_ih"].T + x_l @ params["L_u_w_hh"].T
                   + params["L_u_b"][None, :])
        x_l, x_l_h = _lstm_update(gates_l, x_l_h, d)
        x_c = x_c_new
    x_l_vote = x_l @ params["L_vote_w"].T + params["L_vote_b"][None, :]
    sums = jax.ops.segment_sum(x_l_vote, x_l_batch, num_segments=n_problems)
    counts = jax.ops.segment_sum(jnp.ones_like(x_l_vote), x_l_batch,
                                 num_segments=n_problems)
    return sums / counts, x_l


def init_params(key, d):
    ks = jax.random.split(key, 10)
    u = lambda k, shape: jax.random.uniform(k, shape, jnp.float32, -0.2, 0.2)
    return {
        # C_init = nn.Linear(1, 2)
        "C_init_w": u(ks[0], (2, 1)),
        "C_init_b": u(ks[1], (2,)),
        # C_u = nn.LSTM(input_size=d, hidden_size=2)  (seq_len = 1 -> one cell)
        "C_u_w_ih": u(ks[2], (4 * 2, d)),
        "C_u_w_hh": u(ks[3], (4 * 2, 2)),
        "C_u_b": u(ks[4], (4 * 2,)),          # b_ih + b_hh folded together
        # L_u = nn.LSTM(input_size=2 + d, hidden_size=d)
        "L_u_w_ih": u(ks[5], (4 * d, 2 + d)),
        "L_u_w_hh": u(ks[6], (4 * d, d)),
        "L_u_b": u(ks[7], (4 * d,)),          # b_ih + b_hh folded together
        # L_vote = nn.Linear(d, 1)
        "L_vote_w": u(ks[8], (1, d)),
        "L_vote_b": u(ks[9], (1,)),
    }


def build_flip_perm(x_l_batch_np):
    """Per-problem permutation swapping positive/negative literal halves."""
    counts = np.bincount(x_l_batch_np)
    parts, start = [], 0
    for n_lits_p in counts:
        assert n_lits_p % 2 == 0, "The number of literals is not even."
        n_vars = n_lits_p // 2
        parts.append(np.arange(start + n_vars, start + 2 * n_vars))
        parts.append(np.arange(start, start + n_vars))
        start += n_lits_p
    return np.concatenate(parts).astype(np.int32)


# ----------------------------------------------------------------------------
# Main
# ----------------------------------------------------------------------------
if __name__ == "__main__":
    d = 128            # lane-dense feature dim
    num_iters = 3
    # Two problems, 4 variables (8 literals) each.
    x_l_batch_np = np.array([0] * 8 + [1] * 8, dtype=np.int32)
    n_lits = len(x_l_batch_np)      # 16
    n_clauses = 8
    n_problems = int(x_l_batch_np.max()) + 1

    key = jax.random.PRNGKey(0)
    k_params, k_adj, k_xl = jax.random.split(key, 3)

    params = init_params(k_params, d)
    adj = (jax.random.uniform(k_adj, (n_clauses, n_lits)) < 0.3).astype(jnp.float32)
    # x_l = torch.rand((n_lits, d))  (random literal init, as in the module)
    x_l_init = jax.random.uniform(k_xl, (n_lits, d), jnp.float32)

    flip_perm = jnp.asarray(build_flip_perm(x_l_batch_np), jnp.int32)
    x_l_batch = jnp.asarray(x_l_batch_np, jnp.int32)

    logits, x_l_final = neurosat_forward(params, adj, x_l_init, flip_perm,
                                         x_l_batch, n_problems, num_iters)
    logits = jax.block_until_ready(logits)
    x_l_final = jax.block_until_ready(x_l_final)

    # Cross-check against the pure-JAX/f32 reference.  The kernel now runs all
    # gate matmuls with bf16 operands (f32 accumulation), so the tolerance is
    # loose; with 3 iterations the drift stays well inside it.
    logits_ref, x_l_ref = neurosat_reference(params, adj, x_l_init, flip_perm,
                                             x_l_batch, n_problems, num_iters)
    assert logits.shape == (n_problems, 1)
    assert bool(jnp.all(jnp.isfinite(logits)))
    assert np.allclose(np.asarray(x_l_final), np.asarray(x_l_ref),
                       atol=5e-2, rtol=5e-2), "x_l mismatch vs reference"
    assert np.allclose(np.asarray(logits), np.asarray(logits_ref),
                       atol=5e-2, rtol=5e-2), "logits mismatch vs reference"
    print("KERNEL_OK")
</pallas_src>

<mosaic_0001>
module attributes {stable_mosaic.version = 11 : i64} {
  func.func @neurosat_fused_kernel(%arg0: i32, %arg1: memref<8x16xbf16, #tpu.memory_space<vmem>>, %arg2: memref<16x8xbf16, #tpu.memory_space<vmem>>, %arg3: memref<16x16xbf16, #tpu.memory_space<vmem>>, %arg4: memref<16x128xf32, #tpu.memory_space<vmem>>, %arg5: memref<1x2xf32, #tpu.memory_space<vmem>>, %arg6: memref<128x8xbf16, #tpu.memory_space<vmem>>, %arg7: memref<2x8xbf16, #tpu.memory_space<vmem>>, %arg8: memref<1x8xf32, #tpu.memory_space<vmem>>, %arg9: memref<2x512xbf16, #tpu.memory_space<vmem>>, %arg10: memref<128x512xbf16, #tpu.memory_space<vmem>>, %arg11: memref<128x512xbf16, #tpu.memory_space<vmem>>, %arg12: memref<1x512xf32, #tpu.memory_space<vmem>>, %arg13: memref<16x128xf32, #tpu.memory_space<vmem>>, %arg14: memref<16x128xf32, #tpu.memory_space<vmem>>, %arg15: memref<8x2xf32, #tpu.memory_space<vmem>>, %arg16: memref<8x2xf32, #tpu.memory_space<vmem>>) attributes {dimension_semantics = [#tpu.dimension_semantics<arbitrary>], iteration_bounds = array<i64: 3>, scalar_prefetch = 0 : i64, scratch_operands = 3 : i64, tpu.core_type = #tpu.core_type<tc>, window_params = [{pipeline_mode = #tpu.pipeline_mode<synchronous>, transform_indices = @transform_0, window_bounds = array<i64: 8, 16>}, {pipeline_mode = #tpu.pipeline_mode<synchronous>, transform_indices = @transform_1, window_bounds = array<i64: 16, 8>}, {pipeline_mode = #tpu.pipeline_mode<synchronous>, transform_indices = @transform_2, window_bounds = array<i64: 16, 16>}, {pipeline_mode = #tpu.pipeline_mode<synchronous>, transform_indices = @transform_3, window_bounds = array<i64: 16, 128>}, {pipeline_mode = #tpu.pipeline_mode<synchronous>, transform_indices = @transform_4, window_bounds = array<i64: 1, 2>}, {pipeline_mode = #tpu.pipeline_mode<synchronous>, transform_indices = @transform_5, window_bounds = array<i64: 128, 8>}, {pipeline_mode = #tpu.pipeline_mode<synchronous>, transform_indices = @transform_6, window_bounds = array<i64: 2, 8>}, {pipeline_mode = #tpu.pipeline_mode<synchronous>, transform_indices = @transform_7, window_bounds = array<i64: 1, 8>}, {pipeline_mode = #tpu.pipeline_mode<synchronous>, transform_indices = @transform_8, window_bounds = array<i64: 2, 512>}, {pipeline_mode = #tpu.pipeline_mode<synchronous>, transform_indices = @transform_9, window_bounds = array<i64: 128, 512>}, {pipeline_mode = #tpu.pipeline_mode<synchronous>, transform_indices = @transform_10, window_bounds = array<i64: 128, 512>}, {pipeline_mode = #tpu.pipeline_mode<synchronous>, transform_indices = @transform_11, window_bounds = array<i64: 1, 512>}, {pipeline_mode = #tpu.pipeline_mode<synchronous>, transform_indices = @transform_12, window_bounds = array<i64: 16, 128>}]} {
    %c0_i32 = arith.constant 0 : i32
    %0 = arith.cmpi eq, %arg0, %c0_i32 : i32
    %1 = arith.extui %0 : i1 to i32
    %c0_i32_0 = arith.constant 0 : i32
    %2 = arith.cmpi ne, %1, %c0_i32_0 : i32
    scf.if %2 {
      %c0_49 = arith.constant 0 : index
      %c0_50 = arith.constant 0 : index
      %92 = vector.load %arg4[%c0_49, %c0_50] : memref<16x128xf32, #tpu.memory_space<vmem>>, vector<16x128xf32>
      %c0_51 = arith.constant 0 : index
      %c0_52 = arith.constant 0 : index
      %93 = vector.load %arg13[%c0_51, %c0_52] : memref<16x128xf32, #tpu.memory_space<vmem>>, vector<16x128xf32>
      tpu.vector_store %arg13[%c0_51, %c0_52], %92 {strides = array<i32>} : memref<16x128xf32, #tpu.memory_space<vmem>>, vector<16x128xf32>,
      %cst_53 = arith.constant 0.000000e+00 : f32
      %94 = vector.broadcast %cst_53 : f32 to vector<16x128xf32>
      %c0_54 = arith.constant 0 : index
      %c0_55 = arith.constant 0 : index
      %95 = vector.load %arg14[%c0_54, %c0_55] : memref<16x128xf32, #tpu.memory_space<vmem>>, vector<16x128xf32>
      tpu.vector_store %arg14[%c0_54, %c0_55], %94 {strides = array<i32>} : memref<16x128xf32, #tpu.memory_space<vmem>>, vector<16x128xf32>,
      %c0_56 = arith.constant 0 : index
      %c0_57 = arith.constant 0 : index
      %96 = vector.load %arg5[%c0_56, %c0_57] : memref<1x2xf32, #tpu.memory_space<vmem>>, vector<1x2xf32>
      %97 = vector.shape_cast %96 : vector<1x2xf32> to vector<1x2xf32>
      %98 = vector.broadcast %97 : vector<1x2xf32> to vector<8x2xf32>
      %c0_58 = arith.constant 0 : index
      %c0_59 = arith.constant 0 : index
      %99 = vector.load %arg15[%c0_58, %c0_59] : memref<8x2xf32, #tpu.memory_space<vmem>>, vector<8x2xf32>
      tpu.vector_store %arg15[%c0_58, %c0_59], %98 {strides = array<i32>} : memref<8x2xf32, #tpu.memory_space<vmem>>, vector<8x2xf32>,
      %cst_60 = arith.constant 0.000000e+00 : f32
      %100 = vector.broadcast %cst_60 : f32 to vector<8x2xf32>
      %c0_61 = arith.constant 0 : index
      %c0_62 = arith.constant 0 : index
      %101 = vector.load %arg16[%c0_61, %c0_62] : memref<8x2xf32, #tpu.memory_space<vmem>>, vector<8x2xf32>
      tpu.vector_store %arg16[%c0_61, %c0_62], %100 {strides = array<i32>} : memref<8x2xf32, #tpu.memory_space<vmem>>, vector<8x2xf32>,
    } else {
    }
    %c0 = arith.constant 0 : index
    %c0_1 = arith.constant 0 : index
    %3 = vector.load %arg13[%c0, %c0_1] : memref<16x128xf32, #tpu.memory_space<vmem>>, vector<16x128xf32>
    %4 = arith.truncf %3 : vector<16x128xf32> to vector<16x128xbf16>
    %c0_2 = arith.constant 0 : index
    %c0_3 = arith.constant 0 : index
    %5 = vector.load %arg6[%c0_2, %c0_3] : memref<128x8xbf16, #tpu.memory_space<vmem>>, vector<128x8xbf16>
    %cst = arith.constant dense<0.000000e+00> : vector<16x8xf32>
    %6 = tpu.matmul %4, %5, %cst {dimension_numbers = #tpu.dot_dimension_numbers<[1], [0], [0], [1], [0, 0, 1, 1], [], []>} : vector<16x128xbf16>, vector<128x8xbf16>, vector<16x8xf32> -> vector<16x8xf32>
    %c0_4 = arith.constant 0 : index
    %c0_5 = arith.constant 0 : index
    %7 = vector.load %arg1[%c0_4, %c0_5] : memref<8x16xbf16, #tpu.memory_space<vmem>>, vector<8x16xbf16>
    %8 = arith.truncf %6 : vector<16x8xf32> to vector<16x8xbf16>
    %cst_6 = arith.constant dense<0.000000e+00> : vector<8x8xf32>
    %9 = tpu.matmul %7, %8, %cst_6 {dimension_numbers = #tpu.dot_dimension_numbers<[1], [0], [0], [1], [0, 0, 1, 1], [], []>} : vector<8x16xbf16>, vector<16x8xbf16>, vector<8x8xf32> -> vector<8x8xf32>
    %c0_7 = arith.constant 0 : index
    %c0_8 = arith.constant 0 : index
    %10 = vector.load %arg15[%c0_7, %c0_8] : memref<8x2xf32, #tpu.memory_space<vmem>>, vector<8x2xf32>
    %11 = arith.truncf %10 : vector<8x2xf32> to vector<8x2xbf16>
    %c0_9 = arith.constant 0 : index
    %c0_10 = arith.constant 0 : index
    %12 = vector.load %arg7[%c0_9, %c0_10] : memref<2x8xbf16, #tpu.memory_space<vmem>>, vector<2x8xbf16>
    %cst_11 = arith.constant dense<0.000000e+00> : vector<8x8xf32>
    %13 = tpu.matmul %11, %12, %cst_11 {dimension_numbers = #tpu.dot_dimension_numbers<[1], [0], [0], [1], [0, 0, 1, 1], [], []>} : vector<8x2xbf16>, vector<2x8xbf16>, vector<8x8xf32> -> vector<8x8xf32>
    %14 = arith.addf %9, %13 : vector<8x8xf32>
    %c0_12 = arith.constant 0 : index
    %c0_13 = arith.constant 0 : index
    %15 = vector.load %arg8[%c0_12, %c0_13] : memref<1x8xf32, #tpu.memory_space<vmem>>, vector<1x8xf32>
    %16 = vector.broadcast %15 : vector<1x8xf32> to vector<8x8xf32>
    %17 = arith.addf %14, %16 : vector<8x8xf32>
    %c0_14 = arith.constant 0 : index
    %c0_15 = arith.constant 0 : index
    %18 = vector.load %arg16[%c0_14, %c0_15] : memref<8x2xf32, #tpu.memory_space<vmem>>, vector<8x2xf32>
    %19 = vector.extract_strided_slice %17 {offsets = [0, 0], sizes = [8, 2], strides = [1, 1]} : vector<8x8xf32> to vector<8x2xf32>
    %20 = arith.negf %19 : vector<8x2xf32>
    %21 = math.exp %20 : vector<8x2xf32>
    %cst_16 = arith.constant 1.000000e+00 : f32
    %22 = vector.broadcast %cst_16 : f32 to vector<8x2xf32>
    %23 = arith.addf %22, %21 : vector<8x2xf32>
    %24 = arith.divf %22, %23 : vector<8x2xf32>
    %25 = vector.extract_strided_slice %17 {offsets = [0, 2], sizes = [8, 2], strides = [1, 1]} : vector<8x8xf32> to vector<8x2xf32>
    %26 = arith.negf %25 : vector<8x2xf32>
    %27 = math.exp %26 : vector<8x2xf32>
    %cst_17 = arith.constant 1.000000e+00 : f32
    %28 = vector.broadcast %cst_17 : f32 to vector<8x2xf32>
    %29 = arith.addf %28, %27 : vector<8x2xf32>
    %30 = arith.divf %28, %29 : vector<8x2xf32>
    %31 = vector.extract_strided_slice %17 {offsets = [0, 4], sizes = [8, 2], strides = [1, 1]} : vector<8x8xf32> to vector<8x2xf32>
    %32 = math.tanh %31 : vector<8x2xf32>
    %33 = vector.extract_strided_slice %17 {offsets = [0, 6], sizes = [8, 2], strides = [1, 1]} : vector<8x8xf32> to vector<8x2xf32>
    %34 = arith.negf %33 : vector<8x2xf32>
    %35 = math.exp %34 : vector<8x2xf32>
    %cst_18 = arith.constant 1.000000e+00 : f32
    %36 = vector.broadcast %cst_18 : f32 to vector<8x2xf32>
    %37 = arith.addf %36, %35 : vector<8x2xf32>
    %38 = arith.divf %36, %37 : vector<8x2xf32>
    %39 = arith.mulf %30, %18 : vector<8x2xf32>
    %40 = arith.mulf %24, %32 : vector<8x2xf32>
    %41 = arith.addf %39, %40 : vector<8x2xf32>
    %42 = math.tanh %41 : vector<8x2xf32>
    %43 = arith.mulf %38, %42 : vector<8x2xf32>
    %c0_19 = arith.constant 0 : index
    %c0_20 = arith.constant 0 : index
    %44 = vector.load %arg15[%c0_19, %c0_20] : memref<8x2xf32, #tpu.memory_space<vmem>>, vector<8x2xf32>
    tpu.vector_store %arg15[%c0_19, %c0_20], %43 {strides = array<i32>} : memref<8x2xf32, #tpu.memory_space<vmem>>, vector<8x2xf32>,
    %c0_21 = arith.constant 0 : index
    %c0_22 = arith.constant 0 : index
    %45 = vector.load %arg16[%c0_21, %c0_22] : memref<8x2xf32, #tpu.memory_space<vmem>>, vector<8x2xf32>
    tpu.vector_store %arg16[%c0_21, %c0_22], %41 {strides = array<i32>} : memref<8x2xf32, #tpu.memory_space<vmem>>, vector<8x2xf32>,
    %c0_23 = arith.constant 0 : index
    %c0_24 = arith.constant 0 : index
    %46 = vector.load %arg3[%c0_23, %c0_24] : memref<16x16xbf16, #tpu.memory_space<vmem>>, vector<16x16xbf16>
    %cst_25 = arith.constant dense<0.000000e+00> : vector<16x128xf32>
    %47 = tpu.matmul %46, %4, %cst_25 {dimension_numbers = #tpu.dot_dimension_numbers<[1], [0], [0], [1], [0, 0, 1, 1], [], []>} : vector<16x16xbf16>, vector<16x128xbf16>, vector<16x128xf32> -> vector<16x128xf32>
    %48 = arith.truncf %47 : vector<16x128xf32> to vector<16x128xbf16>
    %c0_26 = arith.constant 0 : index
    %c0_27 = arith.constant 0 : index
    %49 = vector.load %arg2[%c0_26, %c0_27] : memref<16x8xbf16, #tpu.memory_space<vmem>>, vector<16x8xbf16>
    %50 = arith.truncf %43 : vector<8x2xf32> to vector<8x2xbf16>
    %cst_28 = arith.constant dense<0.000000e+00> : vector<16x2xf32>
    %51 = tpu.matmul %49, %50, %cst_28 {dimension_numbers = #tpu.dot_dimension_numbers<[1], [0], [0], [1], [0, 0, 1, 1], [], []>} : vector<16x8xbf16>, vector<8x2xbf16>, vector<16x2xf32> -> vector<16x2xf32>
    %52 = arith.truncf %51 : vector<16x2xf32> to vector<16x2xbf16>
    %c0_29 = arith.constant 0 : index
    %c0_30 = arith.constant 0 : index
    %53 = vector.load %arg9[%c0_29, %c0_30] : memref<2x512xbf16, #tpu.memory_space<vmem>>, vector<2x512xbf16>
    %cst_31 = arith.constant dense<0.000000e+00> : vector<16x512xf32>
    %54 = tpu.matmul %52, %53, %cst_31 {dimension_numbers = #tpu.dot_dimension_numbers<[1], [0], [0], [1], [0, 0, 1, 1], [], []>} : vector<16x2xbf16>, vector<2x512xbf16>, vector<16x512xf32> -> vector<16x512xf32>
    %c0_32 = arith.constant 0 : index
    %c0_33 = arith.constant 0 : index
    %55 = vector.load %arg10[%c0_32, %c0_33] : memref<128x512xbf16, #tpu.memory_space<vmem>>, vector<128x512xbf16>
    %cst_34 = arith.constant dense<0.000000e+00> : vector<16x512xf32>
    %56 = tpu.matmul %48, %55, %cst_34 {dimension_numbers = #tpu.dot_dimension_numbers<[1], [0], [0], [1], [0, 0, 1, 1], [], []>} : vector<16x128xbf16>, vector<128x512xbf16>, vector<16x512xf32> -> vector<16x512xf32>
    %57 = arith.addf %54, %56 : vector<16x512xf32>
    %c0_35 = arith.constant 0 : index
    %c0_36 = arith.constant 0 : index
    %58 = vector.load %arg11[%c0_35, %c0_36] : memref<128x512xbf16, #tpu.memory_space<vmem>>, vector<128x512xbf16>
    %cst_37 = arith.constant dense<0.000000e+00> : vector<16x512xf32>
    %59 = tpu.matmul %4, %58, %cst_37 {dimension_numbers = #tpu.dot_dimension_numbers<[1], [0], [0], [1], [0, 0, 1, 1], [], []>} : vector<16x128xbf16>, vector<128x512xbf16>, vector<16x512xf32> -> vector<16x512xf32>
    %60 = arith.addf %57, %59 : vector<16x512xf32>
    %c0_38 = arith.constant 0 : index
    %c0_39 = arith.constant 0 : index
    %61 = vector.load %arg12[%c0_38, %c0_39] : memref<1x512xf32, #tpu.memory_space<vmem>>, vector<1x512xf32>
    %62 = vector.broadcast %61 : vector<1x512xf32> to vector<16x512xf32>
    %63 = arith.addf %60, %62 : vector<16x512xf32>
    %c0_40 = arith.constant 0 : index
    %c0_41 = arith.constant 0 : index
    %64 = vector.load %arg14[%c0_40, %c0_41] : memref<16x128xf32, #tpu.memory_space<vmem>>, vector<16x128xf32>
    %65 = vector.extract_strided_slice %63 {offsets = [0, 0], sizes = [16, 128], strides = [1, 1]} : vector<16x512xf32> to vector<16x128xf32>
    %66 = arith.negf %65 : vector<16x128xf32>
    %67 = math.exp %66 : vector<16x128xf32>
    %cst_42 = arith.constant 1.000000e+00 : f32
    %68 = vector.broadcast %cst_42 : f32 to vector<16x128xf32>
    %69 = arith.addf %68, %67 : vector<16x128xf32>
    %70 = arith.divf %68, %69 : vector<16x128xf32>
    %71 = vector.extract_strided_slice %63 {offsets = [0, 128], sizes = [16, 128], strides = [1, 1]} : vector<16x512xf32> to vector<16x128xf32>
    %72 = arith.negf %71 : vector<16x128xf32>
    %73 = math.exp %72 : vector<16x128xf32>
    %cst_43 = arith.constant 1.000000e+00 : f32
    %74 = vector.broadcast %cst_43 : f32 to vector<16x128xf32>
    %75 = arith.addf %74, %73 : vector<16x128xf32>
    %76 = arith.divf %74, %75 : vector<16x128xf32>
    %77 = vector.extract_strided_slice %63 {offsets = [0, 256], sizes = [16, 128], strides = [1, 1]} : vector<16x512xf32> to vector<16x128xf32>
    %78 = math.tanh %77 : vector<16x128xf32>
    %79 = vector.extract_strided_slice %63 {offsets = [0, 384], sizes = [16, 128], strides = [1, 1]} : vector<16x512xf32> to vector<16x128xf32>
    %80 = arith.negf %79 : vector<16x128xf32>
    %81 = math.exp %80 : vector<16x128xf32>
    %cst_44 = arith.constant 1.000000e+00 : f32
    %82 = vector.broadcast %cst_44 : f32 to vector<16x128xf32>
    %83 = arith.addf %82, %81 : vector<16x128xf32>
    %84 = arith.divf %82, %83 : vector<16x128xf32>
    %85 = arith.mulf %76, %64 : vector<16x128xf32>
    %86 = arith.mulf %70, %78 : vector<16x128xf32>
    %87 = arith.addf %85, %86 : vector<16x128xf32>
    %88 = math.tanh %87 : vector<16x128xf32>
    %89 = arith.mulf %84, %88 : vector<16x128xf32>
    %c0_45 = arith.constant 0 : index
    %c0_46 = arith.constant 0 : index
    %90 = vector.load %arg13[%c0_45, %c0_46] : memref<16x128xf32, #tpu.memory_space<vmem>>, vector<16x128xf32>
    tpu.vector_store %arg13[%c0_45, %c0_46], %89 {strides = array<i32>} : memref<16x128xf32, #tpu.memory_space<vmem>>, vector<16x128xf32>,
    %c0_47 = arith.constant 0 : index
    %c0_48 = arith.constant 0 : index
    %91 = vector.load %arg14[%c0_47, %c0_48] : memref<16x128xf32, #tpu.memory_space<vmem>>, vector<16x128xf32>
    tpu.vector_store %arg14[%c0_47, %c0_48], %87 {strides = array<i32>} : memref<16x128xf32, #tpu.memory_space<vmem>>, vector<16x128xf32>,
    return
  }
  func.func @transform_0(%arg0: i32) -> (i32, i32) {
    %c0_i32 = arith.constant 0 : i32
    %c0_i32_0 = arith.constant 0 : i32
    %c0_i32_1 = arith.constant 0 : i32
    return %c0_i32, %c0_i32_0 : i32, i32
  }
  func.func @transform_1(%arg0: i32) -> (i32, i32) {
    %c0_i32 = arith.constant 0 : i32
    %c0_i32_0 = arith.constant 0 : i32
    %c0_i32_1 = arith.constant 0 : i32
    return %c0_i32, %c0_i32_0 : i32, i32
  }
  func.func @transform_2(%arg0: i32) -> (i32, i32) {
    %c0_i32 = arith.constant 0 : i32
    %c0_i32_0 = arith.constant 0 : i32
    %c0_i32_1 = arith.constant 0 : i32
    return %c0_i32, %c0_i32_0 : i32, i32
  }
  func.func @transform_3(%arg0: i32) -> (i32, i32) {
    %c0_i32 = arith.constant 0 : i32
    %c0_i32_0 = arith.constant 0 : i32
    %c0_i32_1 = arith.constant 0 : i32
    return %c0_i32, %c0_i32_0 : i32, i32
  }
  func.func @transform_4(%arg0: i32) -> (i32, i32) {
    %c0_i32 = arith.constant 0 : i32
    %c0_i32_0 = arith.constant 0 : i32
    %c0_i32_1 = arith.constant 0 : i32
    return %c0_i32, %c0_i32_0 : i32, i32
  }
  func.func @transform_5(%arg0: i32) -> (i32, i32) {
    %c0_i32 = arith.constant 0 : i32
    %c0_i32_0 = arith.constant 0 : i32
    %c0_i32_1 = arith.constant 0 : i32
    return %c0_i32, %c0_i32_0 : i32, i32
  }
  func.func @transform_6(%arg0: i32) -> (i32, i32) {
    %c0_i32 = arith.constant 0 : i32
    %c0_i32_0 = arith.constant 0 : i32
    %c0_i32_1 = arith.constant 0 : i32
    return %c0_i32, %c0_i32_0 : i32, i32
  }
  func.func @transform_7(%arg0: i32) -> (i32, i32) {
    %c0_i32 = arith.constant 0 : i32
    %c0_i32_0 = arith.constant 0 : i32
    %c0_i32_1 = arith.constant 0 : i32
    return %c0_i32, %c0_i32_0 : i32, i32
  }
  func.func @transform_8(%arg0: i32) -> (i32, i32) {
    %c0_i32 = arith.constant 0 : i32
    %c0_i32_0 = arith.constant 0 : i32
    %c0_i32_1 = arith.constant 0 : i32
    return %c0_i32, %c0_i32_0 : i32, i32
  }
  func.func @transform_9(%arg0: i32) -> (i32, i32) {
    %c0_i32 = arith.constant 0 : i32
    %c0_i32_0 = arith.constant 0 : i32
    %c0_i32_1 = arith.constant 0 : i32
    return %c0_i32, %c0_i32_0 : i32, i32
  }
  func.func @transform_10(%arg0: i32) -> (i32, i32) {
    %c0_i32 = arith.constant 0 : i32
    %c0_i32_0 = arith.constant 0 : i32
    %c0_i32_1 = arith.constant 0 : i32
    return %c0_i32, %c0_i32_0 : i32, i32
  }
  func.func @transform_11(%arg0: i32) -> (i32, i32) {
    %c0_i32 = arith.constant 0 : i32
    %c0_i32_0 = arith.constant 0 : i32
    %c0_i32_1 = arith.constant 0 : i32
    return %c0_i32, %c0_i32_0 : i32, i32
  }
  func.func @transform_12(%arg0: i32) -> (i32, i32) {
    %c0_i32 = arith.constant 0 : i32
    %c0_i32_0 = arith.constant 0 : i32
    %c0_i32_1 = arith.constant 0 : i32
    return %c0_i32, %c0_i32_0 : i32, i32
  }
}

module attributes {stable_mosaic.version = 11 : i64} {
  func.func @neurosat_fused_kernel(%arg0: i32, %arg1: memref<8x16xbf16, #tpu.memory_space<vmem>>, %arg2: memref<16x8xbf16, #tpu.memory_space<vmem>>, %arg3: memref<16x16xbf16, #tpu.memory_space<vmem>>, %arg4: memref<16x128xf32, #tpu.memory_space<vmem>>, %arg5: memref<1x2xf32, #tpu.memory_space<vmem>>, %arg6: memref<128x8xbf16, #tpu.memory_space<vmem>>, %arg7: memref<2x8xbf16, #tpu.memory_space<vmem>>, %arg8: memref<1x8xf32, #tpu.memory_space<vmem>>, %arg9: memref<2x512xbf16, #tpu.memory_space<vmem>>, %arg10: memref<128x512xbf16, #tpu.memory_space<vmem>>, %arg11: memref<128x512xbf16, #tpu.memory_space<vmem>>, %arg12: memref<1x512xf32, #tpu.memory_space<vmem>>, %arg13: memref<16x128xf32, #tpu.memory_space<vmem>>, %arg14: memref<16x128xf32, #tpu.memory_space<vmem>>, %arg15: memref<8x2xf32, #tpu.memory_space<vmem>>, %arg16: memref<8x2xf32, #tpu.memory_space<vmem>>) attributes {dimension_semantics = [#tpu.dimension_semantics<arbitrary>], iteration_bounds = array<i64: 3>, scalar_prefetch = 0 : i64, scratch_operands = 3 : i64, tpu.core_type = #tpu.core_type<tc>, window_params = [{pipeline_mode = #tpu.pipeline_mode<synchronous>, transform_indices = @transform_0, window_bounds = array<i64: 8, 16>}, {pipeline_mode = #tpu.pipeline_mode<synchronous>, transform_indices = @transform_1, window_bounds = array<i64: 16, 8>}, {pipeline_mode = #tpu.pipeline_mode<synchronous>, transform_indices = @transform_2, window_bounds = array<i64: 16, 16>}, {pipeline_mode = #tpu.pipeline_mode<synchronous>, transform_indices = @transform_3, window_bounds = array<i64: 16, 128>}, {pipeline_mode = #tpu.pipeline_mode<synchronous>, transform_indices = @transform_4, window_bounds = array<i64: 1, 2>}, {pipeline_mode = #tpu.pipeline_mode<synchronous>, transform_indices = @transform_5, window_bounds = array<i64: 128, 8>}, {pipeline_mode = #tpu.pipeline_mode<synchronous>, transform_indices = @transform_6, window_bounds = array<i64: 2, 8>}, {pipeline_mode = #tpu.pipeline_mode<synchronous>, transform_indices = @transform_7, window_bounds = array<i64: 1, 8>}, {pipeline_mode = #tpu.pipeline_mode<synchronous>, transform_indices = @transform_8, window_bounds = array<i64: 2, 512>}, {pipeline_mode = #tpu.pipeline_mode<synchronous>, transform_indices = @transform_9, window_bounds = array<i64: 128, 512>}, {pipeline_mode = #tpu.pipeline_mode<synchronous>, transform_indices = @transform_10, window_bounds = array<i64: 128, 512>}, {pipeline_mode = #tpu.pipeline_mode<synchronous>, transform_indices = @transform_11, window_bounds = array<i64: 1, 512>}, {pipeline_mode = #tpu.pipeline_mode<synchronous>, transform_indices = @transform_12, window_bounds = array<i64: 16, 128>}]} {
    %c0_i32 = arith.constant 0 : i32
    %0 = arith.cmpi eq, %arg0, %c0_i32 : i32
    %1 = arith.extui %0 : i1 to i32
    %c0_i32_0 = arith.constant 0 : i32
    %2 = arith.cmpi ne, %1, %c0_i32_0 : i32
    scf.if %2 {
      %c0_49 = arith.constant 0 : index
      %c0_50 = arith.constant 0 : index
      %92 = vector.load %arg4[%c0_49, %c0_50] : memref<16x128xf32, #tpu.memory_space<vmem>>, vector<16x128xf32>
      %c0_51 = arith.constant 0 : index
      %c0_52 = arith.constant 0 : index
      %93 = vector.load %arg13[%c0_51, %c0_52] : memref<16x128xf32, #tpu.memory_space<vmem>>, vector<16x128xf32>
      tpu.vector_store %arg13[%c0_51, %c0_52], %92 {strides = array<i32>} : memref<16x128xf32, #tpu.memory_space<vmem>>, vector<16x128xf32>,
      %cst_53 = arith.constant 0.000000e+00 : f32
      %94 = vector.broadcast %cst_53 : f32 to vector<16x128xf32>
      %c0_54 = arith.constant 0 : index
      %c0_55 = arith.constant 0 : index
      %95 = vector.load %arg14[%c0_54, %c0_55] : memref<16x128xf32, #tpu.memory_space<vmem>>, vector<16x128xf32>
      tpu.vector_store %arg14[%c0_54, %c0_55], %94 {strides = array<i32>} : memref<16x128xf32, #tpu.memory_space<vmem>>, vector<16x128xf32>,
      %c0_56 = arith.constant 0 : index
      %c0_57 = arith.constant 0 : index
      %96 = vector.load %arg5[%c0_56, %c0_57] : memref<1x2xf32, #tpu.memory_space<vmem>>, vector<1x2xf32>
      %97 = vector.shape_cast %96 : vector<1x2xf32> to vector<1x2xf32>
      %98 = vector.broadcast %97 : vector<1x2xf32> to vector<8x2xf32>
      %c0_58 = arith.constant 0 : index
      %c0_59 = arith.constant 0 : index
      %99 = vector.load %arg15[%c0_58, %c0_59] : memref<8x2xf32, #tpu.memory_space<vmem>>, vector<8x2xf32>
      tpu.vector_store %arg15[%c0_58, %c0_59], %98 {strides = array<i32>} : memref<8x2xf32, #tpu.memory_space<vmem>>, vector<8x2xf32>,
      %cst_60 = arith.constant 0.000000e+00 : f32
      %100 = vector.broadcast %cst_60 : f32 to vector<8x2xf32>
      %c0_61 = arith.constant 0 : index
      %c0_62 = arith.constant 0 : index
      %101 = vector.load %arg16[%c0_61, %c0_62] : memref<8x2xf32, #tpu.memory_space<vmem>>, vector<8x2xf32>
      tpu.vector_store %arg16[%c0_61, %c0_62], %100 {strides = array<i32>} : memref<8x2xf32, #tpu.memory_space<vmem>>, vector<8x2xf32>,
    } else {
    }
    %c0 = arith.constant 0 : index
    %c0_1 = arith.constant 0 : index
    %3 = vector.load %arg13[%c0, %c0_1] : memref<16x128xf32, #tpu.memory_space<vmem>>, vector<16x128xf32>
    %4 = arith.truncf %3 : vector<16x128xf32> to vector<16x128xbf16>
    %c0_2 = arith.constant 0 : index
    %c0_3 = arith.constant 0 : index
    %5 = vector.load %arg6[%c0_2, %c0_3] : memref<128x8xbf16, #tpu.memory_space<vmem>>, vector<128x8xbf16>
    %cst = arith.constant dense<0.000000e+00> : vector<16x8xf32>
    %6 = tpu.matmul %4, %5, %cst {dimension_numbers = #tpu.dot_dimension_numbers<[1], [0], [0], [1], [0, 0, 1, 1], [], []>} : vector<16x128xbf16>, vector<128x8xbf16>, vector<16x8xf32> -> vector<16x8xf32>
    %c0_4 = arith.constant 0 : index
    %c0_5 = arith.constant 0 : index
    %7 = vector.load %arg1[%c0_4, %c0_5] : memref<8x16xbf16, #tpu.memory_space<vmem>>, vector<8x16xbf16>
    %8 = arith.truncf %6 : vector<16x8xf32> to vector<16x8xbf16>
    %cst_6 = arith.constant dense<0.000000e+00> : vector<8x8xf32>
    %9 = tpu.matmul %7, %8, %cst_6 {dimension_numbers = #tpu.dot_dimension_numbers<[1], [0], [0], [1], [0, 0, 1, 1], [], []>} : vector<8x16xbf16>, vector<16x8xbf16>, vector<8x8xf32> -> vector<8x8xf32>
    %c0_7 = arith.constant 0 : index
    %c0_8 = arith.constant 0 : index
    %10 = vector.load %arg15[%c0_7, %c0_8] : memref<8x2xf32, #tpu.memory_space<vmem>>, vector<8x2xf32>
    %11 = arith.truncf %10 : vector<8x2xf32> to vector<8x2xbf16>
    %c0_9 = arith.constant 0 : index
    %c0_10 = arith.constant 0 : index
    %12 = vector.load %arg7[%c0_9, %c0_10] : memref<2x8xbf16, #tpu.memory_space<vmem>>, vector<2x8xbf16>
    %cst_11 = arith.constant dense<0.000000e+00> : vector<8x8xf32>
    %13 = tpu.matmul %11, %12, %cst_11 {dimension_numbers = #tpu.dot_dimension_numbers<[1], [0], [0], [1], [0, 0, 1, 1], [], []>} : vector<8x2xbf16>, vector<2x8xbf16>, vector<8x8xf32> -> vector<8x8xf32>
    %14 = arith.addf %9, %13 : vector<8x8xf32>
    %c0_12 = arith.constant 0 : index
    %c0_13 = arith.constant 0 : index
    %15 = vector.load %arg8[%c0_12, %c0_13] : memref<1x8xf32, #tpu.memory_space<vmem>>, vector<1x8xf32>
    %16 = vector.broadcast %15 : vector<1x8xf32> to vector<8x8xf32>
    %17 = arith.addf %14, %16 : vector<8x8xf32>
    %c0_14 = arith.constant 0 : index
    %c0_15 = arith.constant 0 : index
    %18 = vector.load %arg16[%c0_14, %c0_15] : memref<8x2xf32, #tpu.memory_space<vmem>>, vector<8x2xf32>
    %19 = vector.extract_strided_slice %17 {offsets = [0, 0], sizes = [8, 2], strides = [1, 1]} : vector<8x8xf32> to vector<8x2xf32>
    %20 = arith.negf %19 : vector<8x2xf32>
    %21 = math.exp %20 : vector<8x2xf32>
    %cst_16 = arith.constant 1.000000e+00 : f32
    %22 = vector.broadcast %cst_16 : f32 to vector<8x2xf32>
    %23 = arith.addf %22, %21 : vector<8x2xf32>
    %24 = arith.divf %22, %23 : vector<8x2xf32>
    %25 = vector.extract_strided_slice %17 {offsets = [0, 2], sizes = [8, 2], strides = [1, 1]} : vector<8x8xf32> to vector<8x2xf32>
    %26 = arith.negf %25 : vector<8x2xf32>
    %27 = math.exp %26 : vector<8x2xf32>
    %cst_17 = arith.constant 1.000000e+00 : f32
    %28 = vector.broadcast %cst_17 : f32 to vector<8x2xf32>
    %29 = arith.addf %28, %27 : vector<8x2xf32>
    %30 = arith.divf %28, %29 : vector<8x2xf32>
    %31 = vector.extract_strided_slice %17 {offsets = [0, 4], sizes = [8, 2], strides = [1, 1]} : vector<8x8xf32> to vector<8x2xf32>
    %32 = math.tanh %31 : vector<8x2xf32>
    %33 = vector.extract_strided_slice %17 {offsets = [0, 6], sizes = [8, 2], strides = [1, 1]} : vector<8x8xf32> to vector<8x2xf32>
    %34 = arith.negf %33 : vector<8x2xf32>
    %35 = math.exp %34 : vector<8x2xf32>
    %cst_18 = arith.constant 1.000000e+00 : f32
    %36 = vector.broadcast %cst_18 : f32 to vector<8x2xf32>
    %37 = arith.addf %36, %35 : vector<8x2xf32>
    %38 = arith.divf %36, %37 : vector<8x2xf32>
    %39 = arith.mulf %30, %18 : vector<8x2xf32>
    %40 = arith.mulf %24, %32 : vector<8x2xf32>
    %41 = arith.addf %39, %40 : vector<8x2xf32>
    %42 = math.tanh %41 : vector<8x2xf32>
    %43 = arith.mulf %38, %42 : vector<8x2xf32>
    %c0_19 = arith.constant 0 : index
    %c0_20 = arith.constant 0 : index
    %44 = vector.load %arg15[%c0_19, %c0_20] : memref<8x2xf32, #tpu.memory_space<vmem>>, vector<8x2xf32>
    tpu.vector_store %arg15[%c0_19, %c0_20], %43 {strides = array<i32>} : memref<8x2xf32, #tpu.memory_space<vmem>>, vector<8x2xf32>,
    %c0_21 = arith.constant 0 : index
    %c0_22 = arith.constant 0 : index
    %45 = vector.load %arg16[%c0_21, %c0_22] : memref<8x2xf32, #tpu.memory_space<vmem>>, vector<8x2xf32>
    tpu.vector_store %arg16[%c0_21, %c0_22], %41 {strides = array<i32>} : memref<8x2xf32, #tpu.memory_space<vmem>>, vector<8x2xf32>,
    %c0_23 = arith.constant 0 : index
    %c0_24 = arith.constant 0 : index
    %46 = vector.load %arg3[%c0_23, %c0_24] : memref<16x16xbf16, #tpu.memory_space<vmem>>, vector<16x16xbf16>
    %cst_25 = arith.constant dense<0.000000e+00> : vector<16x128xf32>
    %47 = tpu.matmul %46, %4, %cst_25 {dimension_numbers = #tpu.dot_dimension_numbers<[1], [0], [0], [1], [0, 0, 1, 1], [], []>} : vector<16x16xbf16>, vector<16x128xbf16>, vector<16x128xf32> -> vector<16x128xf32>
    %48 = arith.truncf %47 : vector<16x128xf32> to vector<16x128xbf16>
    %c0_26 = arith.constant 0 : index
    %c0_27 = arith.constant 0 : index
    %49 = vector.load %arg2[%c0_26, %c0_27] : memref<16x8xbf16, #tpu.memory_space<vmem>>, vector<16x8xbf16>
    %50 = arith.truncf %43 : vector<8x2xf32> to vector<8x2xbf16>
    %cst_28 = arith.constant dense<0.000000e+00> : vector<16x2xf32>
    %51 = tpu.matmul %49, %50, %cst_28 {dimension_numbers = #tpu.dot_dimension_numbers<[1], [0], [0], [1], [0, 0, 1, 1], [], []>} : vector<16x8xbf16>, vector<8x2xbf16>, vector<16x2xf32> -> vector<16x2xf32>
    %52 = arith.truncf %51 : vector<16x2xf32> to vector<16x2xbf16>
    %c0_29 = arith.constant 0 : index
    %c0_30 = arith.constant 0 : index
    %53 = vector.load %arg9[%c0_29, %c0_30] : memref<2x512xbf16, #tpu.memory_space<vmem>>, vector<2x512xbf16>
    %cst_31 = arith.constant dense<0.000000e+00> : vector<16x512xf32>
    %54 = tpu.matmul %52, %53, %cst_31 {dimension_numbers = #tpu.dot_dimension_numbers<[1], [0], [0], [1], [0, 0, 1, 1], [], []>} : vector<16x2xbf16>, vector<2x512xbf16>, vector<16x512xf32> -> vector<16x512xf32>
    %c0_32 = arith.constant 0 : index
    %c0_33 = arith.constant 0 : index
    %55 = vector.load %arg10[%c0_32, %c0_33] : memref<128x512xbf16, #tpu.memory_space<vmem>>, vector<128x512xbf16>
    %cst_34 = arith.constant dense<0.000000e+00> : vector<16x512xf32>
    %56 = tpu.matmul %48, %55, %cst_34 {dimension_numbers = #tpu.dot_dimension_numbers<[1], [0], [0], [1], [0, 0, 1, 1], [], []>} : vector<16x128xbf16>, vector<128x512xbf16>, vector<16x512xf32> -> vector<16x512xf32>
    %57 = arith.addf %54, %56 : vector<16x512xf32>
    %c0_35 = arith.constant 0 : index
    %c0_36 = arith.constant 0 : index
    %58 = vector.load %arg11[%c0_35, %c0_36] : memref<128x512xbf16, #tpu.memory_space<vmem>>, vector<128x512xbf16>
    %cst_37 = arith.constant dense<0.000000e+00> : vector<16x512xf32>
    %59 = tpu.matmul %4, %58, %cst_37 {dimension_numbers = #tpu.dot_dimension_numbers<[1], [0], [0], [1], [0, 0, 1, 1], [], []>} : vector<16x128xbf16>, vector<128x512xbf16>, vector<16x512xf32> -> vector<16x512xf32>
    %60 = arith.addf %57, %59 : vector<16x512xf32>
    %c0_38 = arith.constant 0 : index
    %c0_39 = arith.constant 0 : index
    %61 = vector.load %arg12[%c0_38, %c0_39] : memref<1x512xf32, #tpu.memory_space<vmem>>, vector<1x512xf32>
    %62 = vector.broadcast %61 : vector<1x512xf32> to vector<16x512xf32>
    %63 = arith.addf %60, %62 : vector<16x512xf32>
    %c0_40 = arith.constant 0 : index
    %c0_41 = arith.constant 0 : index
    %64 = vector.load %arg14[%c0_40, %c0_41] : memref<16x128xf32, #tpu.memory_space<vmem>>, vector<16x128xf32>
    %65 = vector.extract_strided_slice %63 {offsets = [0, 0], sizes = [16, 128], strides = [1, 1]} : vector<16x512xf32> to vector<16x128xf32>
    %66 = arith.negf %65 : vector<16x128xf32>
    %67 = math.exp %66 : vector<16x128xf32>
    %cst_42 = arith.constant 1.000000e+00 : f32
    %68 = vector.broadcast %cst_42 : f32 to vector<16x128xf32>
    %69 = arith.addf %68, %67 : vector<16x128xf32>
    %70 = arith.divf %68, %69 : vector<16x128xf32>
    %71 = vector.extract_strided_slice %63 {offsets = [0, 128], sizes = [16, 128], strides = [1, 1]} : vector<16x512xf32> to vector<16x128xf32>
    %72 = arith.negf %71 : vector<16x128xf32>
    %73 = math.exp %72 : vector<16x128xf32>
    %cst_43 = arith.constant 1.000000e+00 : f32
    %74 = vector.broadcast %cst_43 : f32 to vector<16x128xf32>
    %75 = arith.addf %74, %73 : vector<16x128xf32>
    %76 = arith.divf %74, %75 : vector<16x128xf32>
    %77 = vector.extract_strided_slice %63 {offsets = [0, 256], sizes = [16, 128], strides = [1, 1]} : vector<16x512xf32> to vector<16x128xf32>
    %78 = math.tanh %77 : vector<16x128xf32>
    %79 = vector.extract_strided_slice %63 {offsets = [0, 384], sizes = [16, 128], strides = [1, 1]} : vector<16x512xf32> to vector<16x128xf32>
    %80 = arith.negf %79 : vector<16x128xf32>
    %81 = math.exp %80 : vector<16x128xf32>
    %cst_44 = arith.constant 1.000000e+00 : f32
    %82 = vector.broadcast %cst_44 : f32 to vector<16x128xf32>
    %83 = arith.addf %82, %81 : vector<16x128xf32>
    %84 = arith.divf %82, %83 : vector<16x128xf32>
    %85 = arith.mulf %76, %64 : vector<16x128xf32>
    %86 = arith.mulf %70, %78 : vector<16x128xf32>
    %87 = arith.addf %85, %86 : vector<16x128xf32>
    %88 = math.tanh %87 : vector<16x128xf32>
    %89 = arith.mulf %84, %88 : vector<16x128xf32>
    %c0_45 = arith.constant 0 : index
    %c0_46 = arith.constant 0 : index
    %90 = vector.load %arg13[%c0_45, %c0_46] : memref<16x128xf32, #tpu.memory_space<vmem>>, vector<16x128xf32>
    tpu.vector_store %arg13[%c0_45, %c0_46], %89 {strides = array<i32>} : memref<16x128xf32, #tpu.memory_space<vmem>>, vector<16x128xf32>,
    %c0_47 = arith.constant 0 : index
    %c0_48 = arith.constant 0 : index
    %91 = vector.load %arg14[%c0_47, %c0_48] : memref<16x128xf32, #tpu.memory_space<vmem>>, vector<16x128xf32>
    tpu.vector_store %arg14[%c0_47, %c0_48], %87 {strides = array<i32>} : memref<16x128xf32, #tpu.memory_space<vmem>>, vector<16x128xf32>,
    return
  }
  func.func @transform_0(%arg0: i32) -> (i32, i32) {
    %c0_i32 = arith.constant 0 : i32
    %c0_i32_0 = arith.constant 0 : i32
    %c0_i32_1 = arith.constant 0 : i32
    return %c0_i32, %c0_i32_0 : i32, i32
  }
  func.func @transform_1(%arg0: i32) -> (i32, i32) {
    %c0_i32 = arith.constant 0 : i32
    %c0_i32_0 = arith.constant 0 : i32
    %c0_i32_1 = arith.constant 0 : i32
    return %c0_i32, %c0_i32_0 : i32, i32
  }
  func.func @transform_2(%arg0: i32) -> (i32, i32) {
    %c0_i32 = arith.constant 0 : i32
    %c0_i32_0 = arith.constant 0 : i32
    %c0_i32_1 = arith.constant 0 : i32
    return %c0_i32, %c0_i32_0 : i32, i32
  }
  func.func @transform_3(%arg0: i32) -> (i32, i32) {
    %c0_i32 = arith.constant 0 : i32
    %c0_i32_0 = arith.constant 0 : i32
    %c0_i32_1 = arith.constant 0 : i32
    return %c0_i32, %c0_i32_0 : i32, i32
  }
  func.func @transform_4(%arg0: i32) -> (i32, i32) {
    %c0_i32 = arith.constant 0 : i32
    %c0_i32_0 = arith.constant 0 : i32
    %c0_i32_1 = arith.constant 0 : i32
    return %c0_i32, %c0_i32_0 : i32, i32
  }
  func.func @transform_5(%arg0: i32) -> (i32, i32) {
    %c0_i32 = arith.constant 0 : i32
    %c0_i32_0 = arith.constant 0 : i32
    %c0_i32_1 = arith.constant 0 : i32
    return %c0_i32, %c0_i32_0 : i32, i32
  }
  func.func @transform_6(%arg0: i32) -> (i32, i32) {
    %c0_i32 = arith.constant 0 : i32
    %c0_i32_0 = arith.constant 0 : i32
    %c0_i32_1 = arith.constant 0 : i32
    return %c0_i32, %c0_i32_0 : i32, i32
  }
  func.func @transform_7(%arg0: i32) -> (i32, i32) {
    %c0_i32 = arith.constant 0 : i32
    %c0_i32_0 = arith.constant 0 : i32
    %c0_i32_1 = arith.constant 0 : i32
    return %c0_i32, %c0_i32_0 : i32, i32
  }
  func.func @transform_8(%arg0: i32) -> (i32, i32) {
    %c0_i32 = arith.constant 0 : i32
    %c0_i32_0 = arith.constant 0 : i32
    %c0_i32_1 = arith.constant 0 : i32
    return %c0_i32, %c0_i32_0 : i32, i32
  }
  func.func @transform_9(%arg0: i32) -> (i32, i32) {
    %c0_i32 = arith.constant 0 : i32
    %c0_i32_0 = arith.constant 0 : i32
    %c0_i32_1 = arith.constant 0 : i32
    return %c0_i32, %c0_i32_0 : i32, i32
  }
  func.func @transform_10(%arg0: i32) -> (i32, i32) {
    %c0_i32 = arith.constant 0 : i32
    %c0_i32_0 = arith.constant 0 : i32
    %c0_i32_1 = arith.constant 0 : i32
    return %c0_i32, %c0_i32_0 : i32, i32
  }
  func.func @transform_11(%arg0: i32) -> (i32, i32) {
    %c0_i32 = arith.constant 0 : i32
    %c0_i32_0 = arith.constant 0 : i32
    %c0_i32_1 = arith.constant 0 : i32
    return %c0_i32, %c0_i32_0 : i32, i32
  }
  func.func @transform_12(%arg0: i32) -> (i32, i32) {
    %c0_i32 = arith.constant 0 : i32
    %c0_i32_0 = arith.constant 0 : i32
    %c0_i32_1 = arith.constant 0 : i32
    return %c0_i32, %c0_i32_0 : i32, i32
  }
}

</mosaic_0001>

<llo_original>
// kernel: tpu_custom_call.1
$region0: #{tpu_custom_call.1}
  #allocation0 [shape = 'u32[]', space=smem, size = 0x4, offset = 0x4, fixed_abs, tag = 'smem constant byte address 0x4 - core index']
  #allocation1 [shape = 'u32[144,128]{1,0:T(1,128)}', space=vmem, size = 0x12000, scoped, tag = 'internal scratch']
  #allocation2 [shape = 'f32[16,128]{1,0:T(8,128)}', space=vmem, size = 0x2000, scoped, tag = 'scratch operand']
  #allocation3 [shape = 'f32[8,2]{1,0:T(8,128)}', space=vmem, size = 0x1000, scoped, tag = 'scratch operand']
  #allocation4 [shape = 'f32[8,2]{1,0:T(8,128)}', space=vmem, size = 0x1000, scoped, tag = 'scratch operand']
  %s0 = inlined_call_operand.vmem [shape: bf16[8,16], index: 0, kind: input, shape index: {}]
  %s1 = inlined_call_operand.vmem [shape: bf16[16,8], index: 1, kind: input, shape index: {}]
  %s2 = inlined_call_operand.vmem [shape: bf16[16,16], index: 2, kind: input, shape index: {}]
  %s3 = inlined_call_operand.vmem [shape: f32[16,128], index: 3, kind: input, shape index: {}]
  %s4 = inlined_call_operand.vmem [shape: f32[1,2], index: 4, kind: input, shape index: {}]
  %s5 = inlined_call_operand.vmem [shape: bf16[128,8], index: 5, kind: input, shape index: {}]
  %s6 = inlined_call_operand.vmem [shape: bf16[2,8], index: 6, kind: input, shape index: {}]
  %s7 = inlined_call_operand.vmem [shape: f32[1,8], index: 7, kind: input, shape index: {}]
  %s8 = inlined_call_operand.vmem [shape: bf16[2,512], index: 8, kind: input, shape index: {}]
  %s9 = inlined_call_operand.hbm [shape: bf16[128,512], index: 9, kind: input, shape index: {}]
  %s10 = inlined_call_operand.hbm [shape: bf16[128,512], index: 10, kind: input, shape index: {}]
  %s11 = inlined_call_operand.vmem [shape: f32[1,512], index: 11, kind: input, shape index: {}]
  %s12 = inlined_call_operand.hbm [shape: f32[16,128], index: 12, kind: output, shape index: {}]
  %s13 = sld [smem:[#allocation0]]
  $region93: #{tpu_custom_call.1} parent=0
    _
  %s15 = ssub.s32 1, %s13
  %s16 = scalar_select 0, %s15, %s13
  $region1: #{tpu_custom_call.1} parent=0
    #allocation5 [shape = 'u8[131072]{0}', space=vmem, size = 0x20000, scoped, tag = 'input window, operand 9, single buffered']
    #allocation6 [shape = 's32[2]{0}', space=sflag, size = 0x8, scoped, tag = 'scoped memory for tpu_custom_call.1']
    #allocation7 [shape = 's32[2]{0}', space=sflag, size = 0x8, scoped, tag = 'scoped memory for tpu_custom_call.1']
    #allocation8 [shape = 'u8[131072]{0}', space=vmem, size = 0x20000, scoped, tag = 'input window, operand 10, single buffered']
    #allocation9 [shape = 's32[1]{0}', space=sflag, size = 0x4, scoped, tag = 'scoped memory for tpu_custom_call.1']
    #allocation10 [shape = 'u8[8192]{0}', space=vmem, size = 0x2000, scoped, tag = 'output window, operand 0, single buffered']
    %17 = vsyncpa [#allocation6], 0
    %18 = vsyncpa [#allocation9], 0
    %19 = vsyncpa [#allocation7], 0
    loop: start=0, step=1, limit=5
    $region2: #{tpu_custom_call.1} parent=1 // loop_pre_header
      _
    $region3: #{tpu_custom_call.1} parent=1 // loop_header
      %s21 = sphi 0, %s25
      %p22 = scmp.ge.s32.totalorder %s21, 5
      %s29 = sphi 0, %s29
      %s31 = sphi 0, %s29
      %s32 = sphi 0, %s31
      %s46 = sphi 0, %s32
      %s50 = sphi 0, %s50
      %s52 = sphi 0, %s50
      %s53 = sphi 0, %s52
      %s67 = sphi 0, %s53
      %s71 = sphi 0, %s71
      %s73 = sphi 0, %s71
      %s74 = sphi 0, %s73
      %s88 = sphi 0, %s74
      %s92 = sphi 0, %s92
      %s94 = sphi 0, %s92
      %s95 = sphi 0, %s94
      %s109 = sphi 0, %s95
      %s113 = sphi 0, %s113
      %s115 = sphi 0, %s113
      %s116 = sphi 0, %s115
      %s130 = sphi 0, %s116
      %s134 = sphi 0, %s134
      %s136 = sphi 0, %s134
      %s137 = sphi 0, %s136
      %s151 = sphi 0, %s137
      %s155 = sphi 0, %s155
      %s157 = sphi 0, %s155
      %s158 = sphi 0, %s157
      %s172 = sphi 0, %s158
      %s176 = sphi 0, %s176
      %s178 = sphi 0, %s176
      %s179 = sphi 0, %s178
      %s193 = sphi 0, %s179
      %s197 = sphi 0, %s197
      %s199 = sphi 0, %s197
      %s200 = sphi 0, %s199
      %s214 = sphi 0, %s200
      %s218 = sphi 0, %s218
      %s220 = sphi 0, %s218
      %s221 = sphi 0, %s220
      %s235 = sphi 0, %s221
      %s239 = sphi 0, %s239
      %s241 = sphi 0, %s239
      %s242 = sphi 0, %s241
      %s256 = sphi 0, %s242
      %s260 = sphi 0, %s260
      %s262 = sphi 0, %s260
      %s263 = sphi 0, %s262
      %s277 = sphi 0, %s263
      %s281 = sphi 0, %s281
      %s283 = sphi 0, %s281
      %s284 = sphi 0, %s283
      %s298 = sphi 0, %s284
    $region4: #{tpu_custom_call.1} parent=1 // loop_header_branch
      %24 = sbr.rel (%p22) target = $region8
    $region5: #{tpu_custom_call.1} parent=1 // loop_body
      %s26 = ssub.s32 %s21, 1
      %s27 = ssub.s32 %s21, 2
      %s28 = sadd.s32 %s21, 1
      %s30 = sadd.s32 %s29, 1
      %p33 = scmp.eq.s32.totalorder %s21, 2
      %p34 = scmp.ne.s32.totalorder %s29, %s31
      %p35 = scmp.eq.s32.totalorder %s21, 0
      %p36 = por %p34, %p35
      %p37 = scmp.ne.s32.totalorder %s29, %s31
      %p38 = scmp.eq.s32.totalorder %s26, 2
      %p39 = por %p37, %p38
      %p40 = scmp.ne.s32.totalorder %s31, %s32
      %p41 = scmp.eq.s32.totalorder %s26, 0
      %p42 = por %p40, %p41
      %p43 = scmp.ne.s32.totalorder %s31, %s32
      %p44 = scmp.eq.s32.totalorder %s27, 2
      %p45 = por %p43, %p44
      %p47 = scmp.ne.s32.totalorder %s32, %s46
      %p48 = scmp.eq.s32.totalorder %s27, 0
      %p49 = por %p47, %p48
      %s51 = sadd.s32 %s50, 1
      %p54 = scmp.eq.s32.totalorder %s21, 2
      %p55 = scmp.ne.s32.totalorder %s50, %s52
      %p56 = scmp.eq.s32.totalorder %s21, 0
      %p57 = por %p55, %p56
      %p58 = scmp.ne.s32.totalorder %s50, %s52
      %p59 = scmp.eq.s32.totalorder %s26, 2
      %p60 = por %p58, %p59
      %p61 = scmp.ne.s32.totalorder %s52, %s53
      %p62 = scmp.eq.s32.totalorder %s26, 0
      %p63 = por %p61, %p62
      %p64 = scmp.ne.s32.totalorder %s52, %s53
      %p65 = scmp.eq.s32.totalorder %s27, 2
      %p66 = por %p64, %p65
      %p68 = scmp.ne.s32.totalorder %s53, %s67
      %p69 = scmp.eq.s32.totalorder %s27, 0
      %p70 = por %p68, %p69
      %s72 = sadd.s32 %s71, 1
      %p75 = scmp.eq.s32.totalorder %s21, 2
      %p76 = scmp.ne.s32.totalorder %s71, %s73
      %p77 = scmp.eq.s32.totalorder %s21, 0
      %p78 = por %p76, %p77
      %p79 = scmp.ne.s32.totalorder %s71, %s73
      %p80 = scmp.eq.s32.totalorder %s26, 2
      %p81 = por %p79, %p80
      %p82 = scmp.ne.s32.totalorder %s73, %s74
      %p83 = scmp.eq.s32.totalorder %s26, 0
      %p84 = por %p82, %p83
      %p85 = scmp.ne.s32.totalorder %s73, %s74
      %p86 = scmp.eq.s32.totalorder %s27, 2
      %p87 = por %p85, %p86
      %p89 = scmp.ne.s32.totalorder %s74, %s88
      %p90 = scmp.eq.s32.totalorder %s27, 0
      %p91 = por %p89, %p90
      %s93 = sadd.s32 %s92, 1
      %p96 = scmp.eq.s32.totalorder %s21, 2
      %p97 = scmp.ne.s32.totalorder %s92, %s94
      %p98 = scmp.eq.s32.totalorder %s21, 0
      %p99 = por %p97, %p98
      %p100 = scmp.ne.s32.totalorder %s92, %s94
      %p101 = scmp.eq.s32.totalorder %s26, 2
      %p102 = por %p100, %p101
      %p103 = scmp.ne.s32.totalorder %s94, %s95
      %p104 = scmp.eq.s32.totalorder %s26, 0
      %p105 = por %p103, %p104
      %p106 = scmp.ne.s32.totalorder %s94, %s95
      %p107 = scmp.eq.s32.totalorder %s27, 2
      %p108 = por %p106, %p107
      %p110 = scmp.ne.s32.totalorder %s95, %s109
      %p111 = scmp.eq.s32.totalorder %s27, 0
      %p112 = por %p110, %p111
      %s114 = sadd.s32 %s113, 1
      %p117 = scmp.eq.s32.totalorder %s21, 2
      %p118 = scmp.ne.s32.totalorder %s113, %s115
      %p119 = scmp.eq.s32.totalorder %s21, 0
      %p120 = por %p118, %p119
      %p121 = scmp.ne.s32.totalorder %s113, %s115
      %p122 = scmp.eq.s32.totalorder %s26, 2
      %p123 = por %p121, %p122
      %p124 = scmp.ne.s32.totalorder %s115, %s116
      %p125 = scmp.eq.s32.totalorder %s26, 0
      %p126 = por %p124, %p125
      %p127 = scmp.ne.s32.totalorder %s115, %s116
      %p128 = scmp.eq.s32.totalorder %s27, 2
      %p129 = por %p127, %p128
      %p131 = scmp.ne.s32.totalorder %s116, %s130
      %p132 = scmp.eq.s32.totalorder %s27, 0
      %p133 = por %p131, %p132
      %s135 = sadd.s32 %s134, 1
      %p138 = scmp.eq.s32.totalorder %s21, 2
      %p139 = scmp.ne.s32.totalorder %s134, %s136
      %p140 = scmp.eq.s32.totalorder %s21, 0
      %p141 = por %p139, %p140
      %p142 = scmp.ne.s32.totalorder %s134, %s136
      %p143 = scmp.eq.s32.totalorder %s26, 2
      %p144 = por %p142, %p143
      %p145 = scmp.ne.s32.totalorder %s136, %s137
      %p146 = scmp.eq.s32.totalorder %s26, 0
      %p147 = por %p145, %p146
      %p148 = scmp.ne.s32.totalorder %s136, %s137
      %p149 = scmp.eq.s32.totalorder %s27, 2
      %p150 = por %p148, %p149
      %p152 = scmp.ne.s32.totalorder %s137, %s151
      %p153 = scmp.eq.s32.totalorder %s27, 0
      %p154 = por %p152, %p153
      %s156 = sadd.s32 %s155, 1
      %p159 = scmp.eq.s32.totalorder %s21, 2
      %p160 = scmp.ne.s32.totalorder %s155, %s157
      %p161 = scmp.eq.s32.totalorder %s21, 0
      %p162 = por %p160, %p161
      %p163 = scmp.ne.s32.totalorder %s155, %s157
      %p164 = scmp.eq.s32.totalorder %s26, 2
      %p165 = por %p163, %p164
      %p166 = scmp.ne.s32.totalorder %s157, %s158
      %p167 = scmp.eq.s32.totalorder %s26, 0
      %p168 = por %p166, %p167
      %p169 = scmp.ne.s32.totalorder %s157, %s158
      %p170 = scmp.eq.s32.totalorder %s27, 2
      %p171 = por %p169, %p170
      %p173 = scmp.ne.s32.totalorder %s158, %s172
      %p174 = scmp.eq.s32.totalorder %s27, 0
      %p175 = por %p173, %p174
      %s177 = sadd.s32 %s176, 1
      %p180 = scmp.eq.s32.totalorder %s21, 2
      %p181 = scmp.ne.s32.totalorder %s176, %s178
      %p182 = scmp.eq.s32.totalorder %s21, 0
      %p183 = por %p181, %p182
      %p184 = scmp.ne.s32.totalorder %s176, %s178
      %p185 = scmp.eq.s32.totalorder %s26, 2
      %p186 = por %p184, %p185
      %p187 = scmp.ne.s32.totalorder %s178, %s179
      %p188 = scmp.eq.s32.totalorder %s26, 0
      %p189 = por %p187, %p188
      %p190 = scmp.ne.s32.totalorder %s178, %s179
      %p191 = scmp.eq.s32.totalorder %s27, 2
      %p192 = por %p190, %p191
      %p194 = scmp.ne.s32.totalorder %s179, %s193
      %p195 = scmp.eq.s32.totalorder %s27, 0
      %p196 = por %p194, %p195
      %s198 = sadd.s32 %s197, 1
      %p201 = scmp.eq.s32.totalorder %s21, 2
      %p202 = scmp.ne.s32.totalorder %s197, %s199
      %p203 = scmp.eq.s32.totalorder %s21, 0
      %p204 = por %p202, %p203
      %p205 = scmp.ne.s32.totalorder %s197, %s199
      %p206 = scmp.eq.s32.totalorder %s26, 2
      %p207 = por %p205, %p206
      %p208 = scmp.ne.s32.totalorder %s199, %s200
      %p209 = scmp.eq.s32.totalorder %s26, 0
      %p210 = por %p208, %p209
      %p211 = scmp.ne.s32.totalorder %s199, %s200
      %p212 = scmp.eq.s32.totalorder %s27, 2
      %p213 = por %p211, %p212
      %p215 = scmp.ne.s32.totalorder %s200, %s214
      %p216 = scmp.eq.s32.totalorder %s27, 0
      %p217 = por %p215, %p216
      %s219 = sadd.s32 %s218, 1
      %p222 = scmp.eq.s32.totalorder %s21, 2
      %p223 = scmp.ne.s32.totalorder %s218, %s220
      %p224 = scmp.eq.s32.totalorder %s21, 0
      %p225 = por %p223, %p224
      %p226 = scmp.ne.s32.totalorder %s218, %s220
      %p227 = scmp.eq.s32.totalorder %s26, 2
      %p228 = por %p226, %p227
      %p229 = scmp.ne.s32.totalorder %s220, %s221
      %p230 = scmp.eq.s32.totalorder %s26, 0
      %p231 = por %p229, %p230
      %p232 = scmp.ne.s32.totalorder %s220, %s221
      %p233 = scmp.eq.s32.totalorder %s27, 2
      %p234 = por %p232, %p233
      %p236 = scmp.ne.s32.totalorder %s221, %s235
      %p237 = scmp.eq.s32.totalorder %s27, 0
      %p238 = por %p236, %p237
      %s240 = sadd.s32 %s239, 1
      %p243 = scmp.eq.s32.totalorder %s21, 2
      %p244 = scmp.ne.s32.totalorder %s239, %s241
      %p245 = scmp.eq.s32.totalorder %s21, 0
      %p246 = por %p244, %p245
      %p247 = scmp.ne.s32.totalorder %s239, %s241
      %p248 = scmp.eq.s32.totalorder %s26, 2
      %p249 = por %p247, %p248
      %p250 = scmp.ne.s32.totalorder %s241, %s242
      %p251 = scmp.eq.s32.totalorder %s26, 0
      %p252 = por %p250, %p251
      %p253 = scmp.ne.s32.totalorder %s241, %s242
      %p254 = scmp.eq.s32.totalorder %s27, 2
      %p255 = por %p253, %p254
      %p257 = scmp.ne.s32.totalorder %s242, %s256
      %p258 = scmp.eq.s32.totalorder %s27, 0
      %p259 = por %p257, %p258
      %s261 = sadd.s32 %s260, 1
      %p264 = scmp.eq.s32.totalorder %s21, 2
      %p265 = scmp.ne.s32.totalorder %s260, %s262
      %p266 = scmp.eq.s32.totalorder %s21, 0
      %p267 = por %p265, %p266
      %p268 = scmp.ne.s32.totalorder %s260, %s262
      %p269 = scmp.eq.s32.totalorder %s26, 2
      %p270 = por %p268, %p269
      %p271 = scmp.ne.s32.totalorder %s262, %s263
      %p272 = scmp.eq.s32.totalorder %s26, 0
      %p273 = por %p271, %p272
      %p274 = scmp.ne.s32.totalorder %s262, %s263
      %p275 = scmp.eq.s32.totalorder %s27, 2
      %p276 = por %p274, %p275
      %p278 = scmp.ne.s32.totalorder %s263, %s277
      %p279 = scmp.eq.s32.totalorder %s27, 0
      %p280 = por %p278, %p279
      %s282 = sadd.s32 %s281, 1
      %p285 = scmp.eq.s32.totalorder %s21, 2
      %p286 = scmp.ne.s32.totalorder %s281, %s283
      %p287 = scmp.eq.s32.totalorder %s21, 0
      %p288 = por %p286, %p287
      %p289 = scmp.ne.s32.totalorder %s281, %s283
      %p290 = scmp.eq.s32.totalorder %s26, 2
      %p291 = por %p289, %p290
      %p292 = scmp.ne.s32.totalorder %s283, %s284
      %p293 = scmp.eq.s32.totalorder %s26, 0
      %p294 = por %p292, %p293
      %p295 = scmp.ne.s32.totalorder %s283, %s284
      %p296 = scmp.eq.s32.totalorder %s27, 2
      %p297 = por %p295, %p296
      %p299 = scmp.ne.s32.totalorder %s284, %s298
      %p300 = scmp.eq.s32.totalorder %s27, 0
      %p301 = por %p299, %p300
      %p302 = scmp.le.s32.totalorder 1, %s21
      %p303 = scmp.lt.s32.totalorder %s21, 4
      %p304 = pnand %p302, %p303
      %p305 = pneg %p304
      // Predicated region
      $region9: #{tpu_custom_call.1} parent=5 // pred_check
        _
      $region10: #{tpu_custom_call.1} parent=5 // pred_check_branch
        %307 = sbr.rel (%p304) target = $region12
      $region11: #{tpu_custom_call.1} parent=5 // pred_region
        %s308 = ssub.s32 %s21, 1
        // Predicated region
        $region13: #{tpu_custom_call.1} parent=11 // pred_check
          %p309 = pneg %p42
        $region14: #{tpu_custom_call.1} parent=11 // pred_check_branch
          %311 = sbr.rel (%p309) target = $region16
        $region15: #{tpu_custom_call.1} parent=11 // pred_region
          _
        $region16: #{tpu_custom_call.1} parent=11 // pred_fallthru
          _
        // Predicated region
        $region17: #{tpu_custom_call.1} parent=11 // pred_check
          %p312 = pneg %p63
        $region18: #{tpu_custom_call.1} parent=11 // pred_check_branch
          %314 = sbr.rel (%p312) target = $region20
        $region19: #{tpu_custom_call.1} parent=11 // pred_region
          _
        $region20: #{tpu_custom_call.1} parent=11 // pred_fallthru
          _
        // Predicated region
        $region21: #{tpu_custom_call.1} parent=11 // pred_check
          %p315 = pneg %p84
        $region22: #{tpu_custom_call.1} parent=11 // pred_check_branch
          %317 = sbr.rel (%p315) target = $region24
        $region23: #{tpu_custom_call.1} parent=11 // pred_region
          _
        $region24: #{tpu_custom_call.1} parent=11 // pred_fallthru
          _
        // Predicated region
        $region25: #{tpu_custom_call.1} parent=11 // pred_check
          %p318 = pneg %p105
        $region26: #{tpu_custom_call.1} parent=11 // pred_check_branch
          %320 = sbr.rel (%p318) target = $region28
        $region27: #{tpu_custom_call.1} parent=11 // pred_region
          _
        $region28: #{tpu_custom_call.1} parent=11 // pred_fallthru
          _
        // Predicated region
        $region29: #{tpu_custom_call.1} parent=11 // pred_check
          %p321 = pneg %p126
        $region30: #{tpu_custom_call.1} parent=11 // pred_check_branch
          %323 = sbr.rel (%p321) target = $region32
        $region31: #{tpu_custom_call.1} parent=11 // pred_region
          _
        $region32: #{tpu_custom_call.1} parent=11 // pred_fallthru
          _
        // Predicated region
        $region33: #{tpu_custom_call.1} parent=11 // pred_check
          %p324 = pneg %p147
        $region34: #{tpu_custom_call.1} parent=11 // pred_check_branch
          %326 = sbr.rel (%p324) target = $region36
        $region35: #{tpu_custom_call.1} parent=11 // pred_region
          _
        $region36: #{tpu_custom_call.1} parent=11 // pred_fallthru
          _
        // Predicated region
        $region37: #{tpu_custom_call.1} parent=11 // pred_check
          %p327 = pneg %p168
        $region38: #{tpu_custom_call.1} parent=11 // pred_check_branch
          %329 = sbr.rel (%p327) target = $region40
        $region39: #{tpu_custom_call.1} parent=11 // pred_region
          _
        $region40: #{tpu_custom_call.1} parent=11 // pred_fallthru
          _
        // Predicated region
        $region41: #{tpu_custom_call.1} parent=11 // pred_check
          %p330 = pneg %p189
        $region42: #{tpu_custom_call.1} parent=11 // pred_check_branch
          %332 = sbr.rel (%p330) target = $region44
        $region43: #{tpu_custom_call.1} parent=11 // pred_region
          _
        $region44: #{tpu_custom_call.1} parent=11 // pred_fallthru
          _
        // Predicated region
        $region45: #{tpu_custom_call.1} parent=11 // pred_check
          %p333 = pneg %p210
        $region46: #{tpu_custom_call.1} parent=11 // pred_check_branch
          %335 = sbr.rel (%p333) target = $region48
        $region47: #{tpu_custom_call.1} parent=11 // pred_region
          _
        $region48: #{tpu_custom_call.1} parent=11 // pred_fallthru
          _
        // Predicated region
        $region49: #{tpu_custom_call.1} parent=11 // pred_check
          %p336 = pneg %p231
        $region50: #{tpu_custom_call.1} parent=11 // pred_check_branch
          %338 = sbr.rel (%p336) target = $region52
        $region51: #{tpu_custom_call.1} parent=11 // pred_region
          %s340 = ssub.s32 4096, 4096
          %341 = vsyncadd [#allocation6], %s340
          %s342 = sshll.u32 [#allocation5], 4
          %s343 = int_to_ptr.vmem [resolvable:$true] %s342
          %348 = dma.hbm_to_vmem [thread:$0]  %s9, 4096, %s343, [#allocation6], 256, 256, 16
        $region52: #{tpu_custom_call.1} parent=11 // pred_fallthru
          _
        // Predicated region
        $region53: #{tpu_custom_call.1} parent=11 // pred_check
          %p349 = pneg %p252
        $region54: #{tpu_custom_call.1} parent=11 // pred_check_branch
          %351 = sbr.rel (%p349) target = $region56
        $region55: #{tpu_custom_call.1} parent=11 // pred_region
          %s353 = ssub.s32 4096, 4096
          %354 = vsyncadd [#allocation9], %s353
          %s355 = sshll.u32 [#allocation8], 4
          %s356 = int_to_ptr.vmem [resolvable:$true] %s355
          %361 = dma.hbm_to_vmem [thread:$0]  %s10, 4096, %s356, [#allocation9], 256, 256, 16
        $region56: #{tpu_custom_call.1} parent=11 // pred_fallthru
          _
        // Predicated region
        $region57: #{tpu_custom_call.1} parent=11 // pred_check
          %p362 = pneg %p273
        $region58: #{tpu_custom_call.1} parent=11 // pred_check_branch
          %364 = sbr.rel (%p362) target = $region60
        $region59: #{tpu_custom_call.1} parent=11 // pred_region
          _
        $region60: #{tpu_custom_call.1} parent=11 // pred_fallthru
          _
      $region12: #{tpu_custom_call.1} parent=5 // pred_fallthru
        _
      %p365 = scmp.lt.s32.totalorder %s21, 3
      // Predicated region
      $region61: #{tpu_custom_call.1} parent=5 // pred_check
        %p366 = pneg %p365
      $region62: #{tpu_custom_call.1} parent=5 // pred_check_branch
        %368 = sbr.rel (%p366) target = $region64
      $region63: #{tpu_custom_call.1} parent=5 // pred_region
        _
      $region64: #{tpu_custom_call.1} parent=5 // pred_fallthru
        _
      %p369 = scmp.le.s32.totalorder 1, %s21
      %p370 = scmp.lt.s32.totalorder %s21, 4
      %p371 = pnand %p369, %p370
      %p372 = pneg %p371
      // Predicated region
      $region65: #{tpu_custom_call.1} parent=5 // pred_check
        _
      $region66: #{tpu_custom_call.1} parent=5 // pred_check_branch
        %374 = sbr.rel (%p371) target = $region68
      $region67: #{tpu_custom_call.1} parent=5 // pred_region
        %s375 = ssub.s32 %s21, 1
        // Predicated region
        $region69: #{tpu_custom_call.1} parent=67 // pred_check
          %p376 = pneg %p231
        $region70: #{tpu_custom_call.1} parent=67 // pred_check_branch
          %378 = sbr.rel (%p376) target = $region72
        $region71: #{tpu_custom_call.1} parent=67 // pred_region
          %379 = dma.done [#allocation6], 4096
        $region72: #{tpu_custom_call.1} parent=67 // pred_fallthru
          _
        // Predicated region
        $region73: #{tpu_custom_call.1} parent=67 // pred_check
          %p380 = pneg %p252
        $region74: #{tpu_custom_call.1} parent=67 // pred_check_branch
          %382 = sbr.rel (%p380) target = $region76
        $region75: #{tpu_custom_call.1} parent=67 // pred_region
          %383 = dma.done [#allocation9], 4096
        $region76: #{tpu_custom_call.1} parent=67 // pred_fallthru
          _
        %p384 = pneg %p42
        %p385 = pneg %p39
        %p386 = pneg %p63
        %p387 = pneg %p60
        %p388 = pneg %p84
        %p389 = pneg %p81
        %p390 = pneg %p105
        %p391 = pneg %p102
        %p392 = pneg %p126
        %p393 = pneg %p123
        %p394 = pneg %p147
        %p395 = pneg %p144
        %p396 = pneg %p168
        %p397 = pneg %p165
        %p398 = pneg %p189
        %p399 = pneg %p186
        %p400 = pneg %p210
        %p401 = pneg %p207
        %p402 = pneg %p231
        %p403 = pneg %p228
        %p404 = pneg %p252
        %p405 = pneg %p249
        %p406 = pneg %p273
        %p407 = pneg %p270
        %p408 = pneg %p294
        %p409 = pneg %p291
        %p411 = scmp.eq.s32.totalorder %s26, 0
        // Predicated region
        $region77: #{tpu_custom_call.1} parent=67 // pred_check
          %p412 = pneg %p411
        $region78: #{tpu_custom_call.1} parent=67 // pred_check_branch
          %414 = sbr.rel (%p412) target = $region80
        $region79: #{tpu_custom_call.1} parent=67 // pred_region
          %v415 = vld [vmem:[%s3] sm:$0xff]
          %v416 = vld [vmem:[%s3 + $0x8] sm:$0xff]
          %417 = vst [vmem:[#allocation10] sm:$0xff] %v415
          %418 = vst [vmem:[#allocation10 + $0x8] sm:$0xff] %v416
          %419 = vst [vmem:[#allocation2] sm:$0xff] 0.0
          %420 = vst [vmem:[#allocation2 + $0x8] sm:$0xff] 0.0
          %v421 = vld [vmem:[%s4] sm:$0x1]
          %v423 = vlaneseq
          %v424 = vshrl.u32 %v423, 7
          %v425 = vsub.s32 0, %v424
          %v426 = vrot.slane %v421, %v425
          %vm428 = vcmask 15360
          %429 = vst.msk [vmem:[#allocation3] sm:$0xff] %vm428, %v426
          %430 = vst.msk [vmem:[#allocation4] sm:$0xff] %vm428, 0.0
        $region80: #{tpu_custom_call.1} parent=67 // pred_fallthru
          _
        %v431 = vld [vmem:[#allocation10] sm:$0xff]
        %v432 = vld [vmem:[#allocation10 + $0x8] sm:$0xff]
        %v433 = vpack.c.bf16 %v432, %v431
        %v434 = vld [vmem:[%s5] sm:$0xf]
        %v435 = vld [vmem:[%s5 + $0x4] sm:$0xf]
        %v436 = vld [vmem:[%s5 + $0x8] sm:$0xf]
        %v437 = vld [vmem:[%s5 + $0xc] sm:$0xf]
        %v438 = vld [vmem:[%s5 + $0x10] sm:$0xf]
        %v439 = vld [vmem:[%s5 + $0x14] sm:$0xf]
        %v440 = vld [vmem:[%s5 + $0x18] sm:$0xf]
        %v441 = vld [vmem:[%s5 + $0x1c] sm:$0xf]
        %v442 = vld [vmem:[%s5 + $0x20] sm:$0xf]
        %v443 = vld [vmem:[%s5 + $0x24] sm:$0xf]
        %v444 = vld [vmem:[%s5 + $0x28] sm:$0xf]
        %v445 = vld [vmem:[%s5 + $0x2c] sm:$0xf]
        %v446 = vld [vmem:[%s5 + $0x30] sm:$0xf]
        %v447 = vld [vmem:[%s5 + $0x34] sm:$0xf]
        %v448 = vld [vmem:[%s5 + $0x38] sm:$0xf]
        %v449 = vld [vmem:[%s5 + $0x3c] sm:$0xf]
        %v466 = vunpack.c.l.b16 %v434
        %v467 = vunpack.c.l.b16 %v435
        %v468 = vunpack.c.l.b16 %v436
        %v469 = vunpack.c.l.b16 %v437
        %v470 = vunpack.c.l.b16 %v438
        %v471 = vunpack.c.l.b16 %v439
        %v472 = vunpack.c.l.b16 %v440
        %v473 = vunpack.c.l.b16 %v441
        %v474 = vunpack.c.l.b16 %v442
        %v475 = vunpack.c.l.b16 %v443
        %v476 = vunpack.c.l.b16 %v444
        %v477 = vunpack.c.l.b16 %v445
        %v478 = vunpack.c.l.b16 %v446
        %v479 = vunpack.c.l.b16 %v447
        %v480 = vunpack.c.l.b16 %v448
        %v481 = vunpack.c.l.b16 %v449
        %v482 = vpack.c.b16 %v467, %v466
        %v483 = vpack.c.b16 %v469, %v468
        %v484 = vpack.c.b16 %v471, %v470
        %v485 = vpack.c.b16 %v473, %v472
        %v486 = vpack.c.b16 %v475, %v474
        %v487 = vpack.c.b16 %v477, %v476
        %v488 = vpack.c.b16 %v479, %v478
        %v489 = vpack.c.b16 %v481, %v480
        %498 = vmatprep.subr.bf16.mxu0 0
        %499 = vmatpush1.bf16.msra.mxu0 %v482
        %500 = vmatprep.subr.bf16.mxu0 0
        %501 = vmatpush1.bf16.msra.mxu0 %v483
        %502 = vmatprep.subr.bf16.mxu0 0
        %503 = vmatpush1.bf16.msra.mxu0 %v484
        %504 = vmatprep.subr.bf16.mxu0 0
        %505 = vmatpush1.bf16.msra.mxu0 %v485
        %506 = vmatprep.subr.bf16.mxu0 0
        %507 = vmatpush1.bf16.msra.mxu0 %v486
        %508 = vmatprep.subr.bf16.mxu0 0
        %509 = vmatpush1.bf16.msra.mxu0 %v487
        %510 = vmatprep.subr.bf16.mxu0 0
        %511 = vmatpush1.bf16.msra.mxu0 %v488
        %512 = vmatprep.subr.bf16.mxu0 0
        %513 = vmatpush1.bf16.msra.mxu0 %v489
        %514 = vmatprep.subr.bf16.mxu0 0
        %515 = vmatpush1.bf16.msra.mxu0 0
        %516 = vmatprep.subr.bf16.mxu0 0
        %517 = vmatpush1.bf16.msra.mxu0 0
        %518 = vmatprep.subr.bf16.mxu0 0
        %519 = vmatpush1.bf16.msra.mxu0 0
        %520 = vmatprep.subr.bf16.mxu0 0
        %521 = vmatpush1.bf16.msra.mxu0 0
        %522 = vmatprep.subr.bf16.mxu0 0
        %523 = vmatpush1.bf16.msra.mxu0 0
        %524 = vmatprep.subr.bf16.mxu0 0
        %525 = vmatpush1.bf16.msra.mxu0 0
        %526 = vmatprep.subr.bf16.mxu0 0
        %527 = vmatpush1.bf16.msra.mxu0 0
        %528 = vmatprep.subr.bf16.mxu0 0
        %529 = vmatpush1.bf16.msra.mxu0 0
        %530 = vmatprep.mubr.bf16.mxu0 0
        %531 = vmatmul.mubr.bf16.gmra.mrb[0].mxu0 %v433
        %v532 = vpop.f32.mrb[0].mxu0
        %v533 = vadd.f32 0.0, %v532
        %v534 = vpop.f32.mrb[0].mxu0
        %v535 = vpop.f32.mrb[0].mxu0
        %v536 = vadd.f32 0.0, %v535
        %v537 = vpop.f32.mrb[0].mxu0
        %538 = vdwg.mxu0
        %v539 = vld [vmem:[%s0] sm:$0xf]
        %v540 = vpack.c.bf16 %v536, %v533
        %v541 = vld [vmem:[#allocation3] sm:$0xff]
        %v542 = vpack.c.bf16 %v541, %v541
        %v543 = vld [vmem:[%s6] sm:$0x1]
        %vm544 = vcmask 15360
        %v546 = vsel %vm544, %v542, 0
        %vm548 = vcmask 1040384
        %v550 = vsel %vm548, %v543, 0
        %552 = vmatprep.subr.bf16.mxu0 0
        %553 = vmatpush1.bf16.msra.mxu0 %v550
        %554 = vmatprep.subr.bf16.mxu0 0
        %555 = vmatpush1.bf16.msra.mxu0 0
        %556 = vmatprep.subr.bf16.mxu0 0
        %557 = vmatpush1.bf16.msra.mxu0 0
        %558 = vmatprep.subr.bf16.mxu0 0
        %559 = vmatpush1.bf16.msra.mxu0 0
        %560 = vmatprep.subr.bf16.mxu0 0
        %561 = vmatpush1.bf16.msra.mxu0 0
        %562 = vmatprep.subr.bf16.mxu0 0
        %563 = vmatpush1.bf16.msra.mxu0 0
        %564 = vmatprep.subr.bf16.mxu0 0
        %565 = vmatpush1.bf16.msra.mxu0 0
        %566 = vmatprep.subr.bf16.mxu0 0
        %567 = vmatpush1.bf16.msra.mxu0 0
        %568 = vmatprep.subr.bf16.mxu0 0
        %569 = vmatpush1.bf16.msra.mxu0 0
        %570 = vmatprep.subr.bf16.mxu0 0
        %571 = vmatpush1.bf16.msra.mxu0 0
        %572 = vmatprep.subr.bf16.mxu0 0
        %573 = vmatpush1.bf16.msra.mxu0 0
        %574 = vmatprep.subr.bf16.mxu0 0
        %575 = vmatpush1.bf16.msra.mxu0 0
        %576 = vmatprep.subr.bf16.mxu0 0
        %577 = vmatpush1.bf16.msra.mxu0 0
        %578 = vmatprep.subr.bf16.mxu0 0
        %579 = vmatpush1.bf16.msra.mxu0 0
        %580 = vmatprep.subr.bf16.mxu0 0
        %581 = vmatpush1.bf16.msra.mxu0 0
        %582 = vmatprep.subr.bf16.mxu0 0
        %583 = vmatpush1.bf16.msra.mxu0 0
        %584 = vmatprep.mubr.bf16.mxu0 0
        %585 = vmatmul.mubr.bf16.gmra.mrb[0].mxu0 %v546
        %v586 = vpop.f32.mrb[0].mxu0
        %v587 = vadd.f32 0.0, %v586
        %v588 = vpop.f32.mrb[0].mxu0
        %v589 = vpop.f32.mrb[0].mxu0
        %v590 = vpop.f32.mrb[0].mxu0
        %591 = vdwg.mxu0
        %vm592 = vcmask 130048
        %v594 = vsel %vm592, %v539, 0
        %596 = vmatprep.subr.bf16.mxu0 0
        %597 = vmatpush1.bf16.msra.mxu0 %v540
        %598 = vmatprep.subr.bf16.mxu0 0
        %599 = vmatpush1.bf16.msra.mxu0 0
        %600 = vmatprep.subr.bf16.mxu0 0
        %601 = vmatpush1.bf16.msra.mxu0 0
        %602 = vmatprep.subr.bf16.mxu0 0
        %603 = vmatpush1.bf16.msra.mxu0 0
        %604 = vmatprep.subr.bf16.mxu0 0
        %605 = vmatpush1.bf16.msra.mxu0 0
        %606 = vmatprep.subr.bf16.mxu0 0
        %607 = vmatpush1.bf16.msra.mxu0 0
        %608 = vmatprep.subr.bf16.mxu0 0
        %609 = vmatpush1.bf16.msra.mxu0 0
        %610 = vmatprep.subr.bf16.mxu0 0
        %611 = vmatpush1.bf16.msra.mxu0 0
        %612 = vmatprep.subr.bf16.mxu0 0
        %613 = vmatpush1.bf16.msra.mxu0 0
        %614 = vmatprep.subr.bf16.mxu0 0
        %615 = vmatpush1.bf16.msra.mxu0 0
        %616 = vmatprep.subr.bf16.mxu0 0
        %617 = vmatpush1.bf16.msra.mxu0 0
        %618 = vmatprep.subr.bf16.mxu0 0
        %619 = vmatpush1.bf16.msra.mxu0 0
        %620 = vmatprep.subr.bf16.mxu0 0
        %621 = vmatpush1.bf16.msra.mxu0 0
        %622 = vmatprep.subr.bf16.mxu0 0
        %623 = vmatpush1.bf16.msra.mxu0 0
        %624 = vmatprep.subr.bf16.mxu0 0
        %625 = vmatpush1.bf16.msra.mxu0 0
        %626 = vmatprep.subr.bf16.mxu0 0
        %627 = vmatpush1.bf16.msra.mxu0 0
        %628 = vmatprep.mubr.bf16.mxu0 0
        %629 = vmatmul.mubr.bf16.gmra.mrb[0].mxu0 %v594
        %v630 = vpop.f32.mrb[0].mxu0
        %v631 = vadd.f32 %v587, %v630
        %v632 = vpop.f32.mrb[0].mxu0
        %v633 = vpop.f32.mrb[0].mxu0
        %v634 = vpop.f32.mrb[0].mxu0
        %635 = vdwg.mxu0
        %v636 = vld [vmem:[%s7] sm:$0x1]
        %v638 = vlaneseq
        %v639 = vshrl.u32 %v638, 7
        %v640 = vsub.s32 0, %v639
        %v641 = vrot.slane %v636, %v640
        %v643 = vadd.f32 %v631, %v641
        %v644 = vld [vmem:[#allocation4] sm:$0xff]
        %v645 = vxor.u32 %v643, 2147483648
        %v646 = vmul.f32 %v645, 1.442695
        %v647 = vpow.pop %v646
        %v648 = vadd.f32 %v647, 1.0
        %v649 = vrcp.pop %v648
        %v650 = vmul.f32 1.0, %v649
        %v651 = vtanh.pop %v643
        %653 = vrot.lane.b32.xlu0 %v644, 2
        %v654 = vpop.permute.xlu0 %653
        %v656 = vmul.f32 %v650, %v654
        %658 = vrot.lane.b32.xlu0 %v651, 124
        %v659 = vpop.permute.xlu0 %658
        %v661 = vmul.f32 %v650, %v659
        %663 = vrot.lane.b32.xlu0 %v661, 2
        %v664 = vpop.permute.xlu0 %663
        %v666 = vadd.f32 %v656, %v664
        %v667 = vtanh.pop %v666
        %669 = vrot.lane.b32.xlu0 %v667, 4
        %v670 = vpop.permute.xlu0 %669
        %v672 = vmul.f32 %v650, %v670
        %674 = vrot.lane.b32.xlu0 %v672, 122
        %v675 = vpop.permute.xlu0 %674
        %677 = vst.msk [vmem:[#allocation3] sm:$0xff] %vm544, %v675
        %679 = vrot.lane.b32.xlu0 %v666, 126
        %v680 = vpop.permute.xlu0 %679
        %682 = vst.msk [vmem:[#allocation4] sm:$0xff] %vm544, %v680
        %v683 = vld [vmem:[%s2] sm:$0xf]
        %v684 = vld [vmem:[%s2 + $0x4] sm:$0xf]
        %v687 = vunpack.c.l.b16 %v683
        %v688 = vunpack.c.l.b16 %v684
        %v689 = vpack.c.b16 %v688, %v687
        %v691 = vsel %vm592, %v689, 0
        %693 = vmatprep.subr.bf16.mxu0 0
        %694 = vmatpush1.bf16.msra.mxu0 %v433
        %695 = vmatprep.subr.bf16.mxu0 0
        %696 = vmatpush1.bf16.msra.mxu0 0
        %697 = vmatprep.subr.bf16.mxu0 0
        %698 = vmatpush1.bf16.msra.mxu0 0
        %699 = vmatprep.subr.bf16.mxu0 0
        %700 = vmatpush1.bf16.msra.mxu0 0
        %701 = vmatprep.subr.bf16.mxu0 0
        %702 = vmatpush1.bf16.msra.mxu0 0
        %703 = vmatprep.subr.bf16.mxu0 0
        %704 = vmatpush1.bf16.msra.mxu0 0
        %705 = vmatprep.subr.bf16.mxu0 0
        %706 = vmatpush1.bf16.msra.mxu0 0
        %707 = vmatprep.subr.bf16.mxu0 0
        %708 = vmatpush1.bf16.msra.mxu0 0
        %709 = vmatprep.subr.bf16.mxu0 0
        %710 = vmatpush1.bf16.msra.mxu0 0
        %711 = vmatprep.subr.bf16.mxu0 0
        %712 = vmatpush1.bf16.msra.mxu0 0
        %713 = vmatprep.subr.bf16.mxu0 0
        %714 = vmatpush1.bf16.msra.mxu0 0
        %715 = vmatprep.subr.bf16.mxu0 0
        %716 = vmatpush1.bf16.msra.mxu0 0
        %717 = vmatprep.subr.bf16.mxu0 0
        %718 = vmatpush1.bf16.msra.mxu0 0
        %719 = vmatprep.subr.bf16.mxu0 0
        %720 = vmatpush1.bf16.msra.mxu0 0
        %721 = vmatprep.subr.bf16.mxu0 0
        %722 = vmatpush1.bf16.msra.mxu0 0
        %723 = vmatprep.subr.bf16.mxu0 0
        %724 = vmatpush1.bf16.msra.mxu0 0
        %725 = vmatprep.mubr.bf16.mxu0 0
        %726 = vmatmul.mubr.bf16.gmra.mrb[0].mxu0 %v691
        %v727 = vpop.f32.mrb[0].mxu0
        %v728 = vadd.f32 0.0, %v727
        %v729 = vpop.f32.mrb[0].mxu0
        %v730 = vpop.f32.mrb[0].mxu0
        %v731 = vadd.f32 0.0, %v730
        %v732 = vpop.f32.mrb[0].mxu0
        %733 = vdwg.mxu0
        %v734 = vpack.c.bf16 %v731, %v728
        %v735 = vld [vmem:[%s1] sm:$0xf]
        %v736 = vld [vmem:[%s1 + $0x4] sm:$0xf]
        %v737 = vpack.c.bf16 %v672, %v672
        %v740 = vunpack.c.l.b16 %v735
        %v741 = vunpack.c.l.b16 %v736
        %v742 = vpack.c.b16 %v741, %v740
        %744 = vrot.lane.b32.xlu0 %v737, 122
        %v745 = vpop.permute.xlu0 %744
        %vm746 = vcmask 64512
        %v748 = vsel %vm746, %v742, 0
        %vm750 = vcmask 1043456
        %v752 = vsel %vm750, %v745, 0
        %754 = vmatprep.subr.bf16.mxu0 0
        %755 = vmatpush1.bf16.msra.mxu0 %v752
        %756 = vmatprep.subr.bf16.mxu0 0
        %757 = vmatpush1.bf16.msra.mxu0 0
        %758 = vmatprep.subr.bf16.mxu0 0
        %759 = vmatpush1.bf16.msra.mxu0 0
        %760 = vmatprep.subr.bf16.mxu0 0
        %761 = vmatpush1.bf16.msra.mxu0 0
        %762 = vmatprep.subr.bf16.mxu0 0
        %763 = vmatpush1.bf16.msra.mxu0 0
        %764 = vmatprep.subr.bf16.mxu0 0
        %765 = vmatpush1.bf16.msra.mxu0 0
        %766 = vmatprep.subr.bf16.mxu0 0
        %767 = vmatpush1.bf16.msra.mxu0 0
        %768 = vmatprep.subr.bf16.mxu0 0
        %769 = vmatpush1.bf16.msra.mxu0 0
        %770 = vmatprep.subr.bf16.mxu0 0
        %771 = vmatpush1.bf16.msra.mxu0 0
        %772 = vmatprep.subr.bf16.mxu0 0
        %773 = vmatpush1.bf16.msra.mxu0 0
        %774 = vmatprep.subr.bf16.mxu0 0
        %775 = vmatpush1.bf16.msra.mxu0 0
        %776 = vmatprep.subr.bf16.mxu0 0
        %777 = vmatpush1.bf16.msra.mxu0 0
        %778 = vmatprep.subr.bf16.mxu0 0
        %779 = vmatpush1.bf16.msra.mxu0 0
        %780 = vmatprep.subr.bf16.mxu0 0
        %781 = vmatpush1.bf16.msra.mxu0 0
        %782 = vmatprep.subr.bf16.mxu0 0
        %783 = vmatpush1.bf16.msra.mxu0 0
        %784 = vmatprep.subr.bf16.mxu0 0
        %785 = vmatpush1.bf16.msra.mxu0 0
        %786 = vmatprep.mubr.bf16.mxu0 0
        %787 = vmatmul.mubr.bf16.gmra.mrb[0].mxu0 %v748
        %v788 = vpop.f32.mrb[0].mxu0
        %v789 = vadd.f32 0.0, %v788
        %v790 = vpop.f32.mrb[0].mxu0
        %v791 = vpop.f32.mrb[0].mxu0
        %v792 = vadd.f32 0.0, %v791
        %v793 = vpop.f32.mrb[0].mxu0
        %794 = vdwg.mxu0
        %v795 = vpack.c.bf16 %v792, %v789
        %v796 = vld [vmem:[%s8] sm:$0xf]
        %v797 = vld [vmem:[#allocation5] sm:$0xff]
        %v798 = vld [vmem:[#allocation5 + $0x8] sm:$0xff]
        %v799 = vld [vmem:[#allocation5 + $0x10] sm:$0xff]
        %v800 = vld [vmem:[#allocation5 + $0x18] sm:$0xff]
        %v801 = vld [vmem:[#allocation5 + $0x20] sm:$0xff]
        %v802 = vld [vmem:[#allocation5 + $0x28] sm:$0xff]
        %v803 = vld [vmem:[#allocation5 + $0x30] sm:$0xff]
        %v804 = vld [vmem:[#allocation5 + $0x38] sm:$0xff]
        %v805 = vld [vmem:[#allocation5 + $0x40] sm:$0xff]
        %v806 = vld [vmem:[#allocation5 + $0x48] sm:$0xff]
        %v807 = vld [vmem:[#allocation5 + $0x50] sm:$0xff]
        %v808 = vld [vmem:[#allocation5 + $0x58] sm:$0xff]
        %v809 = vld [vmem:[#allocation5 + $0x60] sm:$0xff]
        %v810 = vld [vmem:[#allocation5 + $0x68] sm:$0xff]
        %v811 = vld [vmem:[#allocation5 + $0x70] sm:$0xff]
        %v812 = vld [vmem:[#allocation5 + $0x78] sm:$0xff]
        %v813 = vld [vmem:[#allocation5 + $0x80] sm:$0xff]
        %v814 = vld [vmem:[#allocation5 + $0x88] sm:$0xff]
        %v815 = vld [vmem:[#allocation5 + $0x90] sm:$0xff]
        %v816 = vld [vmem:[#allocation5 + $0x98] sm:$0xff]
        %v817 = vld [vmem:[#allocation5 + $0xa0] sm:$0xff]
        %v818 = vld [vmem:[#allocation5 + $0xa8] sm:$0xff]
        %v819 = vld [vmem:[#allocation5 + $0xb0] sm:$0xff]
        %v820 = vld [vmem:[#allocation5 + $0xb8] sm:$0xff]
        %v821 = vld [vmem:[#allocation5 + $0xc0] sm:$0xff]
        %v822 = vld [vmem:[#allocation5 + $0xc8] sm:$0xff]
        %v823 = vld [vmem:[#allocation5 + $0xd0] sm:$0xff]
        %v824 = vld [vmem:[#allocation5 + $0xd8] sm:$0xff]
        %v825 = vld [vmem:[#allocation5 + $0xe0] sm:$0xff]
        %v826 = vld [vmem:[#allocation5 + $0xe8] sm:$0xff]
        %v827 = vld [vmem:[#allocation5 + $0xf0] sm:$0xff]
        %v828 = vld [vmem:[#allocation5 + $0xf8] sm:$0xff]
        %v861 = vunpack.c.l.b16 %v797
        %v862 = vunpack.c.h.b16 %v797
        %v863 = vunpack.c.l.b16 %v798
        %v864 = vunpack.c.h.b16 %v798
        %v865 = vunpack.c.l.b16 %v799
        %v866 = vunpack.c.h.b16 %v799
        %v867 = vunpack.c.l.b16 %v800
        %v868 = vunpack.c.h.b16 %v800
        %v869 = vunpack.c.l.b16 %v801
        %v870 = vunpack.c.h.b16 %v801
        %v871 = vunpack.c.l.b16 %v802
        %v872 = vunpack.c.h.b16 %v802
        %v873 = vunpack.c.l.b16 %v803
        %v874 = vunpack.c.h.b16 %v803
        %v875 = vunpack.c.l.b16 %v804
        %v876 = vunpack.c.h.b16 %v804
        %v877 = vunpack.c.l.b16 %v805
        %v878 = vunpack.c.h.b16 %v805
        %v879 = vunpack.c.l.b16 %v806
        %v880 = vunpack.c.h.b16 %v806
        %v881 = vunpack.c.l.b16 %v807
        %v882 = vunpack.c.h.b16 %v807
        %v883 = vunpack.c.l.b16 %v808
        %v884 = vunpack.c.h.b16 %v808
        %v885 = vunpack.c.l.b16 %v809
        %v886 = vunpack.c.h.b16 %v809
        %v887 = vunpack.c.l.b16 %v810
        %v888 = vunpack.c.h.b16 %v810
        %v889 = vunpack.c.l.b16 %v811
        %v890 = vunpack.c.h.b16 %v811
        %v891 = vunpack.c.l.b16 %v812
        %v892 = vunpack.c.h.b16 %v812
        %v893 = vunpack.c.l.b16 %v813
        %v894 = vunpack.c.h.b16 %v813
        %v895 = vunpack.c.l.b16 %v814
        %v896 = vunpack.c.h.b16 %v814
        %v897 = vunpack.c.l.b16 %v815
        %v898 = vunpack.c.h.b16 %v815
        %v899 = vunpack.c.l.b16 %v816
        %v900 = vunpack.c.h.b16 %v816
        %v901 = vunpack.c.l.b16 %v817
        %v902 = vunpack.c.h.b16 %v817
        %v903 = vunpack.c.l.b16 %v818
        %v904 = vunpack.c.h.b16 %v818
        %v905 = vunpack.c.l.b16 %v819
        %v906 = vunpack.c.h.b16 %v819
        %v907 = vunpack.c.l.b16 %v820
        %v908 = vunpack.c.h.b16 %v820
        %v909 = vunpack.c.l.b16 %v821
        %v910 = vunpack.c.h.b16 %v821
        %v911 = vunpack.c.l.b16 %v822
        %v912 = vunpack.c.h.b16 %v822
        %v913 = vunpack.c.l.b16 %v823
        %v914 = vunpack.c.h.b16 %v823
        %v915 = vunpack.c.l.b16 %v824
        %v916 = vunpack.c.h.b16 %v824
        %v917 = vunpack.c.l.b16 %v825
        %v918 = vunpack.c.h.b16 %v825
        %v919 = vunpack.c.l.b16 %v826
        %v920 = vunpack.c.h.b16 %v826
        %v921 = vunpack.c.l.b16 %v827
        %v922 = vunpack.c.h.b16 %v827
        %v923 = vunpack.c.l.b16 %v828
        %v924 = vunpack.c.h.b16 %v828
        %v925 = vpack.c.b16 %v865, %v861
        %v926 = vpack.c.b16 %v866, %v862
        %v927 = vpack.c.b16 %v867, %v863
        %v928 = vpack.c.b16 %v868, %v864
        %v929 = vpack.c.b16 %v873, %v869
        %v930 = vpack.c.b16 %v874, %v870
        %v931 = vpack.c.b16 %v875, %v871
        %v932 = vpack.c.b16 %v876, %v872
        %v933 = vpack.c.b16 %v881, %v877
        %v934 = vpack.c.b16 %v882, %v878
        %v935 = vpack.c.b16 %v883, %v879
        %v936 = vpack.c.b16 %v884, %v880
        %v937 = vpack.c.b16 %v889, %v885
        %v938 = vpack.c.b16 %v890, %v886
        %v939 = vpack.c.b16 %v891, %v887
        %v940 = vpack.c.b16 %v892, %v888
        %v941 = vpack.c.b16 %v897, %v893
        %v942 = vpack.c.b16 %v898, %v894
        %v943 = vpack.c.b16 %v899, %v895
        %v944 = vpack.c.b16 %v900, %v896
        %v945 = vpack.c.b16 %v905, %v901
        %v946 = vpack.c.b16 %v906, %v902
        %v947 = vpack.c.b16 %v907, %v903
        %v948 = vpack.c.b16 %v908, %v904
        %v949 = vpack.c.b16 %v913, %v909
        %v950 = vpack.c.b16 %v914, %v910
        %v951 = vpack.c.b16 %v915, %v911
        %v952 = vpack.c.b16 %v916, %v912
        %v953 = vpack.c.b16 %v921, %v917
        %v954 = vpack.c.b16 %v922, %v918
        %v955 = vpack.c.b16 %v923, %v919
        %v956 = vpack.c.b16 %v924, %v920
        %989 = vmatprep.subr.bf16.mxu0 %v926
        %990 = vmatpush1.bf16.msra.mxu0 %v925
        %991 = vmatprep.subr.bf16.mxu0 %v930
        %992 = vmatpush1.bf16.msra.mxu0 %v929
        %993 = vmatprep.subr.bf16.mxu0 %v934
        %994 = vmatpush1.bf16.msra.mxu0 %v933
        %995 = vmatprep.subr.bf16.mxu0 %v938
        %996 = vmatpush1.bf16.msra.mxu0 %v937
        %997 = vmatprep.subr.bf16.mxu0 %v942
        %998 = vmatpush1.bf16.msra.mxu0 %v941
        %999 = vmatprep.subr.bf16.mxu0 %v946
        %1000 = vmatpush1.bf16.msra.mxu0 %v945
        %1001 = vmatprep.subr.bf16.mxu0 %v950
        %1002 = vmatpush1.bf16.msra.mxu0 %v949
        %1003 = vmatprep.subr.bf16.mxu0 %v954
        %1004 = vmatpush1.bf16.msra.mxu0 %v953
        %1005 = vmatprep.subr.bf16.mxu0 0
        %1006 = vmatpush1.bf16.msra.mxu0 0
        %1007 = vmatprep.subr.bf16.mxu0 0
        %1008 = vmatpush1.bf16.msra.mxu0 0
        %1009 = vmatprep.subr.bf16.mxu0 0
        %1010 = vmatpush1.bf16.msra.mxu0 0
        %1011 = vmatprep.subr.bf16.mxu0 0
        %1012 = vmatpush1.bf16.msra.mxu0 0
        %1013 = vmatprep.subr.bf16.mxu0 0
        %1014 = vmatpush1.bf16.msra.mxu0 0
        %1015 = vmatprep.subr.bf16.mxu0 0
        %1016 = vmatpush1.bf16.msra.mxu0 0
        %1017 = vmatprep.subr.bf16.mxu0 0
        %1018 = vmatpush1.bf16.msra.mxu0 0
        %1019 = vmatprep.subr.bf16.mxu0 0
        %1020 = vmatpush1.bf16.msra.mxu0 0
        %1021 = vmatprep.mubr.bf16.mxu0 0
        %1022 = vmatmul.mubr.bf16.gmra.mrb[0].mxu0 %v734
        %v1023 = vpop.f32.mrb[0].mxu0
        %v1024 = vadd.f32 0.0, %v1023
        %v1025 = vpop.f32.mrb[0].mxu0
        %v1026 = vadd.f32 0.0, %v1025
        %v1027 = vpop.f32.mrb[0].mxu0
        %v1028 = vadd.f32 0.0, %v1027
        %v1029 = vpop.f32.mrb[0].mxu0
        %v1030 = vadd.f32 0.0, %v1029
        %1031 = vdwg.mxu0
        %1032 = vmatprep.subr.bf16.mxu0 %v928
        %1033 = vmatpush1.bf16.msra.mxu0 %v927
        %1034 = vmatprep.subr.bf16.mxu0 %v932
        %1035 = vmatpush1.bf16.msra.mxu0 %v931
        %1036 = vmatprep.subr.bf16.mxu0 %v936
        %1037 = vmatpush1.bf16.msra.mxu0 %v935
        %1038 = vmatprep.subr.bf16.mxu0 %v940
        %1039 = vmatpush1.bf16.msra.mxu0 %v939
        %1040 = vmatprep.subr.bf16.mxu0 %v944
        %1041 = vmatpush1.bf16.msra.mxu0 %v943
        %1042 = vmatprep.subr.bf16.mxu0 %v948
        %1043 = vmatpush1.bf16.msra.mxu0 %v947
        %1044 = vmatprep.subr.bf16.mxu0 %v952
        %1045 = vmatpush1.bf16.msra.mxu0 %v951
        %1046 = vmatprep.subr.bf16.mxu0 %v956
        %1047 = vmatpush1.bf16.msra.mxu0 %v955
        %1048 = vmatprep.subr.bf16.mxu0 0
        %1049 = vmatpush1.bf16.msra.mxu0 0
        %1050 = vmatprep.subr.bf16.mxu0 0
        %1051 = vmatpush1.bf16.msra.mxu0 0
        %1052 = vmatprep.subr.bf16.mxu0 0
        %1053 = vmatpush1.bf16.msra.mxu0 0
        %1054 = vmatprep.subr.bf16.mxu0 0
        %1055 = vmatpush1.bf16.msra.mxu0 0
        %1056 = vmatprep.subr.bf16.mxu0 0
        %1057 = vmatpush1.bf16.msra.mxu0 0
        %1058 = vmatprep.subr.bf16.mxu0 0
        %1059 = vmatpush1.bf16.msra.mxu0 0
        %1060 = vmatprep.subr.bf16.mxu0 0
        %1061 = vmatpush1.bf16.msra.mxu0 0
        %1062 = vmatprep.subr.bf16.mxu0 0
        %1063 = vmatpush1.bf16.msra.mxu0 0
        %1064 = vmatprep.mubr.bf16.mxu0 0
        %1065 = vmatmul.mubr.bf16.gmra.mrb[0].mxu0 %v734
        %v1066 = vpop.f32.mrb[0].mxu0
        %v1067 = vadd.f32 0.0, %v1066
        %v1068 = vpop.f32.mrb[0].mxu0
        %v1069 = vadd.f32 0.0, %v1068
        %v1070 = vpop.f32.mrb[0].mxu0
        %v1071 = vadd.f32 0.0, %v1070
        %v1072 = vpop.f32.mrb[0].mxu0
        %v1073 = vadd.f32 0.0, %v1072
        %1074 = vdwg.mxu0
        %v1077 = vunpack.c.l.s4 1966171168
        %v1078 = vunpack.c.0.s8 %v1077
        %v1079 = vlaneseq
        %v1080 = vshrl.u32 %v1079, 7
        %v1081 = vsub.s32 %v1078, %v1080
        %v1082 = vrot.slane %v796, %v1081
        %v1083 = vcombine.high %v1082, %v1082
        %v1085 = vunpack.c.l.s4 1966171168
        %v1086 = vunpack.c.0.s8 %v1085
        %v1087 = vlaneseq
        %v1088 = vshrl.u32 %v1087, 7
        %v1089 = vsub.s32 %v1086, %v1088
        %v1090 = vrot.slane %v1082, %v1089
        %v1092 = vunpack.c.l.s4 1966171168
        %v1093 = vunpack.c.0.s8 %v1092
        %v1094 = vlaneseq
        %v1095 = vshrl.u32 %v1094, 7
        %v1096 = vsub.s32 %v1093, %v1095
        %v1097 = vrot.slane %v1083, %v1096
        %v1098 = vcombine.high %v1090, %v1090
        %v1099 = vcombine.high %v1097, %v1097
        %v1101 = vsel %vm544, %v795, 0
        %v1104 = vsel %vm548, %v1090, 0
        %v1107 = vsel %vm548, %v1097, 0
        %v1110 = vsel %vm548, %v1098, 0
        %v1113 = vsel %vm548, %v1099, 0
        %1115 = vmatprep.subr.bf16.mxu0 %v1107
        %1116 = vmatpush1.bf16.msra.mxu0 %v1104
        %1117 = vmatprep.subr.bf16.mxu0 0
        %1118 = vmatpush1.bf16.msra.mxu0 0
        %1119 = vmatprep.subr.bf16.mxu0 0
        %1120 = vmatpush1.bf16.msra.mxu0 0
        %1121 = vmatprep.subr.bf16.mxu0 0
        %1122 = vmatpush1.bf16.msra.mxu0 0
        %1123 = vmatprep.subr.bf16.mxu0 0
        %1124 = vmatpush1.bf16.msra.mxu0 0
        %1125 = vmatprep.subr.bf16.mxu0 0
        %1126 = vmatpush1.bf16.msra.mxu0 0
        %1127 = vmatprep.subr.bf16.mxu0 0
        %1128 = vmatpush1.bf16.msra.mxu0 0
        %1129 = vmatprep.subr.bf16.mxu0 0
        %1130 = vmatpush1.bf16.msra.mxu0 0
        %1131 = vmatprep.subr.bf16.mxu0 0
        %1132 = vmatpush1.bf16.msra.mxu0 0
        %1133 = vmatprep.subr.bf16.mxu0 0
        %1134 = vmatpush1.bf16.msra.mxu0 0
        %1135 = vmatprep.subr.bf16.mxu0 0
        %1136 = vmatpush1.bf16.msra.mxu0 0
        %1137 = vmatprep.subr.bf16.mxu0 0
        %1138 = vmatpush1.bf16.msra.mxu0 0
        %1139 = vmatprep.subr.bf16.mxu0 0
        %1140 = vmatpush1.bf16.msra.mxu0 0
        %1141 = vmatprep.subr.bf16.mxu0 0
        %1142 = vmatpush1.bf16.msra.mxu0 0
        %1143 = vmatprep.subr.bf16.mxu0 0
        %1144 = vmatpush1.bf16.msra.mxu0 0
        %1145 = vmatprep.subr.bf16.mxu0 0
        %1146 = vmatpush1.bf16.msra.mxu0 0
        %1147 = vmatprep.mubr.bf16.mxu0 0
        %1148 = vmatmul.mubr.bf16.gmra.mrb[0].mxu0 %v1101
        %v1149 = vpop.f32.mrb[0].mxu0
        %v1150 = vadd.f32 %v1024, %v1149
        %v1151 = vpop.f32.mrb[0].mxu0
        %v1152 = vadd.f32 %v1026, %v1151
        %v1153 = vpop.f32.mrb[0].mxu0
        %v1154 = vadd.f32 %v1028, %v1153
        %v1155 = vpop.f32.mrb[0].mxu0
        %v1156 = vadd.f32 %v1030, %v1155
        %1157 = vdwg.mxu0
        %1158 = vmatprep.subr.bf16.mxu0 %v1113
        %1159 = vmatpush1.bf16.msra.mxu0 %v1110
        %1160 = vmatprep.subr.bf16.mxu0 0
        %1161 = vmatpush1.bf16.msra.mxu0 0
        %1162 = vmatprep.subr.bf16.mxu0 0
        %1163 = vmatpush1.bf16.msra.mxu0 0
        %1164 = vmatprep.subr.bf16.mxu0 0
        %1165 = vmatpush1.bf16.msra.mxu0 0
        %1166 = vmatprep.subr.bf16.mxu0 0
        %1167 = vmatpush1.bf16.msra.mxu0 0
        %1168 = vmatprep.subr.bf16.mxu0 0
        %1169 = vmatpush1.bf16.msra.mxu0 0
        %1170 = vmatprep.subr.bf16.mxu0 0
        %1171 = vmatpush1.bf16.msra.mxu0 0
        %1172 = vmatprep.subr.bf16.mxu0 0
        %1173 = vmatpush1.bf16.msra.mxu0 0
        %1174 = vmatprep.subr.bf16.mxu0 0
        %1175 = vmatpush1.bf16.msra.mxu0 0
        %1176 = vmatprep.subr.bf16.mxu0 0
        %1177 = vmatpush1.bf16.msra.mxu0 0
        %1178 = vmatprep.subr.bf16.mxu0 0
        %1179 = vmatpush1.bf16.msra.mxu0 0
        %1180 = vmatprep.subr.bf16.mxu0 0
        %1181 = vmatpush1.bf16.msra.mxu0 0
        %1182 = vmatprep.subr.bf16.mxu0 0
        %1183 = vmatpush1.bf16.msra.mxu0 0
        %1184 = vmatprep.subr.bf16.mxu0 0
        %1185 = vmatpush1.bf16.msra.mxu0 0
        %1186 = vmatprep.subr.bf16.mxu0 0
        %1187 = vmatpush1.bf16.msra.mxu0 0
        %1188 = vmatprep.subr.bf16.mxu0 0
        %1189 = vmatpush1.bf16.msra.mxu0 0
        %1190 = vmatprep.mubr.bf16.mxu0 0
        %1191 = vmatmul.mubr.bf16.gmra.mrb[0].mxu0 %v1101
        %v1192 = vpop.f32.mrb[0].mxu0
        %v1193 = vadd.f32 %v1067, %v1192
        %v1194 = vpop.f32.mrb[0].mxu0
        %v1195 = vadd.f32 %v1069, %v1194
        %v1196 = vpop.f32.mrb[0].mxu0
        %v1197 = vadd.f32 %v1071, %v1196
        %v1198 = vpop.f32.mrb[0].mxu0
        %v1199 = vadd.f32 %v1073, %v1198
        %1200 = vdwg.mxu0
        %v1201 = vld [vmem:[#allocation8] sm:$0xff]
        %v1202 = vld [vmem:[#allocation8 + $0x8] sm:$0xff]
        %v1203 = vld [vmem:[#allocation8 + $0x10] sm:$0xff]
        %v1204 = vld [vmem:[#allocation8 + $0x18] sm:$0xff]
        %v1205 = vld [vmem:[#allocation8 + $0x20] sm:$0xff]
        %v1206 = vld [vmem:[#allocation8 + $0x28] sm:$0xff]
        %v1207 = vld [vmem:[#allocation8 + $0x30] sm:$0xff]
        %v1208 = vld [vmem:[#allocation8 + $0x38] sm:$0xff]
        %v1209 = vld [vmem:[#allocation8 + $0x40] sm:$0xff]
        %v1210 = vld [vmem:[#allocation8 + $0x48] sm:$0xff]
        %v1211 = vld [vmem:[#allocation8 + $0x50] sm:$0xff]
        %v1212 = vld [vmem:[#allocation8 + $0x58] sm:$0xff]
        %v1213 = vld [vmem:[#allocation8 + $0x60] sm:$0xff]
        %v1214 = vld [vmem:[#allocation8 + $0x68] sm:$0xff]
        %v1215 = vld [vmem:[#allocation8 + $0x70] sm:$0xff]
        %v1216 = vld [vmem:[#allocation8 + $0x78] sm:$0xff]
        %v1217 = vld [vmem:[#allocation8 + $0x80] sm:$0xff]
        %v1218 = vld [vmem:[#allocation8 + $0x88] sm:$0xff]
        %v1219 = vld [vmem:[#allocation8 + $0x90] sm:$0xff]
        %v1220 = vld [vmem:[#allocation8 + $0x98] sm:$0xff]
        %v1221 = vld [vmem:[#allocation8 + $0xa0] sm:$0xff]
        %v1222 = vld [vmem:[#allocation8 + $0xa8] sm:$0xff]
        %v1223 = vld [vmem:[#allocation8 + $0xb0] sm:$0xff]
        %v1224 = vld [vmem:[#allocation8 + $0xb8] sm:$0xff]
        %v1225 = vld [vmem:[#allocation8 + $0xc0] sm:$0xff]
        %v1226 = vld [vmem:[#allocation8 + $0xc8] sm:$0xff]
        %v1227 = vld [vmem:[#allocation8 + $0xd0] sm:$0xff]
        %v1228 = vld [vmem:[#allocation8 + $0xd8] sm:$0xff]
        %v1229 = vld [vmem:[#allocation8 + $0xe0] sm:$0xff]
        %v1230 = vld [vmem:[#allocation8 + $0xe8] sm:$0xff]
        %v1231 = vld [vmem:[#allocation8 + $0xf0] sm:$0xff]
        %v1232 = vld [vmem:[#allocation8 + $0xf8] sm:$0xff]
        %v1265 = vunpack.c.l.b16 %v1201
        %v1266 = vunpack.c.h.b16 %v1201
        %v1267 = vunpack.c.l.b16 %v1202
        %v1268 = vunpack.c.h.b16 %v1202
        %v1269 = vunpack.c.l.b16 %v1203
        %v1270 = vunpack.c.h.b16 %v1203
        %v1271 = vunpack.c.l.b16 %v1204
        %v1272 = vunpack.c.h.b16 %v1204
        %v1273 = vunpack.c.l.b16 %v1205
        %v1274 = vunpack.c.h.b16 %v1205
        %v1275 = vunpack.c.l.b16 %v1206
        %v1276 = vunpack.c.h.b16 %v1206
        %v1277 = vunpack.c.l.b16 %v1207
        %v1278 = vunpack.c.h.b16 %v1207
        %v1279 = vunpack.c.l.b16 %v1208
        %v1280 = vunpack.c.h.b16 %v1208
        %v1281 = vunpack.c.l.b16 %v1209
        %v1282 = vunpack.c.h.b16 %v1209
        %v1283 = vunpack.c.l.b16 %v1210
        %v1284 = vunpack.c.h.b16 %v1210
        %v1285 = vunpack.c.l.b16 %v1211
        %v1286 = vunpack.c.h.b16 %v1211
        %v1287 = vunpack.c.l.b16 %v1212
        %v1288 = vunpack.c.h.b16 %v1212
        %v1289 = vunpack.c.l.b16 %v1213
        %v1290 = vunpack.c.h.b16 %v1213
        %v1291 = vunpack.c.l.b16 %v1214
        %v1292 = vunpack.c.h.b16 %v1214
        %v1293 = vunpack.c.l.b16 %v1215
        %v1294 = vunpack.c.h.b16 %v1215
        %v1295 = vunpack.c.l.b16 %v1216
        %v1296 = vunpack.c.h.b16 %v1216
        %v1297 = vunpack.c.l.b16 %v1217
        %v1298 = vunpack.c.h.b16 %v1217
        %v1299 = vunpack.c.l.b16 %v1218
        %v1300 = vunpack.c.h.b16 %v1218
        %v1301 = vunpack.c.l.b16 %v1219
        %v1302 = vunpack.c.h.b16 %v1219
        %v1303 = vunpack.c.l.b16 %v1220
        %v1304 = vunpack.c.h.b16 %v1220
        %v1305 = vunpack.c.l.b16 %v1221
        %v1306 = vunpack.c.h.b16 %v1221
        %v1307 = vunpack.c.l.b16 %v1222
        %v1308 = vunpack.c.h.b16 %v1222
        %v1309 = vunpack.c.l.b16 %v1223
        %v1310 = vunpack.c.h.b16 %v1223
        %v1311 = vunpack.c.l.b16 %v1224
        %v1312 = vunpack.c.h.b16 %v1224
        %v1313 = vunpack.c.l.b16 %v1225
        %v1314 = vunpack.c.h.b16 %v1225
        %v1315 = vunpack.c.l.b16 %v1226
        %v1316 = vunpack.c.h.b16 %v1226
        %v1317 = vunpack.c.l.b16 %v1227
        %v1318 = vunpack.c.h.b16 %v1227
        %v1319 = vunpack.c.l.b16 %v1228
        %v1320 = vunpack.c.h.b16 %v1228
        %v1321 = vunpack.c.l.b16 %v1229
        %v1322 = vunpack.c.h.b16 %v1229
        %v1323 = vunpack.c.l.b16 %v1230
        %v1324 = vunpack.c.h.b16 %v1230
        %v1325 = vunpack.c.l.b16 %v1231
        %v1326 = vunpack.c.h.b16 %v1231
        %v1327 = vunpack.c.l.b16 %v1232
        %v1328 = vunpack.c.h.b16 %v1232
        %v1329 = vpack.c.b16 %v1269, %v1265
        %v1330 = vpack.c.b16 %v1270, %v1266
        %v1331 = vpack.c.b16 %v1271, %v1267
        %v1332 = vpack.c.b16 %v1272, %v1268
        %v1333 = vpack.c.b16 %v1277, %v1273
        %v1334 = vpack.c.b16 %v1278, %v1274
        %v1335 = vpack.c.b16 %v1279, %v1275
        %v1336 = vpack.c.b16 %v1280, %v1276
        %v1337 = vpack.c.b16 %v1285, %v1281
        %v1338 = vpack.c.b16 %v1286, %v1282
        %v1339 = vpack.c.b16 %v1287, %v1283
        %v1340 = vpack.c.b16 %v1288, %v1284
        %v1341 = vpack.c.b16 %v1293, %v1289
        %v1342 = vpack.c.b16 %v1294, %v1290
        %v1343 = vpack.c.b16 %v1295, %v1291
        %v1344 = vpack.c.b16 %v1296, %v1292
        %v1345 = vpack.c.b16 %v1301, %v1297
        %v1346 = vpack.c.b16 %v1302, %v1298
        %v1347 = vpack.c.b16 %v1303, %v1299
        %v1348 = vpack.c.b16 %v1304, %v1300
        %v1349 = vpack.c.b16 %v1309, %v1305
        %v1350 = vpack.c.b16 %v1310, %v1306
        %v1351 = vpack.c.b16 %v1311, %v1307
        %v1352 = vpack.c.b16 %v1312, %v1308
        %v1353 = vpack.c.b16 %v1317, %v1313
        %v1354 = vpack.c.b16 %v1318, %v1314
        %v1355 = vpack.c.b16 %v1319, %v1315
        %v1356 = vpack.c.b16 %v1320, %v1316
        %v1357 = vpack.c.b16 %v1325, %v1321
        %v1358 = vpack.c.b16 %v1326, %v1322
        %v1359 = vpack.c.b16 %v1327, %v1323
        %v1360 = vpack.c.b16 %v1328, %v1324
        %1393 = vmatprep.subr.bf16.mxu0 %v1330
        %1394 = vmatpush1.bf16.msra.mxu0 %v1329
        %1395 = vmatprep.subr.bf16.mxu0 %v1334
        %1396 = vmatpush1.bf16.msra.mxu0 %v1333
        %1397 = vmatprep.subr.bf16.mxu0 %v1338
        %1398 = vmatpush1.bf16.msra.mxu0 %v1337
        %1399 = vmatprep.subr.bf16.mxu0 %v1342
        %1400 = vmatpush1.bf16.msra.mxu0 %v1341
        %1401 = vmatprep.subr.bf16.mxu0 %v1346
        %1402 = vmatpush1.bf16.msra.mxu0 %v1345
        %1403 = vmatprep.subr.bf16.mxu0 %v1350
        %1404 = vmatpush1.bf16.msra.mxu0 %v1349
        %1405 = vmatprep.subr.bf16.mxu0 %v1354
        %1406 = vmatpush1.bf16.msra.mxu0 %v1353
        %1407 = vmatprep.subr.bf16.mxu0 %v1358
        %1408 = vmatpush1.bf16.msra.mxu0 %v1357
        %1409 = vmatprep.subr.bf16.mxu0 0
        %1410 = vmatpush1.bf16.msra.mxu0 0
        %1411 = vmatprep.subr.bf16.mxu0 0
        %1412 = vmatpush1.bf16.msra.mxu0 0
        %1413 = vmatprep.subr.bf16.mxu0 0
        %1414 = vmatpush1.bf16.msra.mxu0 0
        %1415 = vmatprep.subr.bf16.mxu0 0
        %1416 = vmatpush1.bf16.msra.mxu0 0
        %1417 = vmatprep.subr.bf16.mxu0 0
        %1418 = vmatpush1.bf16.msra.mxu0 0
        %1419 = vmatprep.subr.bf16.mxu0 0
        %1420 = vmatpush1.bf16.msra.mxu0 0
        %1421 = vmatprep.subr.bf16.mxu0 0
        %1422 = vmatpush1.bf16.msra.mxu0 0
        %1423 = vmatprep.subr.bf16.mxu0 0
        %1424 = vmatpush1.bf16.msra.mxu0 0
        %1425 = vmatprep.mubr.bf16.mxu0 0
        %1426 = vmatmul.mubr.bf16.gmra.mrb[0].mxu0 %v433
        %v1427 = vpop.f32.mrb[0].mxu0
        %v1428 = vadd.f32 0.0, %v1427
        %v1429 = vpop.f32.mrb[0].mxu0
        %v1430 = vadd.f32 0.0, %v1429
        %v1431 = vpop.f32.mrb[0].mxu0
        %v1432 = vadd.f32 0.0, %v1431
        %v1433 = vpop.f32.mrb[0].mxu0
        %v1434 = vadd.f32 0.0, %v1433
        %1435 = vdwg.mxu0
        %1436 = vmatprep.subr.bf16.mxu0 %v1332
        %1437 = vmatpush1.bf16.msra.mxu0 %v1331
        %1438 = vmatprep.subr.bf16.mxu0 %v1336
        %1439 = vmatpush1.bf16.msra.mxu0 %v1335
        %1440 = vmatprep.subr.bf16.mxu0 %v1340
        %1441 = vmatpush1.bf16.msra.mxu0 %v1339
        %1442 = vmatprep.subr.bf16.mxu0 %v1344
        %1443 = vmatpush1.bf16.msra.mxu0 %v1343
        %1444 = vmatprep.subr.bf16.mxu0 %v1348
        %1445 = vmatpush1.bf16.msra.mxu0 %v1347
        %1446 = vmatprep.subr.bf16.mxu0 %v1352
        %1447 = vmatpush1.bf16.msra.mxu0 %v1351
        %1448 = vmatprep.subr.bf16.mxu0 %v1356
        %1449 = vmatpush1.bf16.msra.mxu0 %v1355
        %1450 = vmatprep.subr.bf16.mxu0 %v1360
        %1451 = vmatpush1.bf16.msra.mxu0 %v1359
        %1452 = vmatprep.subr.bf16.mxu0 0
        %1453 = vmatpush1.bf16.msra.mxu0 0
        %1454 = vmatprep.subr.bf16.mxu0 0
        %1455 = vmatpush1.bf16.msra.mxu0 0
        %1456 = vmatprep.subr.bf16.mxu0 0
        %1457 = vmatpush1.bf16.msra.mxu0 0
        %1458 = vmatprep.subr.bf16.mxu0 0
        %1459 = vmatpush1.bf16.msra.mxu0 0
        %1460 = vmatprep.subr.bf16.mxu0 0
        %1461 = vmatpush1.bf16.msra.mxu0 0
        %1462 = vmatprep.subr.bf16.mxu0 0
        %1463 = vmatpush1.bf16.msra.mxu0 0
        %1464 = vmatprep.subr.bf16.mxu0 0
        %1465 = vmatpush1.bf16.msra.mxu0 0
        %1466 = vmatprep.subr.bf16.mxu0 0
        %1467 = vmatpush1.bf16.msra.mxu0 0
        %1468 = vmatprep.mubr.bf16.mxu0 0
        %1469 = vmatmul.mubr.bf16.gmra.mrb[0].mxu0 %v433
        %v1470 = vpop.f32.mrb[0].mxu0
        %v1471 = vadd.f32 0.0, %v1470
        %v1472 = vpop.f32.mrb[0].mxu0
        %v1473 = vadd.f32 0.0, %v1472
        %v1474 = vpop.f32.mrb[0].mxu0
        %v1475 = vadd.f32 0.0, %v1474
        %v1476 = vpop.f32.mrb[0].mxu0
        %v1477 = vadd.f32 0.0, %v1476
        %1478 = vdwg.mxu0
        %v1479 = vadd.f32 %v1150, %v1428
        %v1480 = vadd.f32 %v1152, %v1430
        %v1481 = vadd.f32 %v1193, %v1471
        %v1482 = vadd.f32 %v1195, %v1473
        %v1483 = vadd.f32 %v1154, %v1432
        %v1484 = vadd.f32 %v1156, %v1434
        %v1485 = vadd.f32 %v1197, %v1475
        %v1486 = vadd.f32 %v1199, %v1477
        %v1487 = vld [vmem:[%s11] sm:$0xf]
        %v1489 = vlaneseq
        %v1490 = vshrl.u32 %v1489, 7
        %v1491 = vsub.s32 0, %v1490
        %v1492 = vrot.slane %v1487, %v1491
        %v1493 = vlaneseq
        %v1494 = vshrl.u32 %v1493, 7
        %v1495 = vsub.s32 1, %v1494
        %v1496 = vrot.slane %v1487, %v1495
        %v1497 = vlaneseq
        %v1498 = vshrl.u32 %v1497, 7
        %v1499 = vsub.s32 2, %v1498
        %v1500 = vrot.slane %v1487, %v1499
        %v1501 = vlaneseq
        %v1502 = vshrl.u32 %v1501, 7
        %v1503 = vsub.s32 3, %v1502
        %v1504 = vrot.slane %v1487, %v1503
        %v1509 = vadd.f32 %v1479, %v1492
        %v1510 = vadd.f32 %v1480, %v1496
        %v1511 = vadd.f32 %v1481, %v1500
        %v1512 = vadd.f32 %v1482, %v1504
        %v1513 = vadd.f32 %v1483, %v1492
        %v1514 = vadd.f32 %v1484, %v1496
        %v1515 = vadd.f32 %v1485, %v1500
        %v1516 = vadd.f32 %v1486, %v1504
        %v1517 = vld [vmem:[#allocation2] sm:$0xff]
        %v1518 = vld [vmem:[#allocation2 + $0x8] sm:$0xff]
        %v1519 = vxor.u32 %v1509, 2147483648
        %v1520 = vxor.u32 %v1513, 2147483648
        %v1521 = vmul.f32 %v1519, 1.442695
        %v1522 = vpow.pop %v1521
        %v1523 = vmul.f32 %v1520, 1.442695
        %v1524 = vpow.pop %v1523
        %v1525 = vadd.f32 %v1522, 1.0
        %v1526 = vadd.f32 %v1524, 1.0
        %v1527 = vrcp.pop %v1525
        %v1528 = vmul.f32 1.0, %v1527
        %v1529 = vrcp.pop %v1526
        %v1530 = vmul.f32 1.0, %v1529
        %v1531 = vxor.u32 %v1510, 2147483648
        %v1532 = vxor.u32 %v1514, 2147483648
        %v1533 = vmul.f32 %v1531, 1.442695
        %v1534 = vpow.pop %v1533
        %v1535 = vmul.f32 %v1532, 1.442695
        %v1536 = vpow.pop %v1535
        %v1537 = vadd.f32 %v1534, 1.0
        %v1538 = vadd.f32 %v1536, 1.0
        %v1539 = vrcp.pop %v1537
        %v1540 = vmul.f32 1.0, %v1539
        %v1541 = vrcp.pop %v1538
        %v1542 = vmul.f32 1.0, %v1541
        %v1543 = vtanh.pop %v1511
        %v1544 = vtanh.pop %v1515
        %v1545 = vxor.u32 %v1512, 2147483648
        %v1546 = vxor.u32 %v1516, 2147483648
        %v1547 = vmul.f32 %v1545, 1.442695
        %v1548 = vpow.pop %v1547
        %v1549 = vmul.f32 %v1546, 1.442695
        %v1550 = vpow.pop %v1549
        %v1551 = vadd.f32 %v1548, 1.0
        %v1552 = vadd.f32 %v1550, 1.0
        %v1553 = vrcp.pop %v1551
        %v1554 = vmul.f32 1.0, %v1553
        %v1555 = vrcp.pop %v1552
        %v1556 = vmul.f32 1.0, %v1555
        %v1557 = vmul.f32 %v1540, %v1517
        %v1558 = vmul.f32 %v1542, %v1518
        %v1559 = vmul.f32 %v1528, %v1543
        %v1560 = vmul.f32 %v1530, %v1544
        %v1561 = vadd.f32 %v1557, %v1559
        %v1562 = vadd.f32 %v1558, %v1560
        %v1563 = vtanh.pop %v1561
        %v1564 = vtanh.pop %v1562
        %v1565 = vmul.f32 %v1554, %v1563
        %v1566 = vmul.f32 %v1556, %v1564
        %1567 = vst [vmem:[#allocation10] sm:$0xff] %v1565
        %1568 = vst [vmem:[#allocation10 + $0x8] sm:$0xff] %v1566
        %1569 = vst [vmem:[#allocation2] sm:$0xff] %v1561
        %1570 = vst [vmem:[#allocation2 + $0x8] sm:$0xff] %v1562
        // Predicated region
        $region81: #{tpu_custom_call.1} parent=67 // pred_check
          %p1571 = pneg %p291
        $region82: #{tpu_custom_call.1} parent=67 // pred_check_branch
          %1573 = sbr.rel (%p1571) target = $region84
        $region83: #{tpu_custom_call.1} parent=67 // pred_region
          %s1575 = ssub.s32 256, 256
          %1576 = vsyncadd [#allocation7], %s1575
          %s1577 = sshll.u32 [#allocation10], 4
          %s1578 = int_to_ptr.vmem [resolvable:$true] %s1577
          %1583 = dma.vmem_to_hbm [thread:$0]  %s1578, 256, %s12, [#allocation7], 128, 128, 8
        $region84: #{tpu_custom_call.1} parent=67 // pred_fallthru
          _
        // Predicated region
        $region85: #{tpu_custom_call.1} parent=67 // pred_check
          %p1584 = pneg %p291
        $region86: #{tpu_custom_call.1} parent=67 // pred_check_branch
          %1586 = sbr.rel (%p1584) target = $region88
        $region87: #{tpu_custom_call.1} parent=67 // pred_region
          %1587 = dma.done [#allocation7], 256
        $region88: #{tpu_custom_call.1} parent=67 // pred_fallthru
          _
      $region68: #{tpu_custom_call.1} parent=5 // pred_fallthru
        _
      %p1588 = scmp.le.s32.totalorder 2, %s21
      // Predicated region
      $region89: #{tpu_custom_call.1} parent=5 // pred_check
        %p1589 = pneg %p1588
      $region90: #{tpu_custom_call.1} parent=5 // pred_check_branch
        %1591 = sbr.rel (%p1589) target = $region92
      $region91: #{tpu_custom_call.1} parent=5 // pred_region
        %s1592 = ssub.s32 %s21, 2
      $region92: #{tpu_custom_call.1} parent=5 // pred_fallthru
        _
    $region6: #{tpu_custom_call.1} parent=1 // loop_footer
      %s25 = sadd.s32 1, %s21
    $region7: #{tpu_custom_call.1} parent=1 // loop_footer_branch
      %20 = sbr.rel target = $region3
    $region8: #{tpu_custom_call.1} parent=1 // loop_exit
      _
    %1593 = vsyncpa [#allocation6], 1
    %s1594 = scalar_lea.sflag [#allocation6], 1
    %1595 = vsyncpa %s1594, 1
    %1596 = vsyncpa [#allocation9], 1
    %1597 = vsyncpa [#allocation7], 1
    %s1598 = scalar_lea.sflag [#allocation7], 1
    %1599 = vsyncpa %s1598, 1

// kernel: tpu_custom_call.1
$region0: #{tpu_custom_call.1}
  #allocation0 [shape = 'u32[]', space=smem, size = 0x4, offset = 0x4, fixed_abs, tag = 'smem constant byte address 0x4 - core index']
  #allocation1 [shape = 'u32[144,128]{1,0:T(1,128)}', space=vmem, size = 0x12000, scoped, tag = 'internal scratch']
  #allocation2 [shape = 'f32[16,128]{1,0:T(8,128)}', space=vmem, size = 0x2000, scoped, tag = 'scratch operand']
  #allocation3 [shape = 'f32[8,2]{1,0:T(8,128)}', space=vmem, size = 0x1000, scoped, tag = 'scratch operand']
  #allocation4 [shape = 'f32[8,2]{1,0:T(8,128)}', space=vmem, size = 0x1000, scoped, tag = 'scratch operand']
  %s0 = inlined_call_operand.vmem [shape: bf16[8,16], index: 0, kind: input, shape index: {}]
  %s1 = inlined_call_operand.vmem [shape: bf16[16,8], index: 1, kind: input, shape index: {}]
  %s2 = inlined_call_operand.vmem [shape: bf16[16,16], index: 2, kind: input, shape index: {}]
  %s3 = inlined_call_operand.vmem [shape: f32[16,128], index: 3, kind: input, shape index: {}]
  %s4 = inlined_call_operand.vmem [shape: f32[1,2], index: 4, kind: input, shape index: {}]
  %s5 = inlined_call_operand.vmem [shape: bf16[128,8], index: 5, kind: input, shape index: {}]
  %s6 = inlined_call_operand.vmem [shape: bf16[2,8], index: 6, kind: input, shape index: {}]
  %s7 = inlined_call_operand.vmem [shape: f32[1,8], index: 7, kind: input, shape index: {}]
  %s8 = inlined_call_operand.vmem [shape: bf16[2,512], index: 8, kind: input, shape index: {}]
  %s9 = inlined_call_operand.hbm [shape: bf16[128,512], index: 9, kind: input, shape index: {}]
  %s10 = inlined_call_operand.hbm [shape: bf16[128,512], index: 10, kind: input, shape index: {}]
  %s11 = inlined_call_operand.vmem [shape: f32[1,512], index: 11, kind: input, shape index: {}]
  %s12 = inlined_call_operand.hbm [shape: f32[16,128], index: 12, kind: output, shape index: {}]
  %s13 = sld [smem:[#allocation0]]
  $region93: #{tpu_custom_call.1} parent=0
    _
  %s15 = ssub.s32 1, %s13
  %s16 = scalar_select 0, %s15, %s13
  $region1: #{tpu_custom_call.1} parent=0
    #allocation5 [shape = 'u8[131072]{0}', space=vmem, size = 0x20000, scoped, tag = 'input window, operand 9, single buffered']
    #allocation6 [shape = 's32[2]{0}', space=sflag, size = 0x8, scoped, tag = 'scoped memory for tpu_custom_call.1']
    #allocation7 [shape = 's32[2]{0}', space=sflag, size = 0x8, scoped, tag = 'scoped memory for tpu_custom_call.1']
    #allocation8 [shape = 'u8[131072]{0}', space=vmem, size = 0x20000, scoped, tag = 'input window, operand 10, single buffered']
    #allocation9 [shape = 's32[1]{0}', space=sflag, size = 0x4, scoped, tag = 'scoped memory for tpu_custom_call.1']
    #allocation10 [shape = 'u8[8192]{0}', space=vmem, size = 0x2000, scoped, tag = 'output window, operand 0, single buffered']
    %17 = vsyncpa [#allocation6], 0
    %18 = vsyncpa [#allocation9], 0
    %19 = vsyncpa [#allocation7], 0
    loop: start=0, step=1, limit=5
    $region2: #{tpu_custom_call.1} parent=1 // loop_pre_header
      _
    $region3: #{tpu_custom_call.1} parent=1 // loop_header
      %s21 = sphi 0, %s25
      %p22 = scmp.ge.s32.totalorder %s21, 5
      %s29 = sphi 0, %s29
      %s31 = sphi 0, %s29
      %s32 = sphi 0, %s31
      %s46 = sphi 0, %s32
      %s50 = sphi 0, %s50
      %s52 = sphi 0, %s50
      %s53 = sphi 0, %s52
      %s67 = sphi 0, %s53
      %s71 = sphi 0, %s71
      %s73 = sphi 0, %s71
      %s74 = sphi 0, %s73
      %s88 = sphi 0, %s74
      %s92 = sphi 0, %s92
      %s94 = sphi 0, %s92
      %s95 = sphi 0, %s94
      %s109 = sphi 0, %s95
      %s113 = sphi 0, %s113
      %s115 = sphi 0, %s113
      %s116 = sphi 0, %s115
      %s130 = sphi 0, %s116
      %s134 = sphi 0, %s134
      %s136 = sphi 0, %s134
      %s137 = sphi 0, %s136
      %s151 = sphi 0, %s137
      %s155 = sphi 0, %s155
      %s157 = sphi 0, %s155
      %s158 = sphi 0, %s157
      %s172 = sphi 0, %s158
      %s176 = sphi 0, %s176
      %s178 = sphi 0, %s176
      %s179 = sphi 0, %s178
      %s193 = sphi 0, %s179
      %s197 = sphi 0, %s197
      %s199 = sphi 0, %s197
      %s200 = sphi 0, %s199
      %s214 = sphi 0, %s200
      %s218 = sphi 0, %s218
      %s220 = sphi 0, %s218
      %s221 = sphi 0, %s220
      %s235 = sphi 0, %s221
      %s239 = sphi 0, %s239
      %s241 = sphi 0, %s239
      %s242 = sphi 0, %s241
      %s256 = sphi 0, %s242
      %s260 = sphi 0, %s260
      %s262 = sphi 0, %s260
      %s263 = sphi 0, %s262
      %s277 = sphi 0, %s263
      %s281 = sphi 0, %s281
      %s283 = sphi 0, %s281
      %s284 = sphi 0, %s283
      %s298 = sphi 0, %s284
    $region4: #{tpu_custom_call.1} parent=1 // loop_header_branch
      %24 = sbr.rel (%p22) target = $region8
    $region5: #{tpu_custom_call.1} parent=1 // loop_body
      %s26 = ssub.s32 %s21, 1
      %s27 = ssub.s32 %s21, 2
      %s28 = sadd.s32 %s21, 1
      %s30 = sadd.s32 %s29, 1
      %p33 = scmp.eq.s32.totalorder %s21, 2
      %p34 = scmp.ne.s32.totalorder %s29, %s31
      %p35 = scmp.eq.s32.totalorder %s21, 0
      %p36 = por %p34, %p35
      %p37 = scmp.ne.s32.totalorder %s29, %s31
      %p38 = scmp.eq.s32.totalorder %s26, 2
      %p39 = por %p37, %p38
      %p40 = scmp.ne.s32.totalorder %s31, %s32
      %p41 = scmp.eq.s32.totalorder %s26, 0
      %p42 = por %p40, %p41
      %p43 = scmp.ne.s32.totalorder %s31, %s32
      %p44 = scmp.eq.s32.totalorder %s27, 2
      %p45 = por %p43, %p44
      %p47 = scmp.ne.s32.totalorder %s32, %s46
      %p48 = scmp.eq.s32.totalorder %s27, 0
      %p49 = por %p47, %p48
      %s51 = sadd.s32 %s50, 1
      %p54 = scmp.eq.s32.totalorder %s21, 2
      %p55 = scmp.ne.s32.totalorder %s50, %s52
      %p56 = scmp.eq.s32.totalorder %s21, 0
      %p57 = por %p55, %p56
      %p58 = scmp.ne.s32.totalorder %s50, %s52
      %p59 = scmp.eq.s32.totalorder %s26, 2
      %p60 = por %p58, %p59
      %p61 = scmp.ne.s32.totalorder %s52, %s53
      %p62 = scmp.eq.s32.totalorder %s26, 0
      %p63 = por %p61, %p62
      %p64 = scmp.ne.s32.totalorder %s52, %s53
      %p65 = scmp.eq.s32.totalorder %s27, 2
      %p66 = por %p64, %p65
      %p68 = scmp.ne.s32.totalorder %s53, %s67
      %p69 = scmp.eq.s32.totalorder %s27, 0
      %p70 = por %p68, %p69
      %s72 = sadd.s32 %s71, 1
      %p75 = scmp.eq.s32.totalorder %s21, 2
      %p76 = scmp.ne.s32.totalorder %s71, %s73
      %p77 = scmp.eq.s32.totalorder %s21, 0
      %p78 = por %p76, %p77
      %p79 = scmp.ne.s32.totalorder %s71, %s73
      %p80 = scmp.eq.s32.totalorder %s26, 2
      %p81 = por %p79, %p80
      %p82 = scmp.ne.s32.totalorder %s73, %s74
      %p83 = scmp.eq.s32.totalorder %s26, 0
      %p84 = por %p82, %p83
      %p85 = scmp.ne.s32.totalorder %s73, %s74
      %p86 = scmp.eq.s32.totalorder %s27, 2
      %p87 = por %p85, %p86
      %p89 = scmp.ne.s32.totalorder %s74, %s88
      %p90 = scmp.eq.s32.totalorder %s27, 0
      %p91 = por %p89, %p90
      %s93 = sadd.s32 %s92, 1
      %p96 = scmp.eq.s32.totalorder %s21, 2
      %p97 = scmp.ne.s32.totalorder %s92, %s94
      %p98 = scmp.eq.s32.totalorder %s21, 0
      %p99 = por %p97, %p98
      %p100 = scmp.ne.s32.totalorder %s92, %s94
      %p101 = scmp.eq.s32.totalorder %s26, 2
      %p102 = por %p100, %p101
      %p103 = scmp.ne.s32.totalorder %s94, %s95
      %p104 = scmp.eq.s32.totalorder %s26, 0
      %p105 = por %p103, %p104
      %p106 = scmp.ne.s32.totalorder %s94, %s95
      %p107 = scmp.eq.s32.totalorder %s27, 2
      %p108 = por %p106, %p107
      %p110 = scmp.ne.s32.totalorder %s95, %s109
      %p111 = scmp.eq.s32.totalorder %s27, 0
      %p112 = por %p110, %p111
      %s114 = sadd.s32 %s113, 1
      %p117 = scmp.eq.s32.totalorder %s21, 2
      %p118 = scmp.ne.s32.totalorder %s113, %s115
      %p119 = scmp.eq.s32.totalorder %s21, 0
      %p120 = por %p118, %p119
      %p121 = scmp.ne.s32.totalorder %s113, %s115
      %p122 = scmp.eq.s32.totalorder %s26, 2
      %p123 = por %p121, %p122
      %p124 = scmp.ne.s32.totalorder %s115, %s116
      %p125 = scmp.eq.s32.totalorder %s26, 0
      %p126 = por %p124, %p125
      %p127 = scmp.ne.s32.totalorder %s115, %s116
      %p128 = scmp.eq.s32.totalorder %s27, 2
      %p129 = por %p127, %p128
      %p131 = scmp.ne.s32.totalorder %s116, %s130
      %p132 = scmp.eq.s32.totalorder %s27, 0
      %p133 = por %p131, %p132
      %s135 = sadd.s32 %s134, 1
      %p138 = scmp.eq.s32.totalorder %s21, 2
      %p139 = scmp.ne.s32.totalorder %s134, %s136
      %p140 = scmp.eq.s32.totalorder %s21, 0
      %p141 = por %p139, %p140
      %p142 = scmp.ne.s32.totalorder %s134, %s136
      %p143 = scmp.eq.s32.totalorder %s26, 2
      %p144 = por %p142, %p143
      %p145 = scmp.ne.s32.totalorder %s136, %s137
      %p146 = scmp.eq.s32.totalorder %s26, 0
      %p147 = por %p145, %p146
      %p148 = scmp.ne.s32.totalorder %s136, %s137
      %p149 = scmp.eq.s32.totalorder %s27, 2
      %p150 = por %p148, %p149
      %p152 = scmp.ne.s32.totalorder %s137, %s151
      %p153 = scmp.eq.s32.totalorder %s27, 0
      %p154 = por %p152, %p153
      %s156 = sadd.s32 %s155, 1
      %p159 = scmp.eq.s32.totalorder %s21, 2
      %p160 = scmp.ne.s32.totalorder %s155, %s157
      %p161 = scmp.eq.s32.totalorder %s21, 0
      %p162 = por %p160, %p161
      %p163 = scmp.ne.s32.totalorder %s155, %s157
      %p164 = scmp.eq.s32.totalorder %s26, 2
      %p165 = por %p163, %p164
      %p166 = scmp.ne.s32.totalorder %s157, %s158
      %p167 = scmp.eq.s32.totalorder %s26, 0
      %p168 = por %p166, %p167
      %p169 = scmp.ne.s32.totalorder %s157, %s158
      %p170 = scmp.eq.s32.totalorder %s27, 2
      %p171 = por %p169, %p170
      %p173 = scmp.ne.s32.totalorder %s158, %s172
      %p174 = scmp.eq.s32.totalorder %s27, 0
      %p175 = por %p173, %p174
      %s177 = sadd.s32 %s176, 1
      %p180 = scmp.eq.s32.totalorder %s21, 2
      %p181 = scmp.ne.s32.totalorder %s176, %s178
      %p182 = scmp.eq.s32.totalorder %s21, 0
      %p183 = por %p181, %p182
      %p184 = scmp.ne.s32.totalorder %s176, %s178
      %p185 = scmp.eq.s32.totalorder %s26, 2
      %p186 = por %p184, %p185
      %p187 = scmp.ne.s32.totalorder %s178, %s179
      %p188 = scmp.eq.s32.totalorder %s26, 0
      %p189 = por %p187, %p188
      %p190 = scmp.ne.s32.totalorder %s178, %s179
      %p191 = scmp.eq.s32.totalorder %s27, 2
      %p192 = por %p190, %p191
      %p194 = scmp.ne.s32.totalorder %s179, %s193
      %p195 = scmp.eq.s32.totalorder %s27, 0
      %p196 = por %p194, %p195
      %s198 = sadd.s32 %s197, 1
      %p201 = scmp.eq.s32.totalorder %s21, 2
      %p202 = scmp.ne.s32.totalorder %s197, %s199
      %p203 = scmp.eq.s32.totalorder %s21, 0
      %p204 = por %p202, %p203
      %p205 = scmp.ne.s32.totalorder %s197, %s199
      %p206 = scmp.eq.s32.totalorder %s26, 2
      %p207 = por %p205, %p206
      %p208 = scmp.ne.s32.totalorder %s199, %s200
      %p209 = scmp.eq.s32.totalorder %s26, 0
      %p210 = por %p208, %p209
      %p211 = scmp.ne.s32.totalorder %s199, %s200
      %p212 = scmp.eq.s32.totalorder %s27, 2
      %p213 = por %p211, %p212
      %p215 = scmp.ne.s32.totalorder %s200, %s214
      %p216 = scmp.eq.s32.totalorder %s27, 0
      %p217 = por %p215, %p216
      %s219 = sadd.s32 %s218, 1
      %p222 = scmp.eq.s32.totalorder %s21, 2
      %p223 = scmp.ne.s32.totalorder %s218, %s220
      %p224 = scmp.eq.s32.totalorder %s21, 0
      %p225 = por %p223, %p224
      %p226 = scmp.ne.s32.totalorder %s218, %s220
      %p227 = scmp.eq.s32.totalorder %s26, 2
      %p228 = por %p226, %p227
      %p229 = scmp.ne.s32.totalorder %s220, %s221
      %p230 = scmp.eq.s32.totalorder %s26, 0
      %p231 = por %p229, %p230
      %p232 = scmp.ne.s32.totalorder %s220, %s221
      %p233 = scmp.eq.s32.totalorder %s27, 2
      %p234 = por %p232, %p233
      %p236 = scmp.ne.s32.totalorder %s221, %s235
      %p237 = scmp.eq.s32.totalorder %s27, 0
      %p238 = por %p236, %p237
      %s240 = sadd.s32 %s239, 1
      %p243 = scmp.eq.s32.totalorder %s21, 2
      %p244 = scmp.ne.s32.totalorder %s239, %s241
      %p245 = scmp.eq.s32.totalorder %s21, 0
      %p246 = por %p244, %p245
      %p247 = scmp.ne.s32.totalorder %s239, %s241
      %p248 = scmp.eq.s32.totalorder %s26, 2
      %p249 = por %p247, %p248
      %p250 = scmp.ne.s32.totalorder %s241, %s242
      %p251 = scmp.eq.s32.totalorder %s26, 0
      %p252 = por %p250, %p251
      %p253 = scmp.ne.s32.totalorder %s241, %s242
      %p254 = scmp.eq.s32.totalorder %s27, 2
      %p255 = por %p253, %p254
      %p257 = scmp.ne.s32.totalorder %s242, %s256
      %p258 = scmp.eq.s32.totalorder %s27, 0
      %p259 = por %p257, %p258
      %s261 = sadd.s32 %s260, 1
      %p264 = scmp.eq.s32.totalorder %s21, 2
      %p265 = scmp.ne.s32.totalorder %s260, %s262
      %p266 = scmp.eq.s32.totalorder %s21, 0
      %p267 = por %p265, %p266
      %p268 = scmp.ne.s32.totalorder %s260, %s262
      %p269 = scmp.eq.s32.totalorder %s26, 2
      %p270 = por %p268, %p269
      %p271 = scmp.ne.s32.totalorder %s262, %s263
      %p272 = scmp.eq.s32.totalorder %s26, 0
      %p273 = por %p271, %p272
      %p274 = scmp.ne.s32.totalorder %s262, %s263
      %p275 = scmp.eq.s32.totalorder %s27, 2
      %p276 = por %p274, %p275
      %p278 = scmp.ne.s32.totalorder %s263, %s277
      %p279 = scmp.eq.s32.totalorder %s27, 0
      %p280 = por %p278, %p279
      %s282 = sadd.s32 %s281, 1
      %p285 = scmp.eq.s32.totalorder %s21, 2
      %p286 = scmp.ne.s32.totalorder %s281, %s283
      %p287 = scmp.eq.s32.totalorder %s21, 0
      %p288 = por %p286, %p287
      %p289 = scmp.ne.s32.totalorder %s281, %s283
      %p290 = scmp.eq.s32.totalorder %s26, 2
      %p291 = por %p289, %p290
      %p292 = scmp.ne.s32.totalorder %s283, %s284
      %p293 = scmp.eq.s32.totalorder %s26, 0
      %p294 = por %p292, %p293
      %p295 = scmp.ne.s32.totalorder %s283, %s284
      %p296 = scmp.eq.s32.totalorder %s27, 2
      %p297 = por %p295, %p296
      %p299 = scmp.ne.s32.totalorder %s284, %s298
      %p300 = scmp.eq.s32.totalorder %s27, 0
      %p301 = por %p299, %p300
      %p302 = scmp.le.s32.totalorder 1, %s21
      %p303 = scmp.lt.s32.totalorder %s21, 4
      %p304 = pnand %p302, %p303
      %p305 = pneg %p304
      // Predicated region
      $region9: #{tpu_custom_call.1} parent=5 // pred_check
        _
      $region10: #{tpu_custom_call.1} parent=5 // pred_check_branch
        %307 = sbr.rel (%p304) target = $region12
      $region11: #{tpu_custom_call.1} parent=5 // pred_region
        %s308 = ssub.s32 %s21, 1
        // Predicated region
        $region13: #{tpu_custom_call.1} parent=11 // pred_check
          %p309 = pneg %p42
        $region14: #{tpu_custom_call.1} parent=11 // pred_check_branch
          %311 = sbr.rel (%p309) target = $region16
        $region15: #{tpu_custom_call.1} parent=11 // pred_region
          _
        $region16: #{tpu_custom_call.1} parent=11 // pred_fallthru
          _
        // Predicated region
        $region17: #{tpu_custom_call.1} parent=11 // pred_check
          %p312 = pneg %p63
        $region18: #{tpu_custom_call.1} parent=11 // pred_check_branch
          %314 = sbr.rel (%p312) target = $region20
        $region19: #{tpu_custom_call.1} parent=11 // pred_region
          _
        $region20: #{tpu_custom_call.1} parent=11 // pred_fallthru
          _
        // Predicated region
        $region21: #{tpu_custom_call.1} parent=11 // pred_check
          %p315 = pneg %p84
        $region22: #{tpu_custom_call.1} parent=11 // pred_check_branch
          %317 = sbr.rel (%p315) target = $region24
        $region23: #{tpu_custom_call.1} parent=11 // pred_region
          _
        $region24: #{tpu_custom_call.1} parent=11 // pred_fallthru
          _
        // Predicated region
        $region25: #{tpu_custom_call.1} parent=11 // pred_check
          %p318 = pneg %p105
        $region26: #{tpu_custom_call.1} parent=11 // pred_check_branch
          %320 = sbr.rel (%p318) target = $region28
        $region27: #{tpu_custom_call.1} parent=11 // pred_region
          _
        $region28: #{tpu_custom_call.1} parent=11 // pred_fallthru
          _
        // Predicated region
        $region29: #{tpu_custom_call.1} parent=11 // pred_check
          %p321 = pneg %p126
        $region30: #{tpu_custom_call.1} parent=11 // pred_check_branch
          %323 = sbr.rel (%p321) target = $region32
        $region31: #{tpu_custom_call.1} parent=11 // pred_region
          _
        $region32: #{tpu_custom_call.1} parent=11 // pred_fallthru
          _
        // Predicated region
        $region33: #{tpu_custom_call.1} parent=11 // pred_check
          %p324 = pneg %p147
        $region34: #{tpu_custom_call.1} parent=11 // pred_check_branch
          %326 = sbr.rel (%p324) target = $region36
        $region35: #{tpu_custom_call.1} parent=11 // pred_region
          _
        $region36: #{tpu_custom_call.1} parent=11 // pred_fallthru
          _
        // Predicated region
        $region37: #{tpu_custom_call.1} parent=11 // pred_check
          %p327 = pneg %p168
        $region38: #{tpu_custom_call.1} parent=11 // pred_check_branch
          %329 = sbr.rel (%p327) target = $region40
        $region39: #{tpu_custom_call.1} parent=11 // pred_region
          _
        $region40: #{tpu_custom_call.1} parent=11 // pred_fallthru
          _
        // Predicated region
        $region41: #{tpu_custom_call.1} parent=11 // pred_check
          %p330 = pneg %p189
        $region42: #{tpu_custom_call.1} parent=11 // pred_check_branch
          %332 = sbr.rel (%p330) target = $region44
        $region43: #{tpu_custom_call.1} parent=11 // pred_region
          _
        $region44: #{tpu_custom_call.1} parent=11 // pred_fallthru
          _
        // Predicated region
        $region45: #{tpu_custom_call.1} parent=11 // pred_check
          %p333 = pneg %p210
        $region46: #{tpu_custom_call.1} parent=11 // pred_check_branch
          %335 = sbr.rel (%p333) target = $region48
        $region47: #{tpu_custom_call.1} parent=11 // pred_region
          _
        $region48: #{tpu_custom_call.1} parent=11 // pred_fallthru
          _
        // Predicated region
        $region49: #{tpu_custom_call.1} parent=11 // pred_check
          %p336 = pneg %p231
        $region50: #{tpu_custom_call.1} parent=11 // pred_check_branch
          %338 = sbr.rel (%p336) target = $region52
        $region51: #{tpu_custom_call.1} parent=11 // pred_region
          %s340 = ssub.s32 4096, 4096
          %341 = vsyncadd [#allocation6], %s340
          %s342 = sshll.u32 [#allocation5], 4
          %s343 = int_to_ptr.vmem [resolvable:$true] %s342
          %348 = dma.hbm_to_vmem [thread:$0]  %s9, 4096, %s343, [#allocation6], 256, 256, 16
        $region52: #{tpu_custom_call.1} parent=11 // pred_fallthru
          _
        // Predicated region
        $region53: #{tpu_custom_call.1} parent=11 // pred_check
          %p349 = pneg %p252
        $region54: #{tpu_custom_call.1} parent=11 // pred_check_branch
          %351 = sbr.rel (%p349) target = $region56
        $region55: #{tpu_custom_call.1} parent=11 // pred_region
          %s353 = ssub.s32 4096, 4096
          %354 = vsyncadd [#allocation9], %s353
          %s355 = sshll.u32 [#allocation8], 4
          %s356 = int_to_ptr.vmem [resolvable:$true] %s355
          %361 = dma.hbm_to_vmem [thread:$0]  %s10, 4096, %s356, [#allocation9], 256, 256, 16
        $region56: #{tpu_custom_call.1} parent=11 // pred_fallthru
          _
        // Predicated region
        $region57: #{tpu_custom_call.1} parent=11 // pred_check
          %p362 = pneg %p273
        $region58: #{tpu_custom_call.1} parent=11 // pred_check_branch
          %364 = sbr.rel (%p362) target = $region60
        $region59: #{tpu_custom_call.1} parent=11 // pred_region
          _
        $region60: #{tpu_custom_call.1} parent=11 // pred_fallthru
          _
      $region12: #{tpu_custom_call.1} parent=5 // pred_fallthru
        _
      %p365 = scmp.lt.s32.totalorder %s21, 3
      // Predicated region
      $region61: #{tpu_custom_call.1} parent=5 // pred_check
        %p366 = pneg %p365
      $region62: #{tpu_custom_call.1} parent=5 // pred_check_branch
        %368 = sbr.rel (%p366) target = $region64
      $region63: #{tpu_custom_call.1} parent=5 // pred_region
        _
      $region64: #{tpu_custom_call.1} parent=5 // pred_fallthru
        _
      %p369 = scmp.le.s32.totalorder 1, %s21
      %p370 = scmp.lt.s32.totalorder %s21, 4
      %p371 = pnand %p369, %p370
      %p372 = pneg %p371
      // Predicated region
      $region65: #{tpu_custom_call.1} parent=5 // pred_check
        _
      $region66: #{tpu_custom_call.1} parent=5 // pred_check_branch
        %374 = sbr.rel (%p371) target = $region68
      $region67: #{tpu_custom_call.1} parent=5 // pred_region
        %s375 = ssub.s32 %s21, 1
        // Predicated region
        $region69: #{tpu_custom_call.1} parent=67 // pred_check
          %p376 = pneg %p231
        $region70: #{tpu_custom_call.1} parent=67 // pred_check_branch
          %378 = sbr.rel (%p376) target = $region72
        $region71: #{tpu_custom_call.1} parent=67 // pred_region
          %379 = dma.done [#allocation6], 4096
        $region72: #{tpu_custom_call.1} parent=67 // pred_fallthru
          _
        // Predicated region
        $region73: #{tpu_custom_call.1} parent=67 // pred_check
          %p380 = pneg %p252
        $region74: #{tpu_custom_call.1} parent=67 // pred_check_branch
          %382 = sbr.rel (%p380) target = $region76
        $region75: #{tpu_custom_call.1} parent=67 // pred_region
          %383 = dma.done [#allocation9], 4096
        $region76: #{tpu_custom_call.1} parent=67 // pred_fallthru
          _
        %p384 = pneg %p42
        %p385 = pneg %p39
        %p386 = pneg %p63
        %p387 = pneg %p60
        %p388 = pneg %p84
        %p389 = pneg %p81
        %p390 = pneg %p105
        %p391 = pneg %p102
        %p392 = pneg %p126
        %p393 = pneg %p123
        %p394 = pneg %p147
        %p395 = pneg %p144
        %p396 = pneg %p168
        %p397 = pneg %p165
        %p398 = pneg %p189
        %p399 = pneg %p186
        %p400 = pneg %p210
        %p401 = pneg %p207
        %p402 = pneg %p231
        %p403 = pneg %p228
        %p404 = pneg %p252
        %p405 = pneg %p249
        %p406 = pneg %p273
        %p407 = pneg %p270
        %p408 = pneg %p294
        %p409 = pneg %p291
        %p411 = scmp.eq.s32.totalorder %s26, 0
        // Predicated region
        $region77: #{tpu_custom_call.1} parent=67 // pred_check
          %p412 = pneg %p411
        $region78: #{tpu_custom_call.1} parent=67 // pred_check_branch
          %414 = sbr.rel (%p412) target = $region80
        $region79: #{tpu_custom_call.1} parent=67 // pred_region
          %v415 = vld [vmem:[%s3] sm:$0xff]
          %v416 = vld [vmem:[%s3 + $0x8] sm:$0xff]
          %417 = vst [vmem:[#allocation10] sm:$0xff] %v415
          %418 = vst [vmem:[#allocation10 + $0x8] sm:$0xff] %v416
          %419 = vst [vmem:[#allocation2] sm:$0xff] 0.0
          %420 = vst [vmem:[#allocation2 + $0x8] sm:$0xff] 0.0
          %v421 = vld [vmem:[%s4] sm:$0x1]
          %v423 = vlaneseq
          %v424 = vshrl.u32 %v423, 7
          %v425 = vsub.s32 0, %v424
          %v426 = vrot.slane %v421, %v425
          %vm428 = vcmask 15360
          %429 = vst.msk [vmem:[#allocation3] sm:$0xff] %vm428, %v426
          %430 = vst.msk [vmem:[#allocation4] sm:$0xff] %vm428, 0.0
        $region80: #{tpu_custom_call.1} parent=67 // pred_fallthru
          _
        %v431 = vld [vmem:[#allocation10] sm:$0xff]
        %v432 = vld [vmem:[#allocation10 + $0x8] sm:$0xff]
        %v433 = vpack.c.bf16 %v432, %v431
        %v434 = vld [vmem:[%s5] sm:$0xf]
        %v435 = vld [vmem:[%s5 + $0x4] sm:$0xf]
        %v436 = vld [vmem:[%s5 + $0x8] sm:$0xf]
        %v437 = vld [vmem:[%s5 + $0xc] sm:$0xf]
        %v438 = vld [vmem:[%s5 + $0x10] sm:$0xf]
        %v439 = vld [vmem:[%s5 + $0x14] sm:$0xf]
        %v440 = vld [vmem:[%s5 + $0x18] sm:$0xf]
        %v441 = vld [vmem:[%s5 + $0x1c] sm:$0xf]
        %v442 = vld [vmem:[%s5 + $0x20] sm:$0xf]
        %v443 = vld [vmem:[%s5 + $0x24] sm:$0xf]
        %v444 = vld [vmem:[%s5 + $0x28] sm:$0xf]
        %v445 = vld [vmem:[%s5 + $0x2c] sm:$0xf]
        %v446 = vld [vmem:[%s5 + $0x30] sm:$0xf]
        %v447 = vld [vmem:[%s5 + $0x34] sm:$0xf]
        %v448 = vld [vmem:[%s5 + $0x38] sm:$0xf]
        %v449 = vld [vmem:[%s5 + $0x3c] sm:$0xf]
        %v466 = vunpack.c.l.b16 %v434
        %v467 = vunpack.c.l.b16 %v435
        %v468 = vunpack.c.l.b16 %v436
        %v469 = vunpack.c.l.b16 %v437
        %v470 = vunpack.c.l.b16 %v438
        %v471 = vunpack.c.l.b16 %v439
        %v472 = vunpack.c.l.b16 %v440
        %v473 = vunpack.c.l.b16 %v441
        %v474 = vunpack.c.l.b16 %v442
        %v475 = vunpack.c.l.b16 %v443
        %v476 = vunpack.c.l.b16 %v444
        %v477 = vunpack.c.l.b16 %v445
        %v478 = vunpack.c.l.b16 %v446
        %v479 = vunpack.c.l.b16 %v447
        %v480 = vunpack.c.l.b16 %v448
        %v481 = vunpack.c.l.b16 %v449
        %v482 = vpack.c.b16 %v467, %v466
        %v483 = vpack.c.b16 %v469, %v468
        %v484 = vpack.c.b16 %v471, %v470
        %v485 = vpack.c.b16 %v473, %v472
        %v486 = vpack.c.b16 %v475, %v474
        %v487 = vpack.c.b16 %v477, %v476
        %v488 = vpack.c.b16 %v479, %v478
        %v489 = vpack.c.b16 %v481, %v480
        %498 = vmatprep.subr.bf16.mxu0 0
        %499 = vmatpush1.bf16.msra.mxu0 %v482
        %500 = vmatprep.subr.bf16.mxu0 0
        %501 = vmatpush1.bf16.msra.mxu0 %v483
        %502 = vmatprep.subr.bf16.mxu0 0
        %503 = vmatpush1.bf16.msra.mxu0 %v484
        %504 = vmatprep.subr.bf16.mxu0 0
        %505 = vmatpush1.bf16.msra.mxu0 %v485
        %506 = vmatprep.subr.bf16.mxu0 0
        %507 = vmatpush1.bf16.msra.mxu0 %v486
        %508 = vmatprep.subr.bf16.mxu0 0
        %509 = vmatpush1.bf16.msra.mxu0 %v487
        %510 = vmatprep.subr.bf16.mxu0 0
        %511 = vmatpush1.bf16.msra.mxu0 %v488
        %512 = vmatprep.subr.bf16.mxu0 0
        %513 = vmatpush1.bf16.msra.mxu0 %v489
        %514 = vmatprep.subr.bf16.mxu0 0
        %515 = vmatpush1.bf16.msra.mxu0 0
        %516 = vmatprep.subr.bf16.mxu0 0
        %517 = vmatpush1.bf16.msra.mxu0 0
        %518 = vmatprep.subr.bf16.mxu0 0
        %519 = vmatpush1.bf16.msra.mxu0 0
        %520 = vmatprep.subr.bf16.mxu0 0
        %521 = vmatpush1.bf16.msra.mxu0 0
        %522 = vmatprep.subr.bf16.mxu0 0
        %523 = vmatpush1.bf16.msra.mxu0 0
        %524 = vmatprep.subr.bf16.mxu0 0
        %525 = vmatpush1.bf16.msra.mxu0 0
        %526 = vmatprep.subr.bf16.mxu0 0
        %527 = vmatpush1.bf16.msra.mxu0 0
        %528 = vmatprep.subr.bf16.mxu0 0
        %529 = vmatpush1.bf16.msra.mxu0 0
        %530 = vmatprep.mubr.bf16.mxu0 0
        %531 = vmatmul.mubr.bf16.gmra.mrb[0].mxu0 %v433
        %v532 = vpop.f32.mrb[0].mxu0
        %v533 = vadd.f32 0.0, %v532
        %v534 = vpop.f32.mrb[0].mxu0
        %v535 = vpop.f32.mrb[0].mxu0
        %v536 = vadd.f32 0.0, %v535
        %v537 = vpop.f32.mrb[0].mxu0
        %538 = vdwg.mxu0
        %v539 = vld [vmem:[%s0] sm:$0xf]
        %v540 = vpack.c.bf16 %v536, %v533
        %v541 = vld [vmem:[#allocation3] sm:$0xff]
        %v542 = vpack.c.bf16 %v541, %v541
        %v543 = vld [vmem:[%s6] sm:$0x1]
        %vm544 = vcmask 15360
        %v546 = vsel %vm544, %v542, 0
        %vm548 = vcmask 1040384
        %v550 = vsel %vm548, %v543, 0
        %552 = vmatprep.subr.bf16.mxu0 0
        %553 = vmatpush1.bf16.msra.mxu0 %v550
        %554 = vmatprep.subr.bf16.mxu0 0
        %555 = vmatpush1.bf16.msra.mxu0 0
        %556 = vmatprep.subr.bf16.mxu0 0
        %557 = vmatpush1.bf16.msra.mxu0 0
        %558 = vmatprep.subr.bf16.mxu0 0
        %559 = vmatpush1.bf16.msra.mxu0 0
        %560 = vmatprep.subr.bf16.mxu0 0
        %561 = vmatpush1.bf16.msra.mxu0 0
        %562 = vmatprep.subr.bf16.mxu0 0
        %563 = vmatpush1.bf16.msra.mxu0 0
        %564 = vmatprep.subr.bf16.mxu0 0
        %565 = vmatpush1.bf16.msra.mxu0 0
        %566 = vmatprep.subr.bf16.mxu0 0
        %567 = vmatpush1.bf16.msra.mxu0 0
        %568 = vmatprep.subr.bf16.mxu0 0
        %569 = vmatpush1.bf16.msra.mxu0 0
        %570 = vmatprep.subr.bf16.mxu0 0
        %571 = vmatpush1.bf16.msra.mxu0 0
        %572 = vmatprep.subr.bf16.mxu0 0
        %573 = vmatpush1.bf16.msra.mxu0 0
        %574 = vmatprep.subr.bf16.mxu0 0
        %575 = vmatpush1.bf16.msra.mxu0 0
        %576 = vmatprep.subr.bf16.mxu0 0
        %577 = vmatpush1.bf16.msra.mxu0 0
        %578 = vmatprep.subr.bf16.mxu0 0
        %579 = vmatpush1.bf16.msra.mxu0 0
        %580 = vmatprep.subr.bf16.mxu0 0
        %581 = vmatpush1.bf16.msra.mxu0 0
        %582 = vmatprep.subr.bf16.mxu0 0
        %583 = vmatpush1.bf16.msra.mxu0 0
        %584 = vmatprep.mubr.bf16.mxu0 0
        %585 = vmatmul.mubr.bf16.gmra.mrb[0].mxu0 %v546
        %v586 = vpop.f32.mrb[0].mxu0
        %v587 = vadd.f32 0.0, %v586
        %v588 = vpop.f32.mrb[0].mxu0
        %v589 = vpop.f32.mrb[0].mxu0
        %v590 = vpop.f32.mrb[0].mxu0
        %591 = vdwg.mxu0
        %vm592 = vcmask 130048
        %v594 = vsel %vm592, %v539, 0
        %596 = vmatprep.subr.bf16.mxu0 0
        %597 = vmatpush1.bf16.msra.mxu0 %v540
        %598 = vmatprep.subr.bf16.mxu0 0
        %599 = vmatpush1.bf16.msra.mxu0 0
        %600 = vmatprep.subr.bf16.mxu0 0
        %601 = vmatpush1.bf16.msra.mxu0 0
        %602 = vmatprep.subr.bf16.mxu0 0
        %603 = vmatpush1.bf16.msra.mxu0 0
        %604 = vmatprep.subr.bf16.mxu0 0
        %605 = vmatpush1.bf16.msra.mxu0 0
        %606 = vmatprep.subr.bf16.mxu0 0
        %607 = vmatpush1.bf16.msra.mxu0 0
        %608 = vmatprep.subr.bf16.mxu0 0
        %609 = vmatpush1.bf16.msra.mxu0 0
        %610 = vmatprep.subr.bf16.mxu0 0
        %611 = vmatpush1.bf16.msra.mxu0 0
        %612 = vmatprep.subr.bf16.mxu0 0
        %613 = vmatpush1.bf16.msra.mxu0 0
        %614 = vmatprep.subr.bf16.mxu0 0
        %615 = vmatpush1.bf16.msra.mxu0 0
        %616 = vmatprep.subr.bf16.mxu0 0
        %617 = vmatpush1.bf16.msra.mxu0 0
        %618 = vmatprep.subr.bf16.mxu0 0
        %619 = vmatpush1.bf16.msra.mxu0 0
        %620 = vmatprep.subr.bf16.mxu0 0
        %621 = vmatpush1.bf16.msra.mxu0 0
        %622 = vmatprep.subr.bf16.mxu0 0
        %623 = vmatpush1.bf16.msra.mxu0 0
        %624 = vmatprep.subr.bf16.mxu0 0
        %625 = vmatpush1.bf16.msra.mxu0 0
        %626 = vmatprep.subr.bf16.mxu0 0
        %627 = vmatpush1.bf16.msra.mxu0 0
        %628 = vmatprep.mubr.bf16.mxu0 0
        %629 = vmatmul.mubr.bf16.gmra.mrb[0].mxu0 %v594
        %v630 = vpop.f32.mrb[0].mxu0
        %v631 = vadd.f32 %v587, %v630
        %v632 = vpop.f32.mrb[0].mxu0
        %v633 = vpop.f32.mrb[0].mxu0
        %v634 = vpop.f32.mrb[0].mxu0
        %635 = vdwg.mxu0
        %v636 = vld [vmem:[%s7] sm:$0x1]
        %v638 = vlaneseq
        %v639 = vshrl.u32 %v638, 7
        %v640 = vsub.s32 0, %v639
        %v641 = vrot.slane %v636, %v640
        %v643 = vadd.f32 %v631, %v641
        %v644 = vld [vmem:[#allocation4] sm:$0xff]
        %v645 = vxor.u32 %v643, 2147483648
        %v646 = vmul.f32 %v645, 1.442695
        %v647 = vpow.pop %v646
        %v648 = vadd.f32 %v647, 1.0
        %v649 = vrcp.pop %v648
        %v650 = vmul.f32 1.0, %v649
        %v651 = vtanh.pop %v643
        %653 = vrot.lane.b32.xlu0 %v644, 2
        %v654 = vpop.permute.xlu0 %653
        %v656 = vmul.f32 %v650, %v654
        %658 = vrot.lane.b32.xlu0 %v651, 124
        %v659 = vpop.permute.xlu0 %658
        %v661 = vmul.f32 %v650, %v659
        %663 = vrot.lane.b32.xlu0 %v661, 2
        %v664 = vpop.permute.xlu0 %663
        %v666 = vadd.f32 %v656, %v664
        %v667 = vtanh.pop %v666
        %669 = vrot.lane.b32.xlu0 %v667, 4
        %v670 = vpop.permute.xlu0 %669
        %v672 = vmul.f32 %v650, %v670
        %674 = vrot.lane.b32.xlu0 %v672, 122
        %v675 = vpop.permute.xlu0 %674
        %677 = vst.msk [vmem:[#allocation3] sm:$0xff] %vm544, %v675
        %679 = vrot.lane.b32.xlu0 %v666, 126
        %v680 = vpop.permute.xlu0 %679
        %682 = vst.msk [vmem:[#allocation4] sm:$0xff] %vm544, %v680
        %v683 = vld [vmem:[%s2] sm:$0xf]
        %v684 = vld [vmem:[%s2 + $0x4] sm:$0xf]
        %v687 = vunpack.c.l.b16 %v683
        %v688 = vunpack.c.l.b16 %v684
        %v689 = vpack.c.b16 %v688, %v687
        %v691 = vsel %vm592, %v689, 0
        %693 = vmatprep.subr.bf16.mxu0 0
        %694 = vmatpush1.bf16.msra.mxu0 %v433
        %695 = vmatprep.subr.bf16.mxu0 0
        %696 = vmatpush1.bf16.msra.mxu0 0
        %697 = vmatprep.subr.bf16.mxu0 0
        %698 = vmatpush1.bf16.msra.mxu0 0
        %699 = vmatprep.subr.bf16.mxu0 0
        %700 = vmatpush1.bf16.msra.mxu0 0
        %701 = vmatprep.subr.bf16.mxu0 0
        %702 = vmatpush1.bf16.msra.mxu0 0
        %703 = vmatprep.subr.bf16.mxu0 0
        %704 = vmatpush1.bf16.msra.mxu0 0
        %705 = vmatprep.subr.bf16.mxu0 0
        %706 = vmatpush1.bf16.msra.mxu0 0
        %707 = vmatprep.subr.bf16.mxu0 0
        %708 = vmatpush1.bf16.msra.mxu0 0
        %709 = vmatprep.subr.bf16.mxu0 0
        %710 = vmatpush1.bf16.msra.mxu0 0
        %711 = vmatprep.subr.bf16.mxu0 0
        %712 = vmatpush1.bf16.msra.mxu0 0
        %713 = vmatprep.subr.bf16.mxu0 0
        %714 = vmatpush1.bf16.msra.mxu0 0
        %715 = vmatprep.subr.bf16.mxu0 0
        %716 = vmatpush1.bf16.msra.mxu0 0
        %717 = vmatprep.subr.bf16.mxu0 0
        %718 = vmatpush1.bf16.msra.mxu0 0
        %719 = vmatprep.subr.bf16.mxu0 0
        %720 = vmatpush1.bf16.msra.mxu0 0
        %721 = vmatprep.subr.bf16.mxu0 0
        %722 = vmatpush1.bf16.msra.mxu0 0
        %723 = vmatprep.subr.bf16.mxu0 0
        %724 = vmatpush1.bf16.msra.mxu0 0
        %725 = vmatprep.mubr.bf16.mxu0 0
        %726 = vmatmul.mubr.bf16.gmra.mrb[0].mxu0 %v691
        %v727 = vpop.f32.mrb[0].mxu0
        %v728 = vadd.f32 0.0, %v727
        %v729 = vpop.f32.mrb[0].mxu0
        %v730 = vpop.f32.mrb[0].mxu0
        %v731 = vadd.f32 0.0, %v730
        %v732 = vpop.f32.mrb[0].mxu0
        %733 = vdwg.mxu0
        %v734 = vpack.c.bf16 %v731, %v728
        %v735 = vld [vmem:[%s1] sm:$0xf]
        %v736 = vld [vmem:[%s1 + $0x4] sm:$0xf]
        %v737 = vpack.c.bf16 %v672, %v672
        %v740 = vunpack.c.l.b16 %v735
        %v741 = vunpack.c.l.b16 %v736
        %v742 = vpack.c.b16 %v741, %v740
        %744 = vrot.lane.b32.xlu0 %v737, 122
        %v745 = vpop.permute.xlu0 %744
        %vm746 = vcmask 64512
        %v748 = vsel %vm746, %v742, 0
        %vm750 = vcmask 1043456
        %v752 = vsel %vm750, %v745, 0
        %754 = vmatprep.subr.bf16.mxu0 0
        %755 = vmatpush1.bf16.msra.mxu0 %v752
        %756 = vmatprep.subr.bf16.mxu0 0
        %757 = vmatpush1.bf16.msra.mxu0 0
        %758 = vmatprep.subr.bf16.mxu0 0
        %759 = vmatpush1.bf16.msra.mxu0 0
        %760 = vmatprep.subr.bf16.mxu0 0
        %761 = vmatpush1.bf16.msra.mxu0 0
        %762 = vmatprep.subr.bf16.mxu0 0
        %763 = vmatpush1.bf16.msra.mxu0 0
        %764 = vmatprep.subr.bf16.mxu0 0
        %765 = vmatpush1.bf16.msra.mxu0 0
        %766 = vmatprep.subr.bf16.mxu0 0
        %767 = vmatpush1.bf16.msra.mxu0 0
        %768 = vmatprep.subr.bf16.mxu0 0
        %769 = vmatpush1.bf16.msra.mxu0 0
        %770 = vmatprep.subr.bf16.mxu0 0
        %771 = vmatpush1.bf16.msra.mxu0 0
        %772 = vmatprep.subr.bf16.mxu0 0
        %773 = vmatpush1.bf16.msra.mxu0 0
        %774 = vmatprep.subr.bf16.mxu0 0
        %775 = vmatpush1.bf16.msra.mxu0 0
        %776 = vmatprep.subr.bf16.mxu0 0
        %777 = vmatpush1.bf16.msra.mxu0 0
        %778 = vmatprep.subr.bf16.mxu0 0
        %779 = vmatpush1.bf16.msra.mxu0 0
        %780 = vmatprep.subr.bf16.mxu0 0
        %781 = vmatpush1.bf16.msra.mxu0 0
        %782 = vmatprep.subr.bf16.mxu0 0
        %783 = vmatpush1.bf16.msra.mxu0 0
        %784 = vmatprep.subr.bf16.mxu0 0
        %785 = vmatpush1.bf16.msra.mxu0 0
        %786 = vmatprep.mubr.bf16.mxu0 0
        %787 = vmatmul.mubr.bf16.gmra.mrb[0].mxu0 %v748
        %v788 = vpop.f32.mrb[0].mxu0
        %v789 = vadd.f32 0.0, %v788
        %v790 = vpop.f32.mrb[0].mxu0
        %v791 = vpop.f32.mrb[0].mxu0
        %v792 = vadd.f32 0.0, %v791
        %v793 = vpop.f32.mrb[0].mxu0
        %794 = vdwg.mxu0
        %v795 = vpack.c.bf16 %v792, %v789
        %v796 = vld [vmem:[%s8] sm:$0xf]
        %v797 = vld [vmem:[#allocation5] sm:$0xff]
        %v798 = vld [vmem:[#allocation5 + $0x8] sm:$0xff]
        %v799 = vld [vmem:[#allocation5 + $0x10] sm:$0xff]
        %v800 = vld [vmem:[#allocation5 + $0x18] sm:$0xff]
        %v801 = vld [vmem:[#allocation5 + $0x20] sm:$0xff]
        %v802 = vld [vmem:[#allocation5 + $0x28] sm:$0xff]
        %v803 = vld [vmem:[#allocation5 + $0x30] sm:$0xff]
        %v804 = vld [vmem:[#allocation5 + $0x38] sm:$0xff]
        %v805 = vld [vmem:[#allocation5 + $0x40] sm:$0xff]
        %v806 = vld [vmem:[#allocation5 + $0x48] sm:$0xff]
        %v807 = vld [vmem:[#allocation5 + $0x50] sm:$0xff]
        %v808 = vld [vmem:[#allocation5 + $0x58] sm:$0xff]
        %v809 = vld [vmem:[#allocation5 + $0x60] sm:$0xff]
        %v810 = vld [vmem:[#allocation5 + $0x68] sm:$0xff]
        %v811 = vld [vmem:[#allocation5 + $0x70] sm:$0xff]
        %v812 = vld [vmem:[#allocation5 + $0x78] sm:$0xff]
        %v813 = vld [vmem:[#allocation5 + $0x80] sm:$0xff]
        %v814 = vld [vmem:[#allocation5 + $0x88] sm:$0xff]
        %v815 = vld [vmem:[#allocation5 + $0x90] sm:$0xff]
        %v816 = vld [vmem:[#allocation5 + $0x98] sm:$0xff]
        %v817 = vld [vmem:[#allocation5 + $0xa0] sm:$0xff]
        %v818 = vld [vmem:[#allocation5 + $0xa8] sm:$0xff]
        %v819 = vld [vmem:[#allocation5 + $0xb0] sm:$0xff]
        %v820 = vld [vmem:[#allocation5 + $0xb8] sm:$0xff]
        %v821 = vld [vmem:[#allocation5 + $0xc0] sm:$0xff]
        %v822 = vld [vmem:[#allocation5 + $0xc8] sm:$0xff]
        %v823 = vld [vmem:[#allocation5 + $0xd0] sm:$0xff]
        %v824 = vld [vmem:[#allocation5 + $0xd8] sm:$0xff]
        %v825 = vld [vmem:[#allocation5 + $0xe0] sm:$0xff]
        %v826 = vld [vmem:[#allocation5 + $0xe8] sm:$0xff]
        %v827 = vld [vmem:[#allocation5 + $0xf0] sm:$0xff]
        %v828 = vld [vmem:[#allocation5 + $0xf8] sm:$0xff]
        %v861 = vunpack.c.l.b16 %v797
        %v862 = vunpack.c.h.b16 %v797
        %v863 = vunpack.c.l.b16 %v798
        %v864 = vunpack.c.h.b16 %v798
        %v865 = vunpack.c.l.b16 %v799
        %v866 = vunpack.c.h.b16 %v799
        %v867 = vunpack.c.l.b16 %v800
        %v868 = vunpack.c.h.b16 %v800
        %v869 = vunpack.c.l.b16 %v801
        %v870 = vunpack.c.h.b16 %v801
        %v871 = vunpack.c.l.b16 %v802
        %v872 = vunpack.c.h.b16 %v802
        %v873 = vunpack.c.l.b16 %v803
        %v874 = vunpack.c.h.b16 %v803
        %v875 = vunpack.c.l.b16 %v804
        %v876 = vunpack.c.h.b16 %v804
        %v877 = vunpack.c.l.b16 %v805
        %v878 = vunpack.c.h.b16 %v805
        %v879 = vunpack.c.l.b16 %v806
        %v880 = vunpack.c.h.b16 %v806
        %v881 = vunpack.c.l.b16 %v807
        %v882 = vunpack.c.h.b16 %v807
        %v883 = vunpack.c.l.b16 %v808
        %v884 = vunpack.c.h.b16 %v808
        %v885 = vunpack.c.l.b16 %v809
        %v886 = vunpack.c.h.b16 %v809
        %v887 = vunpack.c.l.b16 %v810
        %v888 = vunpack.c.h.b16 %v810
        %v889 = vunpack.c.l.b16 %v811
        %v890 = vunpack.c.h.b16 %v811
        %v891 = vunpack.c.l.b16 %v812
        %v892 = vunpack.c.h.b16 %v812
        %v893 = vunpack.c.l.b16 %v813
        %v894 = vunpack.c.h.b16 %v813
        %v895 = vunpack.c.l.b16 %v814
        %v896 = vunpack.c.h.b16 %v814
        %v897 = vunpack.c.l.b16 %v815
        %v898 = vunpack.c.h.b16 %v815
        %v899 = vunpack.c.l.b16 %v816
        %v900 = vunpack.c.h.b16 %v816
        %v901 = vunpack.c.l.b16 %v817
        %v902 = vunpack.c.h.b16 %v817
        %v903 = vunpack.c.l.b16 %v818
        %v904 = vunpack.c.h.b16 %v818
        %v905 = vunpack.c.l.b16 %v819
        %v906 = vunpack.c.h.b16 %v819
        %v907 = vunpack.c.l.b16 %v820
        %v908 = vunpack.c.h.b16 %v820
        %v909 = vunpack.c.l.b16 %v821
        %v910 = vunpack.c.h.b16 %v821
        %v911 = vunpack.c.l.b16 %v822
        %v912 = vunpack.c.h.b16 %v822
        %v913 = vunpack.c.l.b16 %v823
        %v914 = vunpack.c.h.b16 %v823
        %v915 = vunpack.c.l.b16 %v824
        %v916 = vunpack.c.h.b16 %v824
        %v917 = vunpack.c.l.b16 %v825
        %v918 = vunpack.c.h.b16 %v825
        %v919 = vunpack.c.l.b16 %v826
        %v920 = vunpack.c.h.b16 %v826
        %v921 = vunpack.c.l.b16 %v827
        %v922 = vunpack.c.h.b16 %v827
        %v923 = vunpack.c.l.b16 %v828
        %v924 = vunpack.c.h.b16 %v828
        %v925 = vpack.c.b16 %v865, %v861
        %v926 = vpack.c.b16 %v866, %v862
        %v927 = vpack.c.b16 %v867, %v863
        %v928 = vpack.c.b16 %v868, %v864
        %v929 = vpack.c.b16 %v873, %v869
        %v930 = vpack.c.b16 %v874, %v870
        %v931 = vpack.c.b16 %v875, %v871
        %v932 = vpack.c.b16 %v876, %v872
        %v933 = vpack.c.b16 %v881, %v877
        %v934 = vpack.c.b16 %v882, %v878
        %v935 = vpack.c.b16 %v883, %v879
        %v936 = vpack.c.b16 %v884, %v880
        %v937 = vpack.c.b16 %v889, %v885
        %v938 = vpack.c.b16 %v890, %v886
        %v939 = vpack.c.b16 %v891, %v887
        %v940 = vpack.c.b16 %v892, %v888
        %v941 = vpack.c.b16 %v897, %v893
        %v942 = vpack.c.b16 %v898, %v894
        %v943 = vpack.c.b16 %v899, %v895
        %v944 = vpack.c.b16 %v900, %v896
        %v945 = vpack.c.b16 %v905, %v901
        %v946 = vpack.c.b16 %v906, %v902
        %v947 = vpack.c.b16 %v907, %v903
        %v948 = vpack.c.b16 %v908, %v904
        %v949 = vpack.c.b16 %v913, %v909
        %v950 = vpack.c.b16 %v914, %v910
        %v951 = vpack.c.b16 %v915, %v911
        %v952 = vpack.c.b16 %v916, %v912
        %v953 = vpack.c.b16 %v921, %v917
        %v954 = vpack.c.b16 %v922, %v918
        %v955 = vpack.c.b16 %v923, %v919
        %v956 = vpack.c.b16 %v924, %v920
        %989 = vmatprep.subr.bf16.mxu0 %v926
        %990 = vmatpush1.bf16.msra.mxu0 %v925
        %991 = vmatprep.subr.bf16.mxu0 %v930
        %992 = vmatpush1.bf16.msra.mxu0 %v929
        %993 = vmatprep.subr.bf16.mxu0 %v934
        %994 = vmatpush1.bf16.msra.mxu0 %v933
        %995 = vmatprep.subr.bf16.mxu0 %v938
        %996 = vmatpush1.bf16.msra.mxu0 %v937
        %997 = vmatprep.subr.bf16.mxu0 %v942
        %998 = vmatpush1.bf16.msra.mxu0 %v941
        %999 = vmatprep.subr.bf16.mxu0 %v946
        %1000 = vmatpush1.bf16.msra.mxu0 %v945
        %1001 = vmatprep.subr.bf16.mxu0 %v950
        %1002 = vmatpush1.bf16.msra.mxu0 %v949
        %1003 = vmatprep.subr.bf16.mxu0 %v954
        %1004 = vmatpush1.bf16.msra.mxu0 %v953
        %1005 = vmatprep.subr.bf16.mxu0 0
        %1006 = vmatpush1.bf16.msra.mxu0 0
        %1007 = vmatprep.subr.bf16.mxu0 0
        %1008 = vmatpush1.bf16.msra.mxu0 0
        %1009 = vmatprep.subr.bf16.mxu0 0
        %1010 = vmatpush1.bf16.msra.mxu0 0
        %1011 = vmatprep.subr.bf16.mxu0 0
        %1012 = vmatpush1.bf16.msra.mxu0 0
        %1013 = vmatprep.subr.bf16.mxu0 0
        %1014 = vmatpush1.bf16.msra.mxu0 0
        %1015 = vmatprep.subr.bf16.mxu0 0
        %1016 = vmatpush1.bf16.msra.mxu0 0
        %1017 = vmatprep.subr.bf16.mxu0 0
        %1018 = vmatpush1.bf16.msra.mxu0 0
        %1019 = vmatprep.subr.bf16.mxu0 0
        %1020 = vmatpush1.bf16.msra.mxu0 0
        %1021 = vmatprep.mubr.bf16.mxu0 0
        %1022 = vmatmul.mubr.bf16.gmra.mrb[0].mxu0 %v734
        %v1023 = vpop.f32.mrb[0].mxu0
        %v1024 = vadd.f32 0.0, %v1023
        %v1025 = vpop.f32.mrb[0].mxu0
        %v1026 = vadd.f32 0.0, %v1025
        %v1027 = vpop.f32.mrb[0].mxu0
        %v1028 = vadd.f32 0.0, %v1027
        %v1029 = vpop.f32.mrb[0].mxu0
        %v1030 = vadd.f32 0.0, %v1029
        %1031 = vdwg.mxu0
        %1032 = vmatprep.subr.bf16.mxu0 %v928
        %1033 = vmatpush1.bf16.msra.mxu0 %v927
        %1034 = vmatprep.subr.bf16.mxu0 %v932
        %1035 = vmatpush1.bf16.msra.mxu0 %v931
        %1036 = vmatprep.subr.bf16.mxu0 %v936
        %1037 = vmatpush1.bf16.msra.mxu0 %v935
        %1038 = vmatprep.subr.bf16.mxu0 %v940
        %1039 = vmatpush1.bf16.msra.mxu0 %v939
        %1040 = vmatprep.subr.bf16.mxu0 %v944
        %1041 = vmatpush1.bf16.msra.mxu0 %v943
        %1042 = vmatprep.subr.bf16.mxu0 %v948
        %1043 = vmatpush1.bf16.msra.mxu0 %v947
        %1044 = vmatprep.subr.bf16.mxu0 %v952
        %1045 = vmatpush1.bf16.msra.mxu0 %v951
        %1046 = vmatprep.subr.bf16.mxu0 %v956
        %1047 = vmatpush1.bf16.msra.mxu0 %v955
        %1048 = vmatprep.subr.bf16.mxu0 0
        %1049 = vmatpush1.bf16.msra.mxu0 0
        %1050 = vmatprep.subr.bf16.mxu0 0
        %1051 = vmatpush1.bf16.msra.mxu0 0
        %1052 = vmatprep.subr.bf16.mxu0 0
        %1053 = vmatpush1.bf16.msra.mxu0 0
        %1054 = vmatprep.subr.bf16.mxu0 0
        %1055 = vmatpush1.bf16.msra.mxu0 0
        %1056 = vmatprep.subr.bf16.mxu0 0
        %1057 = vmatpush1.bf16.msra.mxu0 0
        %1058 = vmatprep.subr.bf16.mxu0 0
        %1059 = vmatpush1.bf16.msra.mxu0 0
        %1060 = vmatprep.subr.bf16.mxu0 0
        %1061 = vmatpush1.bf16.msra.mxu0 0
        %1062 = vmatprep.subr.bf16.mxu0 0
        %1063 = vmatpush1.bf16.msra.mxu0 0
        %1064 = vmatprep.mubr.bf16.mxu0 0
        %1065 = vmatmul.mubr.bf16.gmra.mrb[0].mxu0 %v734
        %v1066 = vpop.f32.mrb[0].mxu0
        %v1067 = vadd.f32 0.0, %v1066
        %v1068 = vpop.f32.mrb[0].mxu0
        %v1069 = vadd.f32 0.0, %v1068
        %v1070 = vpop.f32.mrb[0].mxu0
        %v1071 = vadd.f32 0.0, %v1070
        %v1072 = vpop.f32.mrb[0].mxu0
        %v1073 = vadd.f32 0.0, %v1072
        %1074 = vdwg.mxu0
        %v1077 = vunpack.c.l.s4 1966171168
        %v1078 = vunpack.c.0.s8 %v1077
        %v1079 = vlaneseq
        %v1080 = vshrl.u32 %v1079, 7
        %v1081 = vsub.s32 %v1078, %v1080
        %v1082 = vrot.slane %v796, %v1081
        %v1083 = vcombine.high %v1082, %v1082
        %v1085 = vunpack.c.l.s4 1966171168
        %v1086 = vunpack.c.0.s8 %v1085
        %v1087 = vlaneseq
        %v1088 = vshrl.u32 %v1087, 7
        %v1089 = vsub.s32 %v1086, %v1088
        %v1090 = vrot.slane %v1082, %v1089
        %v1092 = vunpack.c.l.s4 1966171168
        %v1093 = vunpack.c.0.s8 %v1092
        %v1094 = vlaneseq
        %v1095 = vshrl.u32 %v1094, 7
        %v1096 = vsub.s32 %v1093, %v1095
        %v1097 = vrot.slane %v1083, %v1096
        %v1098 = vcombine.high %v1090, %v1090
        %v1099 = vcombine.high %v1097, %v1097
        %v1101 = vsel %vm544, %v795, 0
        %v1104 = vsel %vm548, %v1090, 0
        %v1107 = vsel %vm548, %v1097, 0
        %v1110 = vsel %vm548, %v1098, 0
        %v1113 = vsel %vm548, %v1099, 0
        %1115 = vmatprep.subr.bf16.mxu0 %v1107
        %1116 = vmatpush1.bf16.msra.mxu0 %v1104
        %1117 = vmatprep.subr.bf16.mxu0 0
        %1118 = vmatpush1.bf16.msra.mxu0 0
        %1119 = vmatprep.subr.bf16.mxu0 0
        %1120 = vmatpush1.bf16.msra.mxu0 0
        %1121 = vmatprep.subr.bf16.mxu0 0
        %1122 = vmatpush1.bf16.msra.mxu0 0
        %1123 = vmatprep.subr.bf16.mxu0 0
        %1124 = vmatpush1.bf16.msra.mxu0 0
        %1125 = vmatprep.subr.bf16.mxu0 0
        %1126 = vmatpush1.bf16.msra.mxu0 0
        %1127 = vmatprep.subr.bf16.mxu0 0
        %1128 = vmatpush1.bf16.msra.mxu0 0
        %1129 = vmatprep.subr.bf16.mxu0 0
        %1130 = vmatpush1.bf16.msra.mxu0 0
        %1131 = vmatprep.subr.bf16.mxu0 0
        %1132 = vmatpush1.bf16.msra.mxu0 0
        %1133 = vmatprep.subr.bf16.mxu0 0
        %1134 = vmatpush1.bf16.msra.mxu0 0
        %1135 = vmatprep.subr.bf16.mxu0 0
        %1136 = vmatpush1.bf16.msra.mxu0 0
        %1137 = vmatprep.subr.bf16.mxu0 0
        %1138 = vmatpush1.bf16.msra.mxu0 0
        %1139 = vmatprep.subr.bf16.mxu0 0
        %1140 = vmatpush1.bf16.msra.mxu0 0
        %1141 = vmatprep.subr.bf16.mxu0 0
        %1142 = vmatpush1.bf16.msra.mxu0 0
        %1143 = vmatprep.subr.bf16.mxu0 0
        %1144 = vmatpush1.bf16.msra.mxu0 0
        %1145 = vmatprep.subr.bf16.mxu0 0
        %1146 = vmatpush1.bf16.msra.mxu0 0
        %1147 = vmatprep.mubr.bf16.mxu0 0
        %1148 = vmatmul.mubr.bf16.gmra.mrb[0].mxu0 %v1101
        %v1149 = vpop.f32.mrb[0].mxu0
        %v1150 = vadd.f32 %v1024, %v1149
        %v1151 = vpop.f32.mrb[0].mxu0
        %v1152 = vadd.f32 %v1026, %v1151
        %v1153 = vpop.f32.mrb[0].mxu0
        %v1154 = vadd.f32 %v1028, %v1153
        %v1155 = vpop.f32.mrb[0].mxu0
        %v1156 = vadd.f32 %v1030, %v1155
        %1157 = vdwg.mxu0
        %1158 = vmatprep.subr.bf16.mxu0 %v1113
        %1159 = vmatpush1.bf16.msra.mxu0 %v1110
        %1160 = vmatprep.subr.bf16.mxu0 0
        %1161 = vmatpush1.bf16.msra.mxu0 0
        %1162 = vmatprep.subr.bf16.mxu0 0
        %1163 = vmatpush1.bf16.msra.mxu0 0
        %1164 = vmatprep.subr.bf16.mxu0 0
        %1165 = vmatpush1.bf16.msra.mxu0 0
        %1166 = vmatprep.subr.bf16.mxu0 0
        %1167 = vmatpush1.bf16.msra.mxu0 0
        %1168 = vmatprep.subr.bf16.mxu0 0
        %1169 = vmatpush1.bf16.msra.mxu0 0
        %1170 = vmatprep.subr.bf16.mxu0 0
        %1171 = vmatpush1.bf16.msra.mxu0 0
        %1172 = vmatprep.subr.bf16.mxu0 0
        %1173 = vmatpush1.bf16.msra.mxu0 0
        %1174 = vmatprep.subr.bf16.mxu0 0
        %1175 = vmatpush1.bf16.msra.mxu0 0
        %1176 = vmatprep.subr.bf16.mxu0 0
        %1177 = vmatpush1.bf16.msra.mxu0 0
        %1178 = vmatprep.subr.bf16.mxu0 0
        %1179 = vmatpush1.bf16.msra.mxu0 0
        %1180 = vmatprep.subr.bf16.mxu0 0
        %1181 = vmatpush1.bf16.msra.mxu0 0
        %1182 = vmatprep.subr.bf16.mxu0 0
        %1183 = vmatpush1.bf16.msra.mxu0 0
        %1184 = vmatprep.subr.bf16.mxu0 0
        %1185 = vmatpush1.bf16.msra.mxu0 0
        %1186 = vmatprep.subr.bf16.mxu0 0
        %1187 = vmatpush1.bf16.msra.mxu0 0
        %1188 = vmatprep.subr.bf16.mxu0 0
        %1189 = vmatpush1.bf16.msra.mxu0 0
        %1190 = vmatprep.mubr.bf16.mxu0 0
        %1191 = vmatmul.mubr.bf16.gmra.mrb[0].mxu0 %v1101
        %v1192 = vpop.f32.mrb[0].mxu0
        %v1193 = vadd.f32 %v1067, %v1192
        %v1194 = vpop.f32.mrb[0].mxu0
        %v1195 = vadd.f32 %v1069, %v1194
        %v1196 = vpop.f32.mrb[0].mxu0
        %v1197 = vadd.f32 %v1071, %v1196
        %v1198 = vpop.f32.mrb[0].mxu0
        %v1199 = vadd.f32 %v1073, %v1198
        %1200 = vdwg.mxu0
        %v1201 = vld [vmem:[#allocation8] sm:$0xff]
        %v1202 = vld [vmem:[#allocation8 + $0x8] sm:$0xff]
        %v1203 = vld [vmem:[#allocation8 + $0x10] sm:$0xff]
        %v1204 = vld [vmem:[#allocation8 + $0x18] sm:$0xff]
        %v1205 = vld [vmem:[#allocation8 + $0x20] sm:$0xff]
        %v1206 = vld [vmem:[#allocation8 + $0x28] sm:$0xff]
        %v1207 = vld [vmem:[#allocation8 + $0x30] sm:$0xff]
        %v1208 = vld [vmem:[#allocation8 + $0x38] sm:$0xff]
        %v1209 = vld [vmem:[#allocation8 + $0x40] sm:$0xff]
        %v1210 = vld [vmem:[#allocation8 + $0x48] sm:$0xff]
        %v1211 = vld [vmem:[#allocation8 + $0x50] sm:$0xff]
        %v1212 = vld [vmem:[#allocation8 + $0x58] sm:$0xff]
        %v1213 = vld [vmem:[#allocation8 + $0x60] sm:$0xff]
        %v1214 = vld [vmem:[#allocation8 + $0x68] sm:$0xff]
        %v1215 = vld [vmem:[#allocation8 + $0x70] sm:$0xff]
        %v1216 = vld [vmem:[#allocation8 + $0x78] sm:$0xff]
        %v1217 = vld [vmem:[#allocation8 + $0x80] sm:$0xff]
        %v1218 = vld [vmem:[#allocation8 + $0x88] sm:$0xff]
        %v1219 = vld [vmem:[#allocation8 + $0x90] sm:$0xff]
        %v1220 = vld [vmem:[#allocation8 + $0x98] sm:$0xff]
        %v1221 = vld [vmem:[#allocation8 + $0xa0] sm:$0xff]
        %v1222 = vld [vmem:[#allocation8 + $0xa8] sm:$0xff]
        %v1223 = vld [vmem:[#allocation8 + $0xb0] sm:$0xff]
        %v1224 = vld [vmem:[#allocation8 + $0xb8] sm:$0xff]
        %v1225 = vld [vmem:[#allocation8 + $0xc0] sm:$0xff]
        %v1226 = vld [vmem:[#allocation8 + $0xc8] sm:$0xff]
        %v1227 = vld [vmem:[#allocation8 + $0xd0] sm:$0xff]
        %v1228 = vld [vmem:[#allocation8 + $0xd8] sm:$0xff]
        %v1229 = vld [vmem:[#allocation8 + $0xe0] sm:$0xff]
        %v1230 = vld [vmem:[#allocation8 + $0xe8] sm:$0xff]
        %v1231 = vld [vmem:[#allocation8 + $0xf0] sm:$0xff]
        %v1232 = vld [vmem:[#allocation8 + $0xf8] sm:$0xff]
        %v1265 = vunpack.c.l.b16 %v1201
        %v1266 = vunpack.c.h.b16 %v1201
        %v1267 = vunpack.c.l.b16 %v1202
        %v1268 = vunpack.c.h.b16 %v1202
        %v1269 = vunpack.c.l.b16 %v1203
        %v1270 = vunpack.c.h.b16 %v1203
        %v1271 = vunpack.c.l.b16 %v1204
        %v1272 = vunpack.c.h.b16 %v1204
        %v1273 = vunpack.c.l.b16 %v1205
        %v1274 = vunpack.c.h.b16 %v1205
        %v1275 = vunpack.c.l.b16 %v1206
        %v1276 = vunpack.c.h.b16 %v1206
        %v1277 = vunpack.c.l.b16 %v1207
        %v1278 = vunpack.c.h.b16 %v1207
        %v1279 = vunpack.c.l.b16 %v1208
        %v1280 = vunpack.c.h.b16 %v1208
        %v1281 = vunpack.c.l.b16 %v1209
        %v1282 = vunpack.c.h.b16 %v1209
        %v1283 = vunpack.c.l.b16 %v1210
        %v1284 = vunpack.c.h.b16 %v1210
        %v1285 = vunpack.c.l.b16 %v1211
        %v1286 = vunpack.c.h.b16 %v1211
        %v1287 = vunpack.c.l.b16 %v1212
        %v1288 = vunpack.c.h.b16 %v1212
        %v1289 = vunpack.c.l.b16 %v1213
        %v1290 = vunpack.c.h.b16 %v1213
        %v1291 = vunpack.c.l.b16 %v1214
        %v1292 = vunpack.c.h.b16 %v1214
        %v1293 = vunpack.c.l.b16 %v1215
        %v1294 = vunpack.c.h.b16 %v1215
        %v1295 = vunpack.c.l.b16 %v1216
        %v1296 = vunpack.c.h.b16 %v1216
        %v1297 = vunpack.c.l.b16 %v1217
        %v1298 = vunpack.c.h.b16 %v1217
        %v1299 = vunpack.c.l.b16 %v1218
        %v1300 = vunpack.c.h.b16 %v1218
        %v1301 = vunpack.c.l.b16 %v1219
        %v1302 = vunpack.c.h.b16 %v1219
        %v1303 = vunpack.c.l.b16 %v1220
        %v1304 = vunpack.c.h.b16 %v1220
        %v1305 = vunpack.c.l.b16 %v1221
        %v1306 = vunpack.c.h.b16 %v1221
        %v1307 = vunpack.c.l.b16 %v1222
        %v1308 = vunpack.c.h.b16 %v1222
        %v1309 = vunpack.c.l.b16 %v1223
        %v1310 = vunpack.c.h.b16 %v1223
        %v1311 = vunpack.c.l.b16 %v1224
        %v1312 = vunpack.c.h.b16 %v1224
        %v1313 = vunpack.c.l.b16 %v1225
        %v1314 = vunpack.c.h.b16 %v1225
        %v1315 = vunpack.c.l.b16 %v1226
        %v1316 = vunpack.c.h.b16 %v1226
        %v1317 = vunpack.c.l.b16 %v1227
        %v1318 = vunpack.c.h.b16 %v1227
        %v1319 = vunpack.c.l.b16 %v1228
        %v1320 = vunpack.c.h.b16 %v1228
        %v1321 = vunpack.c.l.b16 %v1229
        %v1322 = vunpack.c.h.b16 %v1229
        %v1323 = vunpack.c.l.b16 %v1230
        %v1324 = vunpack.c.h.b16 %v1230
        %v1325 = vunpack.c.l.b16 %v1231
        %v1326 = vunpack.c.h.b16 %v1231
        %v1327 = vunpack.c.l.b16 %v1232
        %v1328 = vunpack.c.h.b16 %v1232
        %v1329 = vpack.c.b16 %v1269, %v1265
        %v1330 = vpack.c.b16 %v1270, %v1266
        %v1331 = vpack.c.b16 %v1271, %v1267
        %v1332 = vpack.c.b16 %v1272, %v1268
        %v1333 = vpack.c.b16 %v1277, %v1273
        %v1334 = vpack.c.b16 %v1278, %v1274
        %v1335 = vpack.c.b16 %v1279, %v1275
        %v1336 = vpack.c.b16 %v1280, %v1276
        %v1337 = vpack.c.b16 %v1285, %v1281
        %v1338 = vpack.c.b16 %v1286, %v1282
        %v1339 = vpack.c.b16 %v1287, %v1283
        %v1340 = vpack.c.b16 %v1288, %v1284
        %v1341 = vpack.c.b16 %v1293, %v1289
        %v1342 = vpack.c.b16 %v1294, %v1290
        %v1343 = vpack.c.b16 %v1295, %v1291
        %v1344 = vpack.c.b16 %v1296, %v1292
        %v1345 = vpack.c.b16 %v1301, %v1297
        %v1346 = vpack.c.b16 %v1302, %v1298
        %v1347 = vpack.c.b16 %v1303, %v1299
        %v1348 = vpack.c.b16 %v1304, %v1300
        %v1349 = vpack.c.b16 %v1309, %v1305
        %v1350 = vpack.c.b16 %v1310, %v1306
        %v1351 = vpack.c.b16 %v1311, %v1307
        %v1352 = vpack.c.b16 %v1312, %v1308
        %v1353 = vpack.c.b16 %v1317, %v1313
        %v1354 = vpack.c.b16 %v1318, %v1314
        %v1355 = vpack.c.b16 %v1319, %v1315
        %v1356 = vpack.c.b16 %v1320, %v1316
        %v1357 = vpack.c.b16 %v1325, %v1321
        %v1358 = vpack.c.b16 %v1326, %v1322
        %v1359 = vpack.c.b16 %v1327, %v1323
        %v1360 = vpack.c.b16 %v1328, %v1324
        %1393 = vmatprep.subr.bf16.mxu0 %v1330
        %1394 = vmatpush1.bf16.msra.mxu0 %v1329
        %1395 = vmatprep.subr.bf16.mxu0 %v1334
        %1396 = vmatpush1.bf16.msra.mxu0 %v1333
        %1397 = vmatprep.subr.bf16.mxu0 %v1338
        %1398 = vmatpush1.bf16.msra.mxu0 %v1337
        %1399 = vmatprep.subr.bf16.mxu0 %v1342
        %1400 = vmatpush1.bf16.msra.mxu0 %v1341
        %1401 = vmatprep.subr.bf16.mxu0 %v1346
        %1402 = vmatpush1.bf16.msra.mxu0 %v1345
        %1403 = vmatprep.subr.bf16.mxu0 %v1350
        %1404 = vmatpush1.bf16.msra.mxu0 %v1349
        %1405 = vmatprep.subr.bf16.mxu0 %v1354
        %1406 = vmatpush1.bf16.msra.mxu0 %v1353
        %1407 = vmatprep.subr.bf16.mxu0 %v1358
        %1408 = vmatpush1.bf16.msra.mxu0 %v1357
        %1409 = vmatprep.subr.bf16.mxu0 0
        %1410 = vmatpush1.bf16.msra.mxu0 0
        %1411 = vmatprep.subr.bf16.mxu0 0
        %1412 = vmatpush1.bf16.msra.mxu0 0
        %1413 = vmatprep.subr.bf16.mxu0 0
        %1414 = vmatpush1.bf16.msra.mxu0 0
        %1415 = vmatprep.subr.bf16.mxu0 0
        %1416 = vmatpush1.bf16.msra.mxu0 0
        %1417 = vmatprep.subr.bf16.mxu0 0
        %1418 = vmatpush1.bf16.msra.mxu0 0
        %1419 = vmatprep.subr.bf16.mxu0 0
        %1420 = vmatpush1.bf16.msra.mxu0 0
        %1421 = vmatprep.subr.bf16.mxu0 0
        %1422 = vmatpush1.bf16.msra.mxu0 0
        %1423 = vmatprep.subr.bf16.mxu0 0
        %1424 = vmatpush1.bf16.msra.mxu0 0
        %1425 = vmatprep.mubr.bf16.mxu0 0
        %1426 = vmatmul.mubr.bf16.gmra.mrb[0].mxu0 %v433
        %v1427 = vpop.f32.mrb[0].mxu0
        %v1428 = vadd.f32 0.0, %v1427
        %v1429 = vpop.f32.mrb[0].mxu0
        %v1430 = vadd.f32 0.0, %v1429
        %v1431 = vpop.f32.mrb[0].mxu0
        %v1432 = vadd.f32 0.0, %v1431
        %v1433 = vpop.f32.mrb[0].mxu0
        %v1434 = vadd.f32 0.0, %v1433
        %1435 = vdwg.mxu0
        %1436 = vmatprep.subr.bf16.mxu0 %v1332
        %1437 = vmatpush1.bf16.msra.mxu0 %v1331
        %1438 = vmatprep.subr.bf16.mxu0 %v1336
        %1439 = vmatpush1.bf16.msra.mxu0 %v1335
        %1440 = vmatprep.subr.bf16.mxu0 %v1340
        %1441 = vmatpush1.bf16.msra.mxu0 %v1339
        %1442 = vmatprep.subr.bf16.mxu0 %v1344
        %1443 = vmatpush1.bf16.msra.mxu0 %v1343
        %1444 = vmatprep.subr.bf16.mxu0 %v1348
        %1445 = vmatpush1.bf16.msra.mxu0 %v1347
        %1446 = vmatprep.subr.bf16.mxu0 %v1352
        %1447 = vmatpush1.bf16.msra.mxu0 %v1351
        %1448 = vmatprep.subr.bf16.mxu0 %v1356
        %1449 = vmatpush1.bf16.msra.mxu0 %v1355
        %1450 = vmatprep.subr.bf16.mxu0 %v1360
        %1451 = vmatpush1.bf16.msra.mxu0 %v1359
        %1452 = vmatprep.subr.bf16.mxu0 0
        %1453 = vmatpush1.bf16.msra.mxu0 0
        %1454 = vmatprep.subr.bf16.mxu0 0
        %1455 = vmatpush1.bf16.msra.mxu0 0
        %1456 = vmatprep.subr.bf16.mxu0 0
        %1457 = vmatpush1.bf16.msra.mxu0 0
        %1458 = vmatprep.subr.bf16.mxu0 0
        %1459 = vmatpush1.bf16.msra.mxu0 0
        %1460 = vmatprep.subr.bf16.mxu0 0
        %1461 = vmatpush1.bf16.msra.mxu0 0
        %1462 = vmatprep.subr.bf16.mxu0 0
        %1463 = vmatpush1.bf16.msra.mxu0 0
        %1464 = vmatprep.subr.bf16.mxu0 0
        %1465 = vmatpush1.bf16.msra.mxu0 0
        %1466 = vmatprep.subr.bf16.mxu0 0
        %1467 = vmatpush1.bf16.msra.mxu0 0
        %1468 = vmatprep.mubr.bf16.mxu0 0
        %1469 = vmatmul.mubr.bf16.gmra.mrb[0].mxu0 %v433
        %v1470 = vpop.f32.mrb[0].mxu0
        %v1471 = vadd.f32 0.0, %v1470
        %v1472 = vpop.f32.mrb[0].mxu0
        %v1473 = vadd.f32 0.0, %v1472
        %v1474 = vpop.f32.mrb[0].mxu0
        %v1475 = vadd.f32 0.0, %v1474
        %v1476 = vpop.f32.mrb[0].mxu0
        %v1477 = vadd.f32 0.0, %v1476
        %1478 = vdwg.mxu0
        %v1479 = vadd.f32 %v1150, %v1428
        %v1480 = vadd.f32 %v1152, %v1430
        %v1481 = vadd.f32 %v1193, %v1471
        %v1482 = vadd.f32 %v1195, %v1473
        %v1483 = vadd.f32 %v1154, %v1432
        %v1484 = vadd.f32 %v1156, %v1434
        %v1485 = vadd.f32 %v1197, %v1475
        %v1486 = vadd.f32 %v1199, %v1477
        %v1487 = vld [vmem:[%s11] sm:$0xf]
        %v1489 = vlaneseq
        %v1490 = vshrl.u32 %v1489, 7
        %v1491 = vsub.s32 0, %v1490
        %v1492 = vrot.slane %v1487, %v1491
        %v1493 = vlaneseq
        %v1494 = vshrl.u32 %v1493, 7
        %v1495 = vsub.s32 1, %v1494
        %v1496 = vrot.slane %v1487, %v1495
        %v1497 = vlaneseq
        %v1498 = vshrl.u32 %v1497, 7
        %v1499 = vsub.s32 2, %v1498
        %v1500 = vrot.slane %v1487, %v1499
        %v1501 = vlaneseq
        %v1502 = vshrl.u32 %v1501, 7
        %v1503 = vsub.s32 3, %v1502
        %v1504 = vrot.slane %v1487, %v1503
        %v1509 = vadd.f32 %v1479, %v1492
        %v1510 = vadd.f32 %v1480, %v1496
        %v1511 = vadd.f32 %v1481, %v1500
        %v1512 = vadd.f32 %v1482, %v1504
        %v1513 = vadd.f32 %v1483, %v1492
        %v1514 = vadd.f32 %v1484, %v1496
        %v1515 = vadd.f32 %v1485, %v1500
        %v1516 = vadd.f32 %v1486, %v1504
        %v1517 = vld [vmem:[#allocation2] sm:$0xff]
        %v1518 = vld [vmem:[#allocation2 + $0x8] sm:$0xff]
        %v1519 = vxor.u32 %v1509, 2147483648
        %v1520 = vxor.u32 %v1513, 2147483648
        %v1521 = vmul.f32 %v1519, 1.442695
        %v1522 = vpow.pop %v1521
        %v1523 = vmul.f32 %v1520, 1.442695
        %v1524 = vpow.pop %v1523
        %v1525 = vadd.f32 %v1522, 1.0
        %v1526 = vadd.f32 %v1524, 1.0
        %v1527 = vrcp.pop %v1525
        %v1528 = vmul.f32 1.0, %v1527
        %v1529 = vrcp.pop %v1526
        %v1530 = vmul.f32 1.0, %v1529
        %v1531 = vxor.u32 %v1510, 2147483648
        %v1532 = vxor.u32 %v1514, 2147483648
        %v1533 = vmul.f32 %v1531, 1.442695
        %v1534 = vpow.pop %v1533
        %v1535 = vmul.f32 %v1532, 1.442695
        %v1536 = vpow.pop %v1535
        %v1537 = vadd.f32 %v1534, 1.0
        %v1538 = vadd.f32 %v1536, 1.0
        %v1539 = vrcp.pop %v1537
        %v1540 = vmul.f32 1.0, %v1539
        %v1541 = vrcp.pop %v1538
        %v1542 = vmul.f32 1.0, %v1541
        %v1543 = vtanh.pop %v1511
        %v1544 = vtanh.pop %v1515
        %v1545 = vxor.u32 %v1512, 2147483648
        %v1546 = vxor.u32 %v1516, 2147483648
        %v1547 = vmul.f32 %v1545, 1.442695
        %v1548 = vpow.pop %v1547
        %v1549 = vmul.f32 %v1546, 1.442695
        %v1550 = vpow.pop %v1549
        %v1551 = vadd.f32 %v1548, 1.0
        %v1552 = vadd.f32 %v1550, 1.0
        %v1553 = vrcp.pop %v1551
        %v1554 = vmul.f32 1.0, %v1553
        %v1555 = vrcp.pop %v1552
        %v1556 = vmul.f32 1.0, %v1555
        %v1557 = vmul.f32 %v1540, %v1517
        %v1558 = vmul.f32 %v1542, %v1518
        %v1559 = vmul.f32 %v1528, %v1543
        %v1560 = vmul.f32 %v1530, %v1544
        %v1561 = vadd.f32 %v1557, %v1559
        %v1562 = vadd.f32 %v1558, %v1560
        %v1563 = vtanh.pop %v1561
        %v1564 = vtanh.pop %v1562
        %v1565 = vmul.f32 %v1554, %v1563
        %v1566 = vmul.f32 %v1556, %v1564
        %1567 = vst [vmem:[#allocation10] sm:$0xff] %v1565
        %1568 = vst [vmem:[#allocation10 + $0x8] sm:$0xff] %v1566
        %1569 = vst [vmem:[#allocation2] sm:$0xff] %v1561
        %1570 = vst [vmem:[#allocation2 + $0x8] sm:$0xff] %v1562
        // Predicated region
        $region81: #{tpu_custom_call.1} parent=67 // pred_check
          %p1571 = pneg %p291
        $region82: #{tpu_custom_call.1} parent=67 // pred_check_branch
          %1573 = sbr.rel (%p1571) target = $region84
        $region83: #{tpu_custom_call.1} parent=67 // pred_region
          %s1575 = ssub.s32 256, 256
          %1576 = vsyncadd [#allocation7], %s1575
          %s1577 = sshll.u32 [#allocation10], 4
          %s1578 = int_to_ptr.vmem [resolvable:$true] %s1577
          %1583 = dma.vmem_to_hbm [thread:$0]  %s1578, 256, %s12, [#allocation7], 128, 128, 8
        $region84: #{tpu_custom_call.1} parent=67 // pred_fallthru
          _
        // Predicated region
        $region85: #{tpu_custom_call.1} parent=67 // pred_check
          %p1584 = pneg %p291
        $region86: #{tpu_custom_call.1} parent=67 // pred_check_branch
          %1586 = sbr.rel (%p1584) target = $region88
        $region87: #{tpu_custom_call.1} parent=67 // pred_region
          %1587 = dma.done [#allocation7], 256
        $region88: #{tpu_custom_call.1} parent=67 // pred_fallthru
          _
      $region68: #{tpu_custom_call.1} parent=5 // pred_fallthru
        _
      %p1588 = scmp.le.s32.totalorder 2, %s21
      // Predicated region
      $region89: #{tpu_custom_call.1} parent=5 // pred_check
        %p1589 = pneg %p1588
      $region90: #{tpu_custom_call.1} parent=5 // pred_check_branch
        %1591 = sbr.rel (%p1589) target = $region92
      $region91: #{tpu_custom_call.1} parent=5 // pred_region
        %s1592 = ssub.s32 %s21, 2
      $region92: #{tpu_custom_call.1} parent=5 // pred_fallthru
        _
    $region6: #{tpu_custom_call.1} parent=1 // loop_footer
      %s25 = sadd.s32 1, %s21
    $region7: #{tpu_custom_call.1} parent=1 // loop_footer_branch
      %20 = sbr.rel target = $region3
    $region8: #{tpu_custom_call.1} parent=1 // loop_exit
      _
    %1593 = vsyncpa [#allocation6], 1
    %s1594 = scalar_lea.sflag [#allocation6], 1
    %1595 = vsyncpa %s1594, 1
    %1596 = vsyncpa [#allocation9], 1
    %1597 = vsyncpa [#allocation7], 1
    %s1598 = scalar_lea.sflag [#allocation7], 1
    %1599 = vsyncpa %s1598, 1

</llo_original>
